<compile_context>
chip_gen: v7x
topology: tpu7x:2x2x1
jax: 0.10.0
libtpu: 0.0.40
codegen_flags: <defaults>
</compile_context>

<pallas_src>
import jax
import jax.numpy as jnp
from jax.experimental import pallas as pl
from jax.experimental.pallas import tpu as pltpu


def _bbox_kernel(x_ref, w_ref, b_ref, o_ref):
    # x_ref: (TB, C*HW) streamed activation tile (lane-dense)
    # w_ref: (C*HW, O)  resident pool-folded weight (W.T / HW repeated over HW)
    # b_ref: (1, O)     resident bias (f32)
    # o_ref: (TB, O)    output tile
    out = jnp.dot(x_ref[...], w_ref[...], preferred_element_type=jnp.float32)
    o_ref[...] = (out + b_ref[...]).astype(o_ref.dtype)


def _round_up(v, m):
    return ((v + m - 1) // m) * m


def bbox_regressor_forward(x, weight, bias):
    """Pallas implementation of BBoxRegressor.forward.

    x:      (B, C, H, W) or (B, C)
    weight: (O, C)  with O = 4 * num_classes
    bias:   (O,)
    returns (B, O)
    """
    if x.ndim == 4:
        B, C, H, W = x.shape
        HW = H * W
    elif x.ndim == 2:
        B, C = x.shape
        HW = 1
    else:
        raise ValueError(f"expected 2-D or 4-D input, got shape {x.shape}")

    O = weight.shape[0]
    assert weight.shape == (O, C)
    assert bias.shape == (O,)

    CHW = C * HW
    # Flattened activation: column index = c*HW + hw (matches the expanded weight).
    x2 = x.reshape(B, CHW)

    # Fold adaptive_avg_pool2d into the MXU contraction:
    #   out[b, o] = sum_{c,hw} x[b, c, hw] * (W[o, c] / HW) + bias[o]
    # TODO(synk): if 4*num_classes were ever large, the pool-folded weight
    # (C*HW, O) might not fit resident in VMEM; for this module O=8 it is tiny.
    wt_exp = jnp.repeat(weight.T.astype(jnp.float32) * (1.0 / HW), HW, axis=0)
    wt_exp = wt_exp.astype(x.dtype)                  # (CHW, O), resident
    b2 = bias.reshape(1, O).astype(jnp.float32)      # (1, O),  resident

    itemsize = jnp.dtype(x.dtype).itemsize
    sub = {4: 8, 2: 16, 1: 32}.get(itemsize, 8)      # sublane packing per dtype

    # --- generation-aware batch tile ----------------------------------------
    try:
        vmem_cap = int(pltpu.get_tpu_info().vmem_capacity_bytes)
    except Exception:
        vmem_cap = 64 << 20                          # conservative (v7x) fallback

    wt_bytes = CHW * O * itemsize
    bytes_per_row = CHW * itemsize
    # Per-buffer x budget: <= 16 MiB, and <= ~1/4 of VMEM minus the resident weight
    # (so 2x double-buffered x + weight stays well inside v7x's 64 MiB).
    budget = min(16 << 20, max(2 << 20, vmem_cap // 4 - wt_bytes))
    vmem_tb = max(sub, (budget // max(bytes_per_row, 1)) // sub * sub)

    if B <= sub:
        tb = B                                       # single block == full (small) batch
    else:
        # Clamp to the real batch; keep >= ~4 grid steps so both v7x TCs stream.
        tb = min(vmem_tb, _round_up(pl.cdiv(B, 4), sub), _round_up(B, sub))
        tb = max(tb, sub)

    grid = (pl.cdiv(B, tb),)                         # partial last block is masked

    vmem_limit = 2 * tb * bytes_per_row + 2 * wt_bytes + (8 << 20)
    vmem_limit = int(min(max(vmem_limit, 32 << 20), vmem_cap * 7 // 8))

    out = pl.pallas_call(
        _bbox_kernel,
        out_shape=jax.ShapeDtypeStruct((B, O), x.dtype),
        grid=grid,
        in_specs=[
            pl.BlockSpec((tb, CHW), lambda i: (i, 0)),   # streamed activation
            pl.BlockSpec((CHW, O), lambda i: (0, 0)),    # resident expanded weight
            pl.BlockSpec((1, O), lambda i: (0, 0)),      # resident bias
        ],
        out_specs=pl.BlockSpec((tb, O), lambda i: (i, 0)),
        compiler_params=pltpu.CompilerParams(
            dimension_semantics=("parallel",),
            vmem_limit_bytes=vmem_limit,
        ),
    )(x2, wt_exp, b2)

    return out


if __name__ == "__main__":
    key = jax.random.PRNGKey(0)
    kx, kw = jax.random.split(key)

    # Small shapes consistent with the module: batch=2, in_channels=32, spatial 16x16.
    batch, in_channels, H, W = 2, 32, 16, 16
    num_classes = 2
    out_dim = 4 * num_classes

    x = jax.random.normal(kx, (batch, in_channels, H, W), dtype=jnp.float32)

    # nn.Linear init per the module: weight ~ N(0, 0.01), bias = 0.
    weight = 0.01 * jax.random.normal(kw, (out_dim, in_channels), dtype=jnp.float32)
    bias = jnp.zeros((out_dim,), dtype=jnp.float32)

    y = bbox_regressor_forward(x, weight, bias)
    y = jax.block_until_ready(y)

    # Pure-JAX reference (adaptive avg pool -> flatten -> linear).
    pooled_ref = jnp.mean(x, axis=(2, 3))                     # (B, C)
    y_ref = pooled_ref @ weight.T + bias                      # (B, 8)

    assert y.shape == (batch, out_dim)
    assert jnp.allclose(y, y_ref, atol=1e-4, rtol=1e-3), float(jnp.max(jnp.abs(y - y_ref)))

    print("KERNEL_OK")
</pallas_src>

<mosaic_0001>
module attributes {stable_mosaic.version = 11 : i64} {
  func.func @_bbox_kernel(%arg0: i32, %arg1: memref<2x8192xf32, #tpu.memory_space<vmem>>, %arg2: memref<8192x8xf32, #tpu.memory_space<vmem>>, %arg3: memref<1x8xf32, #tpu.memory_space<vmem>>, %arg4: memref<2x8xf32, #tpu.memory_space<vmem>>) attributes {dimension_semantics = [#tpu.dimension_semantics<parallel>], iteration_bounds = array<i64: 1>, scalar_prefetch = 0 : i64, scratch_operands = 0 : i64, tpu.core_type = #tpu.core_type<tc>, window_params = [{transform_indices = @transform_0, window_bounds = array<i64: 2, 8192>}, {pipeline_mode = #tpu.pipeline_mode<synchronous>, transform_indices = @transform_1, window_bounds = array<i64: 8192, 8>}, {pipeline_mode = #tpu.pipeline_mode<synchronous>, transform_indices = @transform_2, window_bounds = array<i64: 1, 8>}, {transform_indices = @transform_3, window_bounds = array<i64: 2, 8>}]} {
    %c0 = arith.constant 0 : index
    %c0_0 = arith.constant 0 : index
    %0 = vector.load %arg1[%c0, %c0_0] : memref<2x8192xf32, #tpu.memory_space<vmem>>, vector<2x8192xf32>
    %c0_1 = arith.constant 0 : index
    %c0_2 = arith.constant 0 : index
    %1 = vector.load %arg2[%c0_1, %c0_2] : memref<8192x8xf32, #tpu.memory_space<vmem>>, vector<8192x8xf32>
    %cst = arith.constant dense<0.000000e+00> : vector<2x8xf32>
    %2 = tpu.matmul %0, %1, %cst {dimension_numbers = #tpu.dot_dimension_numbers<[1], [0], [0], [1], [0, 0, 1, 1], [], []>} : vector<2x8192xf32>, vector<8192x8xf32>, vector<2x8xf32> -> vector<2x8xf32>
    %c0_3 = arith.constant 0 : index
    %c0_4 = arith.constant 0 : index
    %3 = vector.load %arg3[%c0_3, %c0_4] : memref<1x8xf32, #tpu.memory_space<vmem>>, vector<1x8xf32>
    %4 = vector.broadcast %3 : vector<1x8xf32> to vector<2x8xf32>
    %5 = arith.addf %2, %4 : vector<2x8xf32>
    %c0_5 = arith.constant 0 : index
    %c0_6 = arith.constant 0 : index
    %6 = vector.load %arg4[%c0_5, %c0_6] : memref<2x8xf32, #tpu.memory_space<vmem>>, vector<2x8xf32>
    tpu.vector_store %arg4[%c0_5, %c0_6], %5 {strides = array<i32>} : memref<2x8xf32, #tpu.memory_space<vmem>>, vector<2x8xf32>,
    return
  }
  func.func @transform_0(%arg0: i32) -> (i32, i32) {
    %c0_i32 = arith.constant 0 : i32
    %c0_i32_0 = arith.constant 0 : i32
    return %arg0, %c0_i32 : i32, i32
  }
  func.func @transform_1(%arg0: i32) -> (i32, i32) {
    %c0_i32 = arith.constant 0 : i32
    %c0_i32_0 = arith.constant 0 : i32
    %c0_i32_1 = arith.constant 0 : i32
    return %c0_i32, %c0_i32_0 : i32, i32
  }
  func.func @transform_2(%arg0: i32) -> (i32, i32) {
    %c0_i32 = arith.constant 0 : i32
    %c0_i32_0 = arith.constant 0 : i32
    %c0_i32_1 = arith.constant 0 : i32
    return %c0_i32, %c0_i32_0 : i32, i32
  }
  func.func @transform_3(%arg0: i32) -> (i32, i32) {
    %c0_i32 = arith.constant 0 : i32
    %c0_i32_0 = arith.constant 0 : i32
    return %arg0, %c0_i32 : i32, i32
  }
}

</mosaic_0001>

<llo_original>
// kernel: tpu_custom_call.1
$region0: #{tpu_custom_call.1}
  #allocation0 [shape = 'u32[]', space=smem, size = 0x4, offset = 0x4, fixed_abs, tag = 'smem constant byte address 0x4 - core index']
  #allocation1 [shape = 'u32[144,128]{1,0:T(1,128)}', space=vmem, size = 0x12000, scoped, tag = 'internal scratch']
  %s0 = inlined_call_operand.vmem [shape: f32[2,8192], index: 0, kind: input, shape index: {}]
  %s1 = inlined_call_operand.vmem [shape: f32[8192,8], index: 1, kind: input, shape index: {}]
  %s2 = inlined_call_operand.vmem [shape: f32[1,8], index: 2, kind: input, shape index: {}]
  %s3 = inlined_call_operand.hbm [shape: f32[2,8], index: 3, kind: output, shape index: {}]
  %s4 = sld [smem:[#allocation0]]
  $region22: #{tpu_custom_call.1} parent=0
    _
  %s6 = ssub.s32 1, %s4
  %s7 = scalar_select 0, %s6, %s4
  $region1: #{tpu_custom_call.1} parent=0
    #allocation2 [shape = 'u8[1024]{0}', space=vmem, size = 0x400, scoped, tag = 'output window, operand 0, single buffered']
    #allocation3 [shape = 's32[1]{0}', space=sflag, size = 0x4, scoped, tag = 'scoped memory for tpu_custom_call.1']
    %8 = vsyncpa [#allocation3], 0
    // Predicated region
    $region2: #{tpu_custom_call.1} parent=1 // pred_check
      _
    $region3: #{tpu_custom_call.1} parent=1 // pred_check_branch
      %10 = sbr.rel (0) target = $region5
    $region4: #{tpu_custom_call.1} parent=1 // pred_region
      _
    $region5: #{tpu_custom_call.1} parent=1 // pred_fallthru
      _
    // Predicated region
    $region6: #{tpu_custom_call.1} parent=1 // pred_check
      _
    $region7: #{tpu_custom_call.1} parent=1 // pred_check_branch
      %12 = sbr.rel (0) target = $region9
    $region8: #{tpu_custom_call.1} parent=1 // pred_region
      _
    $region9: #{tpu_custom_call.1} parent=1 // pred_fallthru
      _
    // Predicated region
    $region10: #{tpu_custom_call.1} parent=1 // pred_check
      _
    $region11: #{tpu_custom_call.1} parent=1 // pred_check_branch
      %14 = sbr.rel (0) target = $region13
    $region12: #{tpu_custom_call.1} parent=1 // pred_region
      _
    $region13: #{tpu_custom_call.1} parent=1 // pred_fallthru
      _
    %v15 = vld [vmem:[%s0] sm:$0xff]
    %v16 = vld [vmem:[%s0 + $0x8] sm:$0xff]
    %v17 = vld [vmem:[%s0 + $0x10] sm:$0xff]
    %v18 = vld [vmem:[%s0 + $0x18] sm:$0xff]
    %v19 = vld [vmem:[%s0 + $0x20] sm:$0xff]
    %v20 = vld [vmem:[%s0 + $0x28] sm:$0xff]
    %v21 = vld [vmem:[%s0 + $0x30] sm:$0xff]
    %v22 = vld [vmem:[%s0 + $0x38] sm:$0xff]
    %v23 = vld [vmem:[%s0 + $0x40] sm:$0xff]
    %v24 = vld [vmem:[%s0 + $0x48] sm:$0xff]
    %v25 = vld [vmem:[%s0 + $0x50] sm:$0xff]
    %v26 = vld [vmem:[%s0 + $0x58] sm:$0xff]
    %v27 = vld [vmem:[%s0 + $0x60] sm:$0xff]
    %v28 = vld [vmem:[%s0 + $0x68] sm:$0xff]
    %v29 = vld [vmem:[%s0 + $0x70] sm:$0xff]
    %v30 = vld [vmem:[%s0 + $0x78] sm:$0xff]
    %v31 = vld [vmem:[%s1] sm:$0xff]
    %v32 = vld [vmem:[%s1 + $0x8] sm:$0xff]
    %v33 = vld [vmem:[%s1 + $0x10] sm:$0xff]
    %v34 = vld [vmem:[%s1 + $0x18] sm:$0xff]
    %v35 = vld [vmem:[%s1 + $0x20] sm:$0xff]
    %v36 = vld [vmem:[%s1 + $0x28] sm:$0xff]
    %v37 = vld [vmem:[%s1 + $0x30] sm:$0xff]
    %v38 = vld [vmem:[%s1 + $0x38] sm:$0xff]
    %v39 = vld [vmem:[%s1 + $0x40] sm:$0xff]
    %v40 = vld [vmem:[%s1 + $0x48] sm:$0xff]
    %v41 = vld [vmem:[%s1 + $0x50] sm:$0xff]
    %v42 = vld [vmem:[%s1 + $0x58] sm:$0xff]
    %v43 = vld [vmem:[%s1 + $0x60] sm:$0xff]
    %v44 = vld [vmem:[%s1 + $0x68] sm:$0xff]
    %v45 = vld [vmem:[%s1 + $0x70] sm:$0xff]
    %v46 = vld [vmem:[%s1 + $0x78] sm:$0xff]
    %v47 = vld [vmem:[%s1 + $0x80] sm:$0xff]
    %v48 = vld [vmem:[%s1 + $0x88] sm:$0xff]
    %v49 = vld [vmem:[%s1 + $0x90] sm:$0xff]
    %v50 = vld [vmem:[%s1 + $0x98] sm:$0xff]
    %v51 = vld [vmem:[%s1 + $0xa0] sm:$0xff]
    %v52 = vld [vmem:[%s1 + $0xa8] sm:$0xff]
    %v53 = vld [vmem:[%s1 + $0xb0] sm:$0xff]
    %v54 = vld [vmem:[%s1 + $0xb8] sm:$0xff]
    %v55 = vld [vmem:[%s1 + $0xc0] sm:$0xff]
    %v56 = vld [vmem:[%s1 + $0xc8] sm:$0xff]
    %v57 = vld [vmem:[%s1 + $0xd0] sm:$0xff]
    %v58 = vld [vmem:[%s1 + $0xd8] sm:$0xff]
    %v59 = vld [vmem:[%s1 + $0xe0] sm:$0xff]
    %v60 = vld [vmem:[%s1 + $0xe8] sm:$0xff]
    %v61 = vld [vmem:[%s1 + $0xf0] sm:$0xff]
    %v62 = vld [vmem:[%s1 + $0xf8] sm:$0xff]
    %v63 = vld [vmem:[%s1 + $0x100] sm:$0xff]
    %v64 = vld [vmem:[%s1 + $0x108] sm:$0xff]
    %v65 = vld [vmem:[%s1 + $0x110] sm:$0xff]
    %v66 = vld [vmem:[%s1 + $0x118] sm:$0xff]
    %v67 = vld [vmem:[%s1 + $0x120] sm:$0xff]
    %v68 = vld [vmem:[%s1 + $0x128] sm:$0xff]
    %v69 = vld [vmem:[%s1 + $0x130] sm:$0xff]
    %v70 = vld [vmem:[%s1 + $0x138] sm:$0xff]
    %v71 = vld [vmem:[%s1 + $0x140] sm:$0xff]
    %v72 = vld [vmem:[%s1 + $0x148] sm:$0xff]
    %v73 = vld [vmem:[%s1 + $0x150] sm:$0xff]
    %v74 = vld [vmem:[%s1 + $0x158] sm:$0xff]
    %v75 = vld [vmem:[%s1 + $0x160] sm:$0xff]
    %v76 = vld [vmem:[%s1 + $0x168] sm:$0xff]
    %v77 = vld [vmem:[%s1 + $0x170] sm:$0xff]
    %v78 = vld [vmem:[%s1 + $0x178] sm:$0xff]
    %v79 = vld [vmem:[%s1 + $0x180] sm:$0xff]
    %v80 = vld [vmem:[%s1 + $0x188] sm:$0xff]
    %v81 = vld [vmem:[%s1 + $0x190] sm:$0xff]
    %v82 = vld [vmem:[%s1 + $0x198] sm:$0xff]
    %v83 = vld [vmem:[%s1 + $0x1a0] sm:$0xff]
    %v84 = vld [vmem:[%s1 + $0x1a8] sm:$0xff]
    %v85 = vld [vmem:[%s1 + $0x1b0] sm:$0xff]
    %v86 = vld [vmem:[%s1 + $0x1b8] sm:$0xff]
    %v87 = vld [vmem:[%s1 + $0x1c0] sm:$0xff]
    %v88 = vld [vmem:[%s1 + $0x1c8] sm:$0xff]
    %v89 = vld [vmem:[%s1 + $0x1d0] sm:$0xff]
    %v90 = vld [vmem:[%s1 + $0x1d8] sm:$0xff]
    %v91 = vld [vmem:[%s1 + $0x1e0] sm:$0xff]
    %v92 = vld [vmem:[%s1 + $0x1e8] sm:$0xff]
    %v93 = vld [vmem:[%s1 + $0x1f0] sm:$0xff]
    %v94 = vld [vmem:[%s1 + $0x1f8] sm:$0xff]
    %v95 = vld [vmem:[%s1 + $0x200] sm:$0xff]
    %v96 = vld [vmem:[%s1 + $0x208] sm:$0xff]
    %v97 = vld [vmem:[%s1 + $0x210] sm:$0xff]
    %v98 = vld [vmem:[%s1 + $0x218] sm:$0xff]
    %v99 = vld [vmem:[%s1 + $0x220] sm:$0xff]
    %v100 = vld [vmem:[%s1 + $0x228] sm:$0xff]
    %v101 = vld [vmem:[%s1 + $0x230] sm:$0xff]
    %v102 = vld [vmem:[%s1 + $0x238] sm:$0xff]
    %v103 = vld [vmem:[%s1 + $0x240] sm:$0xff]
    %v104 = vld [vmem:[%s1 + $0x248] sm:$0xff]
    %v105 = vld [vmem:[%s1 + $0x250] sm:$0xff]
    %v106 = vld [vmem:[%s1 + $0x258] sm:$0xff]
    %v107 = vld [vmem:[%s1 + $0x260] sm:$0xff]
    %v108 = vld [vmem:[%s1 + $0x268] sm:$0xff]
    %v109 = vld [vmem:[%s1 + $0x270] sm:$0xff]
    %v110 = vld [vmem:[%s1 + $0x278] sm:$0xff]
    %v111 = vld [vmem:[%s1 + $0x280] sm:$0xff]
    %v112 = vld [vmem:[%s1 + $0x288] sm:$0xff]
    %v113 = vld [vmem:[%s1 + $0x290] sm:$0xff]
    %v114 = vld [vmem:[%s1 + $0x298] sm:$0xff]
    %v115 = vld [vmem:[%s1 + $0x2a0] sm:$0xff]
    %v116 = vld [vmem:[%s1 + $0x2a8] sm:$0xff]
    %v117 = vld [vmem:[%s1 + $0x2b0] sm:$0xff]
    %v118 = vld [vmem:[%s1 + $0x2b8] sm:$0xff]
    %v119 = vld [vmem:[%s1 + $0x2c0] sm:$0xff]
    %v120 = vld [vmem:[%s1 + $0x2c8] sm:$0xff]
    %v121 = vld [vmem:[%s1 + $0x2d0] sm:$0xff]
    %v122 = vld [vmem:[%s1 + $0x2d8] sm:$0xff]
    %v123 = vld [vmem:[%s1 + $0x2e0] sm:$0xff]
    %v124 = vld [vmem:[%s1 + $0x2e8] sm:$0xff]
    %v125 = vld [vmem:[%s1 + $0x2f0] sm:$0xff]
    %v126 = vld [vmem:[%s1 + $0x2f8] sm:$0xff]
    %v127 = vld [vmem:[%s1 + $0x300] sm:$0xff]
    %v128 = vld [vmem:[%s1 + $0x308] sm:$0xff]
    %v129 = vld [vmem:[%s1 + $0x310] sm:$0xff]
    %v130 = vld [vmem:[%s1 + $0x318] sm:$0xff]
    %v131 = vld [vmem:[%s1 + $0x320] sm:$0xff]
    %v132 = vld [vmem:[%s1 + $0x328] sm:$0xff]
    %v133 = vld [vmem:[%s1 + $0x330] sm:$0xff]
    %v134 = vld [vmem:[%s1 + $0x338] sm:$0xff]
    %v135 = vld [vmem:[%s1 + $0x340] sm:$0xff]
    %v136 = vld [vmem:[%s1 + $0x348] sm:$0xff]
    %v137 = vld [vmem:[%s1 + $0x350] sm:$0xff]
    %v138 = vld [vmem:[%s1 + $0x358] sm:$0xff]
    %v139 = vld [vmem:[%s1 + $0x360] sm:$0xff]
    %v140 = vld [vmem:[%s1 + $0x368] sm:$0xff]
    %v141 = vld [vmem:[%s1 + $0x370] sm:$0xff]
    %v142 = vld [vmem:[%s1 + $0x378] sm:$0xff]
    %v143 = vld [vmem:[%s1 + $0x380] sm:$0xff]
    %v144 = vld [vmem:[%s1 + $0x388] sm:$0xff]
    %v145 = vld [vmem:[%s1 + $0x390] sm:$0xff]
    %v146 = vld [vmem:[%s1 + $0x398] sm:$0xff]
    %v147 = vld [vmem:[%s1 + $0x3a0] sm:$0xff]
    %v148 = vld [vmem:[%s1 + $0x3a8] sm:$0xff]
    %v149 = vld [vmem:[%s1 + $0x3b0] sm:$0xff]
    %v150 = vld [vmem:[%s1 + $0x3b8] sm:$0xff]
    %v151 = vld [vmem:[%s1 + $0x3c0] sm:$0xff]
    %v152 = vld [vmem:[%s1 + $0x3c8] sm:$0xff]
    %v153 = vld [vmem:[%s1 + $0x3d0] sm:$0xff]
    %v154 = vld [vmem:[%s1 + $0x3d8] sm:$0xff]
    %v155 = vld [vmem:[%s1 + $0x3e0] sm:$0xff]
    %v156 = vld [vmem:[%s1 + $0x3e8] sm:$0xff]
    %v157 = vld [vmem:[%s1 + $0x3f0] sm:$0xff]
    %v158 = vld [vmem:[%s1 + $0x3f8] sm:$0xff]
    %v159 = vld [vmem:[%s1 + $0x400] sm:$0xff]
    %v160 = vld [vmem:[%s1 + $0x408] sm:$0xff]
    %v161 = vld [vmem:[%s1 + $0x410] sm:$0xff]
    %v162 = vld [vmem:[%s1 + $0x418] sm:$0xff]
    %v163 = vld [vmem:[%s1 + $0x420] sm:$0xff]
    %v164 = vld [vmem:[%s1 + $0x428] sm:$0xff]
    %v165 = vld [vmem:[%s1 + $0x430] sm:$0xff]
    %v166 = vld [vmem:[%s1 + $0x438] sm:$0xff]
    %v167 = vld [vmem:[%s1 + $0x440] sm:$0xff]
    %v168 = vld [vmem:[%s1 + $0x448] sm:$0xff]
    %v169 = vld [vmem:[%s1 + $0x450] sm:$0xff]
    %v170 = vld [vmem:[%s1 + $0x458] sm:$0xff]
    %v171 = vld [vmem:[%s1 + $0x460] sm:$0xff]
    %v172 = vld [vmem:[%s1 + $0x468] sm:$0xff]
    %v173 = vld [vmem:[%s1 + $0x470] sm:$0xff]
    %v174 = vld [vmem:[%s1 + $0x478] sm:$0xff]
    %v175 = vld [vmem:[%s1 + $0x480] sm:$0xff]
    %v176 = vld [vmem:[%s1 + $0x488] sm:$0xff]
    %v177 = vld [vmem:[%s1 + $0x490] sm:$0xff]
    %v178 = vld [vmem:[%s1 + $0x498] sm:$0xff]
    %v179 = vld [vmem:[%s1 + $0x4a0] sm:$0xff]
    %v180 = vld [vmem:[%s1 + $0x4a8] sm:$0xff]
    %v181 = vld [vmem:[%s1 + $0x4b0] sm:$0xff]
    %v182 = vld [vmem:[%s1 + $0x4b8] sm:$0xff]
    %v183 = vld [vmem:[%s1 + $0x4c0] sm:$0xff]
    %v184 = vld [vmem:[%s1 + $0x4c8] sm:$0xff]
    %v185 = vld [vmem:[%s1 + $0x4d0] sm:$0xff]
    %v186 = vld [vmem:[%s1 + $0x4d8] sm:$0xff]
    %v187 = vld [vmem:[%s1 + $0x4e0] sm:$0xff]
    %v188 = vld [vmem:[%s1 + $0x4e8] sm:$0xff]
    %v189 = vld [vmem:[%s1 + $0x4f0] sm:$0xff]
    %v190 = vld [vmem:[%s1 + $0x4f8] sm:$0xff]
    %v191 = vld [vmem:[%s1 + $0x500] sm:$0xff]
    %v192 = vld [vmem:[%s1 + $0x508] sm:$0xff]
    %v193 = vld [vmem:[%s1 + $0x510] sm:$0xff]
    %v194 = vld [vmem:[%s1 + $0x518] sm:$0xff]
    %v195 = vld [vmem:[%s1 + $0x520] sm:$0xff]
    %v196 = vld [vmem:[%s1 + $0x528] sm:$0xff]
    %v197 = vld [vmem:[%s1 + $0x530] sm:$0xff]
    %v198 = vld [vmem:[%s1 + $0x538] sm:$0xff]
    %v199 = vld [vmem:[%s1 + $0x540] sm:$0xff]
    %v200 = vld [vmem:[%s1 + $0x548] sm:$0xff]
    %v201 = vld [vmem:[%s1 + $0x550] sm:$0xff]
    %v202 = vld [vmem:[%s1 + $0x558] sm:$0xff]
    %v203 = vld [vmem:[%s1 + $0x560] sm:$0xff]
    %v204 = vld [vmem:[%s1 + $0x568] sm:$0xff]
    %v205 = vld [vmem:[%s1 + $0x570] sm:$0xff]
    %v206 = vld [vmem:[%s1 + $0x578] sm:$0xff]
    %v207 = vld [vmem:[%s1 + $0x580] sm:$0xff]
    %v208 = vld [vmem:[%s1 + $0x588] sm:$0xff]
    %v209 = vld [vmem:[%s1 + $0x590] sm:$0xff]
    %v210 = vld [vmem:[%s1 + $0x598] sm:$0xff]
    %v211 = vld [vmem:[%s1 + $0x5a0] sm:$0xff]
    %v212 = vld [vmem:[%s1 + $0x5a8] sm:$0xff]
    %v213 = vld [vmem:[%s1 + $0x5b0] sm:$0xff]
    %v214 = vld [vmem:[%s1 + $0x5b8] sm:$0xff]
    %v215 = vld [vmem:[%s1 + $0x5c0] sm:$0xff]
    %v216 = vld [vmem:[%s1 + $0x5c8] sm:$0xff]
    %v217 = vld [vmem:[%s1 + $0x5d0] sm:$0xff]
    %v218 = vld [vmem:[%s1 + $0x5d8] sm:$0xff]
    %v219 = vld [vmem:[%s1 + $0x5e0] sm:$0xff]
    %v220 = vld [vmem:[%s1 + $0x5e8] sm:$0xff]
    %v221 = vld [vmem:[%s1 + $0x5f0] sm:$0xff]
    %v222 = vld [vmem:[%s1 + $0x5f8] sm:$0xff]
    %v223 = vld [vmem:[%s1 + $0x600] sm:$0xff]
    %v224 = vld [vmem:[%s1 + $0x608] sm:$0xff]
    %v225 = vld [vmem:[%s1 + $0x610] sm:$0xff]
    %v226 = vld [vmem:[%s1 + $0x618] sm:$0xff]
    %v227 = vld [vmem:[%s1 + $0x620] sm:$0xff]
    %v228 = vld [vmem:[%s1 + $0x628] sm:$0xff]
    %v229 = vld [vmem:[%s1 + $0x630] sm:$0xff]
    %v230 = vld [vmem:[%s1 + $0x638] sm:$0xff]
    %v231 = vld [vmem:[%s1 + $0x640] sm:$0xff]
    %v232 = vld [vmem:[%s1 + $0x648] sm:$0xff]
    %v233 = vld [vmem:[%s1 + $0x650] sm:$0xff]
    %v234 = vld [vmem:[%s1 + $0x658] sm:$0xff]
    %v235 = vld [vmem:[%s1 + $0x660] sm:$0xff]
    %v236 = vld [vmem:[%s1 + $0x668] sm:$0xff]
    %v237 = vld [vmem:[%s1 + $0x670] sm:$0xff]
    %v238 = vld [vmem:[%s1 + $0x678] sm:$0xff]
    %v239 = vld [vmem:[%s1 + $0x680] sm:$0xff]
    %v240 = vld [vmem:[%s1 + $0x688] sm:$0xff]
    %v241 = vld [vmem:[%s1 + $0x690] sm:$0xff]
    %v242 = vld [vmem:[%s1 + $0x698] sm:$0xff]
    %v243 = vld [vmem:[%s1 + $0x6a0] sm:$0xff]
    %v244 = vld [vmem:[%s1 + $0x6a8] sm:$0xff]
    %v245 = vld [vmem:[%s1 + $0x6b0] sm:$0xff]
    %v246 = vld [vmem:[%s1 + $0x6b8] sm:$0xff]
    %v247 = vld [vmem:[%s1 + $0x6c0] sm:$0xff]
    %v248 = vld [vmem:[%s1 + $0x6c8] sm:$0xff]
    %v249 = vld [vmem:[%s1 + $0x6d0] sm:$0xff]
    %v250 = vld [vmem:[%s1 + $0x6d8] sm:$0xff]
    %v251 = vld [vmem:[%s1 + $0x6e0] sm:$0xff]
    %v252 = vld [vmem:[%s1 + $0x6e8] sm:$0xff]
    %v253 = vld [vmem:[%s1 + $0x6f0] sm:$0xff]
    %v254 = vld [vmem:[%s1 + $0x6f8] sm:$0xff]
    %v255 = vld [vmem:[%s1 + $0x700] sm:$0xff]
    %v256 = vld [vmem:[%s1 + $0x708] sm:$0xff]
    %v257 = vld [vmem:[%s1 + $0x710] sm:$0xff]
    %v258 = vld [vmem:[%s1 + $0x718] sm:$0xff]
    %v259 = vld [vmem:[%s1 + $0x720] sm:$0xff]
    %v260 = vld [vmem:[%s1 + $0x728] sm:$0xff]
    %v261 = vld [vmem:[%s1 + $0x730] sm:$0xff]
    %v262 = vld [vmem:[%s1 + $0x738] sm:$0xff]
    %v263 = vld [vmem:[%s1 + $0x740] sm:$0xff]
    %v264 = vld [vmem:[%s1 + $0x748] sm:$0xff]
    %v265 = vld [vmem:[%s1 + $0x750] sm:$0xff]
    %v266 = vld [vmem:[%s1 + $0x758] sm:$0xff]
    %v267 = vld [vmem:[%s1 + $0x760] sm:$0xff]
    %v268 = vld [vmem:[%s1 + $0x768] sm:$0xff]
    %v269 = vld [vmem:[%s1 + $0x770] sm:$0xff]
    %v270 = vld [vmem:[%s1 + $0x778] sm:$0xff]
    %v271 = vld [vmem:[%s1 + $0x780] sm:$0xff]
    %v272 = vld [vmem:[%s1 + $0x788] sm:$0xff]
    %v273 = vld [vmem:[%s1 + $0x790] sm:$0xff]
    %v274 = vld [vmem:[%s1 + $0x798] sm:$0xff]
    %v275 = vld [vmem:[%s1 + $0x7a0] sm:$0xff]
    %v276 = vld [vmem:[%s1 + $0x7a8] sm:$0xff]
    %v277 = vld [vmem:[%s1 + $0x7b0] sm:$0xff]
    %v278 = vld [vmem:[%s1 + $0x7b8] sm:$0xff]
    %v279 = vld [vmem:[%s1 + $0x7c0] sm:$0xff]
    %v280 = vld [vmem:[%s1 + $0x7c8] sm:$0xff]
    %v281 = vld [vmem:[%s1 + $0x7d0] sm:$0xff]
    %v282 = vld [vmem:[%s1 + $0x7d8] sm:$0xff]
    %v283 = vld [vmem:[%s1 + $0x7e0] sm:$0xff]
    %v284 = vld [vmem:[%s1 + $0x7e8] sm:$0xff]
    %v285 = vld [vmem:[%s1 + $0x7f0] sm:$0xff]
    %v286 = vld [vmem:[%s1 + $0x7f8] sm:$0xff]
    %v287 = vld [vmem:[%s1 + $0x800] sm:$0xff]
    %v288 = vld [vmem:[%s1 + $0x808] sm:$0xff]
    %v289 = vld [vmem:[%s1 + $0x810] sm:$0xff]
    %v290 = vld [vmem:[%s1 + $0x818] sm:$0xff]
    %v291 = vld [vmem:[%s1 + $0x820] sm:$0xff]
    %v292 = vld [vmem:[%s1 + $0x828] sm:$0xff]
    %v293 = vld [vmem:[%s1 + $0x830] sm:$0xff]
    %v294 = vld [vmem:[%s1 + $0x838] sm:$0xff]
    %v295 = vld [vmem:[%s1 + $0x840] sm:$0xff]
    %v296 = vld [vmem:[%s1 + $0x848] sm:$0xff]
    %v297 = vld [vmem:[%s1 + $0x850] sm:$0xff]
    %v298 = vld [vmem:[%s1 + $0x858] sm:$0xff]
    %v299 = vld [vmem:[%s1 + $0x860] sm:$0xff]
    %v300 = vld [vmem:[%s1 + $0x868] sm:$0xff]
    %v301 = vld [vmem:[%s1 + $0x870] sm:$0xff]
    %v302 = vld [vmem:[%s1 + $0x878] sm:$0xff]
    %v303 = vld [vmem:[%s1 + $0x880] sm:$0xff]
    %v304 = vld [vmem:[%s1 + $0x888] sm:$0xff]
    %v305 = vld [vmem:[%s1 + $0x890] sm:$0xff]
    %v306 = vld [vmem:[%s1 + $0x898] sm:$0xff]
    %v307 = vld [vmem:[%s1 + $0x8a0] sm:$0xff]
    %v308 = vld [vmem:[%s1 + $0x8a8] sm:$0xff]
    %v309 = vld [vmem:[%s1 + $0x8b0] sm:$0xff]
    %v310 = vld [vmem:[%s1 + $0x8b8] sm:$0xff]
    %v311 = vld [vmem:[%s1 + $0x8c0] sm:$0xff]
    %v312 = vld [vmem:[%s1 + $0x8c8] sm:$0xff]
    %v313 = vld [vmem:[%s1 + $0x8d0] sm:$0xff]
    %v314 = vld [vmem:[%s1 + $0x8d8] sm:$0xff]
    %v315 = vld [vmem:[%s1 + $0x8e0] sm:$0xff]
    %v316 = vld [vmem:[%s1 + $0x8e8] sm:$0xff]
    %v317 = vld [vmem:[%s1 + $0x8f0] sm:$0xff]
    %v318 = vld [vmem:[%s1 + $0x8f8] sm:$0xff]
    %v319 = vld [vmem:[%s1 + $0x900] sm:$0xff]
    %v320 = vld [vmem:[%s1 + $0x908] sm:$0xff]
    %v321 = vld [vmem:[%s1 + $0x910] sm:$0xff]
    %v322 = vld [vmem:[%s1 + $0x918] sm:$0xff]
    %v323 = vld [vmem:[%s1 + $0x920] sm:$0xff]
    %v324 = vld [vmem:[%s1 + $0x928] sm:$0xff]
    %v325 = vld [vmem:[%s1 + $0x930] sm:$0xff]
    %v326 = vld [vmem:[%s1 + $0x938] sm:$0xff]
    %v327 = vld [vmem:[%s1 + $0x940] sm:$0xff]
    %v328 = vld [vmem:[%s1 + $0x948] sm:$0xff]
    %v329 = vld [vmem:[%s1 + $0x950] sm:$0xff]
    %v330 = vld [vmem:[%s1 + $0x958] sm:$0xff]
    %v331 = vld [vmem:[%s1 + $0x960] sm:$0xff]
    %v332 = vld [vmem:[%s1 + $0x968] sm:$0xff]
    %v333 = vld [vmem:[%s1 + $0x970] sm:$0xff]
    %v334 = vld [vmem:[%s1 + $0x978] sm:$0xff]
    %v335 = vld [vmem:[%s1 + $0x980] sm:$0xff]
    %v336 = vld [vmem:[%s1 + $0x988] sm:$0xff]
    %v337 = vld [vmem:[%s1 + $0x990] sm:$0xff]
    %v338 = vld [vmem:[%s1 + $0x998] sm:$0xff]
    %v339 = vld [vmem:[%s1 + $0x9a0] sm:$0xff]
    %v340 = vld [vmem:[%s1 + $0x9a8] sm:$0xff]
    %v341 = vld [vmem:[%s1 + $0x9b0] sm:$0xff]
    %v342 = vld [vmem:[%s1 + $0x9b8] sm:$0xff]
    %v343 = vld [vmem:[%s1 + $0x9c0] sm:$0xff]
    %v344 = vld [vmem:[%s1 + $0x9c8] sm:$0xff]
    %v345 = vld [vmem:[%s1 + $0x9d0] sm:$0xff]
    %v346 = vld [vmem:[%s1 + $0x9d8] sm:$0xff]
    %v347 = vld [vmem:[%s1 + $0x9e0] sm:$0xff]
    %v348 = vld [vmem:[%s1 + $0x9e8] sm:$0xff]
    %v349 = vld [vmem:[%s1 + $0x9f0] sm:$0xff]
    %v350 = vld [vmem:[%s1 + $0x9f8] sm:$0xff]
    %v351 = vld [vmem:[%s1 + $0xa00] sm:$0xff]
    %v352 = vld [vmem:[%s1 + $0xa08] sm:$0xff]
    %v353 = vld [vmem:[%s1 + $0xa10] sm:$0xff]
    %v354 = vld [vmem:[%s1 + $0xa18] sm:$0xff]
    %v355 = vld [vmem:[%s1 + $0xa20] sm:$0xff]
    %v356 = vld [vmem:[%s1 + $0xa28] sm:$0xff]
    %v357 = vld [vmem:[%s1 + $0xa30] sm:$0xff]
    %v358 = vld [vmem:[%s1 + $0xa38] sm:$0xff]
    %v359 = vld [vmem:[%s1 + $0xa40] sm:$0xff]
    %v360 = vld [vmem:[%s1 + $0xa48] sm:$0xff]
    %v361 = vld [vmem:[%s1 + $0xa50] sm:$0xff]
    %v362 = vld [vmem:[%s1 + $0xa58] sm:$0xff]
    %v363 = vld [vmem:[%s1 + $0xa60] sm:$0xff]
    %v364 = vld [vmem:[%s1 + $0xa68] sm:$0xff]
    %v365 = vld [vmem:[%s1 + $0xa70] sm:$0xff]
    %v366 = vld [vmem:[%s1 + $0xa78] sm:$0xff]
    %v367 = vld [vmem:[%s1 + $0xa80] sm:$0xff]
    %v368 = vld [vmem:[%s1 + $0xa88] sm:$0xff]
    %v369 = vld [vmem:[%s1 + $0xa90] sm:$0xff]
    %v370 = vld [vmem:[%s1 + $0xa98] sm:$0xff]
    %v371 = vld [vmem:[%s1 + $0xaa0] sm:$0xff]
    %v372 = vld [vmem:[%s1 + $0xaa8] sm:$0xff]
    %v373 = vld [vmem:[%s1 + $0xab0] sm:$0xff]
    %v374 = vld [vmem:[%s1 + $0xab8] sm:$0xff]
    %v375 = vld [vmem:[%s1 + $0xac0] sm:$0xff]
    %v376 = vld [vmem:[%s1 + $0xac8] sm:$0xff]
    %v377 = vld [vmem:[%s1 + $0xad0] sm:$0xff]
    %v378 = vld [vmem:[%s1 + $0xad8] sm:$0xff]
    %v379 = vld [vmem:[%s1 + $0xae0] sm:$0xff]
    %v380 = vld [vmem:[%s1 + $0xae8] sm:$0xff]
    %v381 = vld [vmem:[%s1 + $0xaf0] sm:$0xff]
    %v382 = vld [vmem:[%s1 + $0xaf8] sm:$0xff]
    %v383 = vld [vmem:[%s1 + $0xb00] sm:$0xff]
    %v384 = vld [vmem:[%s1 + $0xb08] sm:$0xff]
    %v385 = vld [vmem:[%s1 + $0xb10] sm:$0xff]
    %v386 = vld [vmem:[%s1 + $0xb18] sm:$0xff]
    %v387 = vld [vmem:[%s1 + $0xb20] sm:$0xff]
    %v388 = vld [vmem:[%s1 + $0xb28] sm:$0xff]
    %v389 = vld [vmem:[%s1 + $0xb30] sm:$0xff]
    %v390 = vld [vmem:[%s1 + $0xb38] sm:$0xff]
    %v391 = vld [vmem:[%s1 + $0xb40] sm:$0xff]
    %v392 = vld [vmem:[%s1 + $0xb48] sm:$0xff]
    %v393 = vld [vmem:[%s1 + $0xb50] sm:$0xff]
    %v394 = vld [vmem:[%s1 + $0xb58] sm:$0xff]
    %v395 = vld [vmem:[%s1 + $0xb60] sm:$0xff]
    %v396 = vld [vmem:[%s1 + $0xb68] sm:$0xff]
    %v397 = vld [vmem:[%s1 + $0xb70] sm:$0xff]
    %v398 = vld [vmem:[%s1 + $0xb78] sm:$0xff]
    %v399 = vld [vmem:[%s1 + $0xb80] sm:$0xff]
    %v400 = vld [vmem:[%s1 + $0xb88] sm:$0xff]
    %v401 = vld [vmem:[%s1 + $0xb90] sm:$0xff]
    %v402 = vld [vmem:[%s1 + $0xb98] sm:$0xff]
    %v403 = vld [vmem:[%s1 + $0xba0] sm:$0xff]
    %v404 = vld [vmem:[%s1 + $0xba8] sm:$0xff]
    %v405 = vld [vmem:[%s1 + $0xbb0] sm:$0xff]
    %v406 = vld [vmem:[%s1 + $0xbb8] sm:$0xff]
    %v407 = vld [vmem:[%s1 + $0xbc0] sm:$0xff]
    %v408 = vld [vmem:[%s1 + $0xbc8] sm:$0xff]
    %v409 = vld [vmem:[%s1 + $0xbd0] sm:$0xff]
    %v410 = vld [vmem:[%s1 + $0xbd8] sm:$0xff]
    %v411 = vld [vmem:[%s1 + $0xbe0] sm:$0xff]
    %v412 = vld [vmem:[%s1 + $0xbe8] sm:$0xff]
    %v413 = vld [vmem:[%s1 + $0xbf0] sm:$0xff]
    %v414 = vld [vmem:[%s1 + $0xbf8] sm:$0xff]
    %v415 = vld [vmem:[%s1 + $0xc00] sm:$0xff]
    %v416 = vld [vmem:[%s1 + $0xc08] sm:$0xff]
    %v417 = vld [vmem:[%s1 + $0xc10] sm:$0xff]
    %v418 = vld [vmem:[%s1 + $0xc18] sm:$0xff]
    %v419 = vld [vmem:[%s1 + $0xc20] sm:$0xff]
    %v420 = vld [vmem:[%s1 + $0xc28] sm:$0xff]
    %v421 = vld [vmem:[%s1 + $0xc30] sm:$0xff]
    %v422 = vld [vmem:[%s1 + $0xc38] sm:$0xff]
    %v423 = vld [vmem:[%s1 + $0xc40] sm:$0xff]
    %v424 = vld [vmem:[%s1 + $0xc48] sm:$0xff]
    %v425 = vld [vmem:[%s1 + $0xc50] sm:$0xff]
    %v426 = vld [vmem:[%s1 + $0xc58] sm:$0xff]
    %v427 = vld [vmem:[%s1 + $0xc60] sm:$0xff]
    %v428 = vld [vmem:[%s1 + $0xc68] sm:$0xff]
    %v429 = vld [vmem:[%s1 + $0xc70] sm:$0xff]
    %v430 = vld [vmem:[%s1 + $0xc78] sm:$0xff]
    %v431 = vld [vmem:[%s1 + $0xc80] sm:$0xff]
    %v432 = vld [vmem:[%s1 + $0xc88] sm:$0xff]
    %v433 = vld [vmem:[%s1 + $0xc90] sm:$0xff]
    %v434 = vld [vmem:[%s1 + $0xc98] sm:$0xff]
    %v435 = vld [vmem:[%s1 + $0xca0] sm:$0xff]
    %v436 = vld [vmem:[%s1 + $0xca8] sm:$0xff]
    %v437 = vld [vmem:[%s1 + $0xcb0] sm:$0xff]
    %v438 = vld [vmem:[%s1 + $0xcb8] sm:$0xff]
    %v439 = vld [vmem:[%s1 + $0xcc0] sm:$0xff]
    %v440 = vld [vmem:[%s1 + $0xcc8] sm:$0xff]
    %v441 = vld [vmem:[%s1 + $0xcd0] sm:$0xff]
    %v442 = vld [vmem:[%s1 + $0xcd8] sm:$0xff]
    %v443 = vld [vmem:[%s1 + $0xce0] sm:$0xff]
    %v444 = vld [vmem:[%s1 + $0xce8] sm:$0xff]
    %v445 = vld [vmem:[%s1 + $0xcf0] sm:$0xff]
    %v446 = vld [vmem:[%s1 + $0xcf8] sm:$0xff]
    %v447 = vld [vmem:[%s1 + $0xd00] sm:$0xff]
    %v448 = vld [vmem:[%s1 + $0xd08] sm:$0xff]
    %v449 = vld [vmem:[%s1 + $0xd10] sm:$0xff]
    %v450 = vld [vmem:[%s1 + $0xd18] sm:$0xff]
    %v451 = vld [vmem:[%s1 + $0xd20] sm:$0xff]
    %v452 = vld [vmem:[%s1 + $0xd28] sm:$0xff]
    %v453 = vld [vmem:[%s1 + $0xd30] sm:$0xff]
    %v454 = vld [vmem:[%s1 + $0xd38] sm:$0xff]
    %v455 = vld [vmem:[%s1 + $0xd40] sm:$0xff]
    %v456 = vld [vmem:[%s1 + $0xd48] sm:$0xff]
    %v457 = vld [vmem:[%s1 + $0xd50] sm:$0xff]
    %v458 = vld [vmem:[%s1 + $0xd58] sm:$0xff]
    %v459 = vld [vmem:[%s1 + $0xd60] sm:$0xff]
    %v460 = vld [vmem:[%s1 + $0xd68] sm:$0xff]
    %v461 = vld [vmem:[%s1 + $0xd70] sm:$0xff]
    %v462 = vld [vmem:[%s1 + $0xd78] sm:$0xff]
    %v463 = vld [vmem:[%s1 + $0xd80] sm:$0xff]
    %v464 = vld [vmem:[%s1 + $0xd88] sm:$0xff]
    %v465 = vld [vmem:[%s1 + $0xd90] sm:$0xff]
    %v466 = vld [vmem:[%s1 + $0xd98] sm:$0xff]
    %v467 = vld [vmem:[%s1 + $0xda0] sm:$0xff]
    %v468 = vld [vmem:[%s1 + $0xda8] sm:$0xff]
    %v469 = vld [vmem:[%s1 + $0xdb0] sm:$0xff]
    %v470 = vld [vmem:[%s1 + $0xdb8] sm:$0xff]
    %v471 = vld [vmem:[%s1 + $0xdc0] sm:$0xff]
    %v472 = vld [vmem:[%s1 + $0xdc8] sm:$0xff]
    %v473 = vld [vmem:[%s1 + $0xdd0] sm:$0xff]
    %v474 = vld [vmem:[%s1 + $0xdd8] sm:$0xff]
    %v475 = vld [vmem:[%s1 + $0xde0] sm:$0xff]
    %v476 = vld [vmem:[%s1 + $0xde8] sm:$0xff]
    %v477 = vld [vmem:[%s1 + $0xdf0] sm:$0xff]
    %v478 = vld [vmem:[%s1 + $0xdf8] sm:$0xff]
    %v479 = vld [vmem:[%s1 + $0xe00] sm:$0xff]
    %v480 = vld [vmem:[%s1 + $0xe08] sm:$0xff]
    %v481 = vld [vmem:[%s1 + $0xe10] sm:$0xff]
    %v482 = vld [vmem:[%s1 + $0xe18] sm:$0xff]
    %v483 = vld [vmem:[%s1 + $0xe20] sm:$0xff]
    %v484 = vld [vmem:[%s1 + $0xe28] sm:$0xff]
    %v485 = vld [vmem:[%s1 + $0xe30] sm:$0xff]
    %v486 = vld [vmem:[%s1 + $0xe38] sm:$0xff]
    %v487 = vld [vmem:[%s1 + $0xe40] sm:$0xff]
    %v488 = vld [vmem:[%s1 + $0xe48] sm:$0xff]
    %v489 = vld [vmem:[%s1 + $0xe50] sm:$0xff]
    %v490 = vld [vmem:[%s1 + $0xe58] sm:$0xff]
    %v491 = vld [vmem:[%s1 + $0xe60] sm:$0xff]
    %v492 = vld [vmem:[%s1 + $0xe68] sm:$0xff]
    %v493 = vld [vmem:[%s1 + $0xe70] sm:$0xff]
    %v494 = vld [vmem:[%s1 + $0xe78] sm:$0xff]
    %v495 = vld [vmem:[%s1 + $0xe80] sm:$0xff]
    %v496 = vld [vmem:[%s1 + $0xe88] sm:$0xff]
    %v497 = vld [vmem:[%s1 + $0xe90] sm:$0xff]
    %v498 = vld [vmem:[%s1 + $0xe98] sm:$0xff]
    %v499 = vld [vmem:[%s1 + $0xea0] sm:$0xff]
    %v500 = vld [vmem:[%s1 + $0xea8] sm:$0xff]
    %v501 = vld [vmem:[%s1 + $0xeb0] sm:$0xff]
    %v502 = vld [vmem:[%s1 + $0xeb8] sm:$0xff]
    %v503 = vld [vmem:[%s1 + $0xec0] sm:$0xff]
    %v504 = vld [vmem:[%s1 + $0xec8] sm:$0xff]
    %v505 = vld [vmem:[%s1 + $0xed0] sm:$0xff]
    %v506 = vld [vmem:[%s1 + $0xed8] sm:$0xff]
    %v507 = vld [vmem:[%s1 + $0xee0] sm:$0xff]
    %v508 = vld [vmem:[%s1 + $0xee8] sm:$0xff]
    %v509 = vld [vmem:[%s1 + $0xef0] sm:$0xff]
    %v510 = vld [vmem:[%s1 + $0xef8] sm:$0xff]
    %v511 = vld [vmem:[%s1 + $0xf00] sm:$0xff]
    %v512 = vld [vmem:[%s1 + $0xf08] sm:$0xff]
    %v513 = vld [vmem:[%s1 + $0xf10] sm:$0xff]
    %v514 = vld [vmem:[%s1 + $0xf18] sm:$0xff]
    %v515 = vld [vmem:[%s1 + $0xf20] sm:$0xff]
    %v516 = vld [vmem:[%s1 + $0xf28] sm:$0xff]
    %v517 = vld [vmem:[%s1 + $0xf30] sm:$0xff]
    %v518 = vld [vmem:[%s1 + $0xf38] sm:$0xff]
    %v519 = vld [vmem:[%s1 + $0xf40] sm:$0xff]
    %v520 = vld [vmem:[%s1 + $0xf48] sm:$0xff]
    %v521 = vld [vmem:[%s1 + $0xf50] sm:$0xff]
    %v522 = vld [vmem:[%s1 + $0xf58] sm:$0xff]
    %v523 = vld [vmem:[%s1 + $0xf60] sm:$0xff]
    %v524 = vld [vmem:[%s1 + $0xf68] sm:$0xff]
    %v525 = vld [vmem:[%s1 + $0xf70] sm:$0xff]
    %v526 = vld [vmem:[%s1 + $0xf78] sm:$0xff]
    %v527 = vld [vmem:[%s1 + $0xf80] sm:$0xff]
    %v528 = vld [vmem:[%s1 + $0xf88] sm:$0xff]
    %v529 = vld [vmem:[%s1 + $0xf90] sm:$0xff]
    %v530 = vld [vmem:[%s1 + $0xf98] sm:$0xff]
    %v531 = vld [vmem:[%s1 + $0xfa0] sm:$0xff]
    %v532 = vld [vmem:[%s1 + $0xfa8] sm:$0xff]
    %v533 = vld [vmem:[%s1 + $0xfb0] sm:$0xff]
    %v534 = vld [vmem:[%s1 + $0xfb8] sm:$0xff]
    %v535 = vld [vmem:[%s1 + $0xfc0] sm:$0xff]
    %v536 = vld [vmem:[%s1 + $0xfc8] sm:$0xff]
    %v537 = vld [vmem:[%s1 + $0xfd0] sm:$0xff]
    %v538 = vld [vmem:[%s1 + $0xfd8] sm:$0xff]
    %v539 = vld [vmem:[%s1 + $0xfe0] sm:$0xff]
    %v540 = vld [vmem:[%s1 + $0xfe8] sm:$0xff]
    %v541 = vld [vmem:[%s1 + $0xff0] sm:$0xff]
    %v542 = vld [vmem:[%s1 + $0xff8] sm:$0xff]
    %v543 = vld [vmem:[%s1 + $0x1000] sm:$0xff]
    %v544 = vld [vmem:[%s1 + $0x1008] sm:$0xff]
    %v545 = vld [vmem:[%s1 + $0x1010] sm:$0xff]
    %v546 = vld [vmem:[%s1 + $0x1018] sm:$0xff]
    %v547 = vld [vmem:[%s1 + $0x1020] sm:$0xff]
    %v548 = vld [vmem:[%s1 + $0x1028] sm:$0xff]
    %v549 = vld [vmem:[%s1 + $0x1030] sm:$0xff]
    %v550 = vld [vmem:[%s1 + $0x1038] sm:$0xff]
    %v551 = vld [vmem:[%s1 + $0x1040] sm:$0xff]
    %v552 = vld [vmem:[%s1 + $0x1048] sm:$0xff]
    %v553 = vld [vmem:[%s1 + $0x1050] sm:$0xff]
    %v554 = vld [vmem:[%s1 + $0x1058] sm:$0xff]
    %v555 = vld [vmem:[%s1 + $0x1060] sm:$0xff]
    %v556 = vld [vmem:[%s1 + $0x1068] sm:$0xff]
    %v557 = vld [vmem:[%s1 + $0x1070] sm:$0xff]
    %v558 = vld [vmem:[%s1 + $0x1078] sm:$0xff]
    %v559 = vld [vmem:[%s1 + $0x1080] sm:$0xff]
    %v560 = vld [vmem:[%s1 + $0x1088] sm:$0xff]
    %v561 = vld [vmem:[%s1 + $0x1090] sm:$0xff]
    %v562 = vld [vmem:[%s1 + $0x1098] sm:$0xff]
    %v563 = vld [vmem:[%s1 + $0x10a0] sm:$0xff]
    %v564 = vld [vmem:[%s1 + $0x10a8] sm:$0xff]
    %v565 = vld [vmem:[%s1 + $0x10b0] sm:$0xff]
    %v566 = vld [vmem:[%s1 + $0x10b8] sm:$0xff]
    %v567 = vld [vmem:[%s1 + $0x10c0] sm:$0xff]
    %v568 = vld [vmem:[%s1 + $0x10c8] sm:$0xff]
    %v569 = vld [vmem:[%s1 + $0x10d0] sm:$0xff]
    %v570 = vld [vmem:[%s1 + $0x10d8] sm:$0xff]
    %v571 = vld [vmem:[%s1 + $0x10e0] sm:$0xff]
    %v572 = vld [vmem:[%s1 + $0x10e8] sm:$0xff]
    %v573 = vld [vmem:[%s1 + $0x10f0] sm:$0xff]
    %v574 = vld [vmem:[%s1 + $0x10f8] sm:$0xff]
    %v575 = vld [vmem:[%s1 + $0x1100] sm:$0xff]
    %v576 = vld [vmem:[%s1 + $0x1108] sm:$0xff]
    %v577 = vld [vmem:[%s1 + $0x1110] sm:$0xff]
    %v578 = vld [vmem:[%s1 + $0x1118] sm:$0xff]
    %v579 = vld [vmem:[%s1 + $0x1120] sm:$0xff]
    %v580 = vld [vmem:[%s1 + $0x1128] sm:$0xff]
    %v581 = vld [vmem:[%s1 + $0x1130] sm:$0xff]
    %v582 = vld [vmem:[%s1 + $0x1138] sm:$0xff]
    %v583 = vld [vmem:[%s1 + $0x1140] sm:$0xff]
    %v584 = vld [vmem:[%s1 + $0x1148] sm:$0xff]
    %v585 = vld [vmem:[%s1 + $0x1150] sm:$0xff]
    %v586 = vld [vmem:[%s1 + $0x1158] sm:$0xff]
    %v587 = vld [vmem:[%s1 + $0x1160] sm:$0xff]
    %v588 = vld [vmem:[%s1 + $0x1168] sm:$0xff]
    %v589 = vld [vmem:[%s1 + $0x1170] sm:$0xff]
    %v590 = vld [vmem:[%s1 + $0x1178] sm:$0xff]
    %v591 = vld [vmem:[%s1 + $0x1180] sm:$0xff]
    %v592 = vld [vmem:[%s1 + $0x1188] sm:$0xff]
    %v593 = vld [vmem:[%s1 + $0x1190] sm:$0xff]
    %v594 = vld [vmem:[%s1 + $0x1198] sm:$0xff]
    %v595 = vld [vmem:[%s1 + $0x11a0] sm:$0xff]
    %v596 = vld [vmem:[%s1 + $0x11a8] sm:$0xff]
    %v597 = vld [vmem:[%s1 + $0x11b0] sm:$0xff]
    %v598 = vld [vmem:[%s1 + $0x11b8] sm:$0xff]
    %v599 = vld [vmem:[%s1 + $0x11c0] sm:$0xff]
    %v600 = vld [vmem:[%s1 + $0x11c8] sm:$0xff]
    %v601 = vld [vmem:[%s1 + $0x11d0] sm:$0xff]
    %v602 = vld [vmem:[%s1 + $0x11d8] sm:$0xff]
    %v603 = vld [vmem:[%s1 + $0x11e0] sm:$0xff]
    %v604 = vld [vmem:[%s1 + $0x11e8] sm:$0xff]
    %v605 = vld [vmem:[%s1 + $0x11f0] sm:$0xff]
    %v606 = vld [vmem:[%s1 + $0x11f8] sm:$0xff]
    %v607 = vld [vmem:[%s1 + $0x1200] sm:$0xff]
    %v608 = vld [vmem:[%s1 + $0x1208] sm:$0xff]
    %v609 = vld [vmem:[%s1 + $0x1210] sm:$0xff]
    %v610 = vld [vmem:[%s1 + $0x1218] sm:$0xff]
    %v611 = vld [vmem:[%s1 + $0x1220] sm:$0xff]
    %v612 = vld [vmem:[%s1 + $0x1228] sm:$0xff]
    %v613 = vld [vmem:[%s1 + $0x1230] sm:$0xff]
    %v614 = vld [vmem:[%s1 + $0x1238] sm:$0xff]
    %v615 = vld [vmem:[%s1 + $0x1240] sm:$0xff]
    %v616 = vld [vmem:[%s1 + $0x1248] sm:$0xff]
    %v617 = vld [vmem:[%s1 + $0x1250] sm:$0xff]
    %v618 = vld [vmem:[%s1 + $0x1258] sm:$0xff]
    %v619 = vld [vmem:[%s1 + $0x1260] sm:$0xff]
    %v620 = vld [vmem:[%s1 + $0x1268] sm:$0xff]
    %v621 = vld [vmem:[%s1 + $0x1270] sm:$0xff]
    %v622 = vld [vmem:[%s1 + $0x1278] sm:$0xff]
    %v623 = vld [vmem:[%s1 + $0x1280] sm:$0xff]
    %v624 = vld [vmem:[%s1 + $0x1288] sm:$0xff]
    %v625 = vld [vmem:[%s1 + $0x1290] sm:$0xff]
    %v626 = vld [vmem:[%s1 + $0x1298] sm:$0xff]
    %v627 = vld [vmem:[%s1 + $0x12a0] sm:$0xff]
    %v628 = vld [vmem:[%s1 + $0x12a8] sm:$0xff]
    %v629 = vld [vmem:[%s1 + $0x12b0] sm:$0xff]
    %v630 = vld [vmem:[%s1 + $0x12b8] sm:$0xff]
    %v631 = vld [vmem:[%s1 + $0x12c0] sm:$0xff]
    %v632 = vld [vmem:[%s1 + $0x12c8] sm:$0xff]
    %v633 = vld [vmem:[%s1 + $0x12d0] sm:$0xff]
    %v634 = vld [vmem:[%s1 + $0x12d8] sm:$0xff]
    %v635 = vld [vmem:[%s1 + $0x12e0] sm:$0xff]
    %v636 = vld [vmem:[%s1 + $0x12e8] sm:$0xff]
    %v637 = vld [vmem:[%s1 + $0x12f0] sm:$0xff]
    %v638 = vld [vmem:[%s1 + $0x12f8] sm:$0xff]
    %v639 = vld [vmem:[%s1 + $0x1300] sm:$0xff]
    %v640 = vld [vmem:[%s1 + $0x1308] sm:$0xff]
    %v641 = vld [vmem:[%s1 + $0x1310] sm:$0xff]
    %v642 = vld [vmem:[%s1 + $0x1318] sm:$0xff]
    %v643 = vld [vmem:[%s1 + $0x1320] sm:$0xff]
    %v644 = vld [vmem:[%s1 + $0x1328] sm:$0xff]
    %v645 = vld [vmem:[%s1 + $0x1330] sm:$0xff]
    %v646 = vld [vmem:[%s1 + $0x1338] sm:$0xff]
    %v647 = vld [vmem:[%s1 + $0x1340] sm:$0xff]
    %v648 = vld [vmem:[%s1 + $0x1348] sm:$0xff]
    %v649 = vld [vmem:[%s1 + $0x1350] sm:$0xff]
    %v650 = vld [vmem:[%s1 + $0x1358] sm:$0xff]
    %v651 = vld [vmem:[%s1 + $0x1360] sm:$0xff]
    %v652 = vld [vmem:[%s1 + $0x1368] sm:$0xff]
    %v653 = vld [vmem:[%s1 + $0x1370] sm:$0xff]
    %v654 = vld [vmem:[%s1 + $0x1378] sm:$0xff]
    %v655 = vld [vmem:[%s1 + $0x1380] sm:$0xff]
    %v656 = vld [vmem:[%s1 + $0x1388] sm:$0xff]
    %v657 = vld [vmem:[%s1 + $0x1390] sm:$0xff]
    %v658 = vld [vmem:[%s1 + $0x1398] sm:$0xff]
    %v659 = vld [vmem:[%s1 + $0x13a0] sm:$0xff]
    %v660 = vld [vmem:[%s1 + $0x13a8] sm:$0xff]
    %v661 = vld [vmem:[%s1 + $0x13b0] sm:$0xff]
    %v662 = vld [vmem:[%s1 + $0x13b8] sm:$0xff]
    %v663 = vld [vmem:[%s1 + $0x13c0] sm:$0xff]
    %v664 = vld [vmem:[%s1 + $0x13c8] sm:$0xff]
    %v665 = vld [vmem:[%s1 + $0x13d0] sm:$0xff]
    %v666 = vld [vmem:[%s1 + $0x13d8] sm:$0xff]
    %v667 = vld [vmem:[%s1 + $0x13e0] sm:$0xff]
    %v668 = vld [vmem:[%s1 + $0x13e8] sm:$0xff]
    %v669 = vld [vmem:[%s1 + $0x13f0] sm:$0xff]
    %v670 = vld [vmem:[%s1 + $0x13f8] sm:$0xff]
    %v671 = vld [vmem:[%s1 + $0x1400] sm:$0xff]
    %v672 = vld [vmem:[%s1 + $0x1408] sm:$0xff]
    %v673 = vld [vmem:[%s1 + $0x1410] sm:$0xff]
    %v674 = vld [vmem:[%s1 + $0x1418] sm:$0xff]
    %v675 = vld [vmem:[%s1 + $0x1420] sm:$0xff]
    %v676 = vld [vmem:[%s1 + $0x1428] sm:$0xff]
    %v677 = vld [vmem:[%s1 + $0x1430] sm:$0xff]
    %v678 = vld [vmem:[%s1 + $0x1438] sm:$0xff]
    %v679 = vld [vmem:[%s1 + $0x1440] sm:$0xff]
    %v680 = vld [vmem:[%s1 + $0x1448] sm:$0xff]
    %v681 = vld [vmem:[%s1 + $0x1450] sm:$0xff]
    %v682 = vld [vmem:[%s1 + $0x1458] sm:$0xff]
    %v683 = vld [vmem:[%s1 + $0x1460] sm:$0xff]
    %v684 = vld [vmem:[%s1 + $0x1468] sm:$0xff]
    %v685 = vld [vmem:[%s1 + $0x1470] sm:$0xff]
    %v686 = vld [vmem:[%s1 + $0x1478] sm:$0xff]
    %v687 = vld [vmem:[%s1 + $0x1480] sm:$0xff]
    %v688 = vld [vmem:[%s1 + $0x1488] sm:$0xff]
    %v689 = vld [vmem:[%s1 + $0x1490] sm:$0xff]
    %v690 = vld [vmem:[%s1 + $0x1498] sm:$0xff]
    %v691 = vld [vmem:[%s1 + $0x14a0] sm:$0xff]
    %v692 = vld [vmem:[%s1 + $0x14a8] sm:$0xff]
    %v693 = vld [vmem:[%s1 + $0x14b0] sm:$0xff]
    %v694 = vld [vmem:[%s1 + $0x14b8] sm:$0xff]
    %v695 = vld [vmem:[%s1 + $0x14c0] sm:$0xff]
    %v696 = vld [vmem:[%s1 + $0x14c8] sm:$0xff]
    %v697 = vld [vmem:[%s1 + $0x14d0] sm:$0xff]
    %v698 = vld [vmem:[%s1 + $0x14d8] sm:$0xff]
    %v699 = vld [vmem:[%s1 + $0x14e0] sm:$0xff]
    %v700 = vld [vmem:[%s1 + $0x14e8] sm:$0xff]
    %v701 = vld [vmem:[%s1 + $0x14f0] sm:$0xff]
    %v702 = vld [vmem:[%s1 + $0x14f8] sm:$0xff]
    %v703 = vld [vmem:[%s1 + $0x1500] sm:$0xff]
    %v704 = vld [vmem:[%s1 + $0x1508] sm:$0xff]
    %v705 = vld [vmem:[%s1 + $0x1510] sm:$0xff]
    %v706 = vld [vmem:[%s1 + $0x1518] sm:$0xff]
    %v707 = vld [vmem:[%s1 + $0x1520] sm:$0xff]
    %v708 = vld [vmem:[%s1 + $0x1528] sm:$0xff]
    %v709 = vld [vmem:[%s1 + $0x1530] sm:$0xff]
    %v710 = vld [vmem:[%s1 + $0x1538] sm:$0xff]
    %v711 = vld [vmem:[%s1 + $0x1540] sm:$0xff]
    %v712 = vld [vmem:[%s1 + $0x1548] sm:$0xff]
    %v713 = vld [vmem:[%s1 + $0x1550] sm:$0xff]
    %v714 = vld [vmem:[%s1 + $0x1558] sm:$0xff]
    %v715 = vld [vmem:[%s1 + $0x1560] sm:$0xff]
    %v716 = vld [vmem:[%s1 + $0x1568] sm:$0xff]
    %v717 = vld [vmem:[%s1 + $0x1570] sm:$0xff]
    %v718 = vld [vmem:[%s1 + $0x1578] sm:$0xff]
    %v719 = vld [vmem:[%s1 + $0x1580] sm:$0xff]
    %v720 = vld [vmem:[%s1 + $0x1588] sm:$0xff]
    %v721 = vld [vmem:[%s1 + $0x1590] sm:$0xff]
    %v722 = vld [vmem:[%s1 + $0x1598] sm:$0xff]
    %v723 = vld [vmem:[%s1 + $0x15a0] sm:$0xff]
    %v724 = vld [vmem:[%s1 + $0x15a8] sm:$0xff]
    %v725 = vld [vmem:[%s1 + $0x15b0] sm:$0xff]
    %v726 = vld [vmem:[%s1 + $0x15b8] sm:$0xff]
    %v727 = vld [vmem:[%s1 + $0x15c0] sm:$0xff]
    %v728 = vld [vmem:[%s1 + $0x15c8] sm:$0xff]
    %v729 = vld [vmem:[%s1 + $0x15d0] sm:$0xff]
    %v730 = vld [vmem:[%s1 + $0x15d8] sm:$0xff]
    %v731 = vld [vmem:[%s1 + $0x15e0] sm:$0xff]
    %v732 = vld [vmem:[%s1 + $0x15e8] sm:$0xff]
    %v733 = vld [vmem:[%s1 + $0x15f0] sm:$0xff]
    %v734 = vld [vmem:[%s1 + $0x15f8] sm:$0xff]
    %v735 = vld [vmem:[%s1 + $0x1600] sm:$0xff]
    %v736 = vld [vmem:[%s1 + $0x1608] sm:$0xff]
    %v737 = vld [vmem:[%s1 + $0x1610] sm:$0xff]
    %v738 = vld [vmem:[%s1 + $0x1618] sm:$0xff]
    %v739 = vld [vmem:[%s1 + $0x1620] sm:$0xff]
    %v740 = vld [vmem:[%s1 + $0x1628] sm:$0xff]
    %v741 = vld [vmem:[%s1 + $0x1630] sm:$0xff]
    %v742 = vld [vmem:[%s1 + $0x1638] sm:$0xff]
    %v743 = vld [vmem:[%s1 + $0x1640] sm:$0xff]
    %v744 = vld [vmem:[%s1 + $0x1648] sm:$0xff]
    %v745 = vld [vmem:[%s1 + $0x1650] sm:$0xff]
    %v746 = vld [vmem:[%s1 + $0x1658] sm:$0xff]
    %v747 = vld [vmem:[%s1 + $0x1660] sm:$0xff]
    %v748 = vld [vmem:[%s1 + $0x1668] sm:$0xff]
    %v749 = vld [vmem:[%s1 + $0x1670] sm:$0xff]
    %v750 = vld [vmem:[%s1 + $0x1678] sm:$0xff]
    %v751 = vld [vmem:[%s1 + $0x1680] sm:$0xff]
    %v752 = vld [vmem:[%s1 + $0x1688] sm:$0xff]
    %v753 = vld [vmem:[%s1 + $0x1690] sm:$0xff]
    %v754 = vld [vmem:[%s1 + $0x1698] sm:$0xff]
    %v755 = vld [vmem:[%s1 + $0x16a0] sm:$0xff]
    %v756 = vld [vmem:[%s1 + $0x16a8] sm:$0xff]
    %v757 = vld [vmem:[%s1 + $0x16b0] sm:$0xff]
    %v758 = vld [vmem:[%s1 + $0x16b8] sm:$0xff]
    %v759 = vld [vmem:[%s1 + $0x16c0] sm:$0xff]
    %v760 = vld [vmem:[%s1 + $0x16c8] sm:$0xff]
    %v761 = vld [vmem:[%s1 + $0x16d0] sm:$0xff]
    %v762 = vld [vmem:[%s1 + $0x16d8] sm:$0xff]
    %v763 = vld [vmem:[%s1 + $0x16e0] sm:$0xff]
    %v764 = vld [vmem:[%s1 + $0x16e8] sm:$0xff]
    %v765 = vld [vmem:[%s1 + $0x16f0] sm:$0xff]
    %v766 = vld [vmem:[%s1 + $0x16f8] sm:$0xff]
    %v767 = vld [vmem:[%s1 + $0x1700] sm:$0xff]
    %v768 = vld [vmem:[%s1 + $0x1708] sm:$0xff]
    %v769 = vld [vmem:[%s1 + $0x1710] sm:$0xff]
    %v770 = vld [vmem:[%s1 + $0x1718] sm:$0xff]
    %v771 = vld [vmem:[%s1 + $0x1720] sm:$0xff]
    %v772 = vld [vmem:[%s1 + $0x1728] sm:$0xff]
    %v773 = vld [vmem:[%s1 + $0x1730] sm:$0xff]
    %v774 = vld [vmem:[%s1 + $0x1738] sm:$0xff]
    %v775 = vld [vmem:[%s1 + $0x1740] sm:$0xff]
    %v776 = vld [vmem:[%s1 + $0x1748] sm:$0xff]
    %v777 = vld [vmem:[%s1 + $0x1750] sm:$0xff]
    %v778 = vld [vmem:[%s1 + $0x1758] sm:$0xff]
    %v779 = vld [vmem:[%s1 + $0x1760] sm:$0xff]
    %v780 = vld [vmem:[%s1 + $0x1768] sm:$0xff]
    %v781 = vld [vmem:[%s1 + $0x1770] sm:$0xff]
    %v782 = vld [vmem:[%s1 + $0x1778] sm:$0xff]
    %v783 = vld [vmem:[%s1 + $0x1780] sm:$0xff]
    %v784 = vld [vmem:[%s1 + $0x1788] sm:$0xff]
    %v785 = vld [vmem:[%s1 + $0x1790] sm:$0xff]
    %v786 = vld [vmem:[%s1 + $0x1798] sm:$0xff]
    %v787 = vld [vmem:[%s1 + $0x17a0] sm:$0xff]
    %v788 = vld [vmem:[%s1 + $0x17a8] sm:$0xff]
    %v789 = vld [vmem:[%s1 + $0x17b0] sm:$0xff]
    %v790 = vld [vmem:[%s1 + $0x17b8] sm:$0xff]
    %v791 = vld [vmem:[%s1 + $0x17c0] sm:$0xff]
    %v792 = vld [vmem:[%s1 + $0x17c8] sm:$0xff]
    %v793 = vld [vmem:[%s1 + $0x17d0] sm:$0xff]
    %v794 = vld [vmem:[%s1 + $0x17d8] sm:$0xff]
    %v795 = vld [vmem:[%s1 + $0x17e0] sm:$0xff]
    %v796 = vld [vmem:[%s1 + $0x17e8] sm:$0xff]
    %v797 = vld [vmem:[%s1 + $0x17f0] sm:$0xff]
    %v798 = vld [vmem:[%s1 + $0x17f8] sm:$0xff]
    %v799 = vld [vmem:[%s1 + $0x1800] sm:$0xff]
    %v800 = vld [vmem:[%s1 + $0x1808] sm:$0xff]
    %v801 = vld [vmem:[%s1 + $0x1810] sm:$0xff]
    %v802 = vld [vmem:[%s1 + $0x1818] sm:$0xff]
    %v803 = vld [vmem:[%s1 + $0x1820] sm:$0xff]
    %v804 = vld [vmem:[%s1 + $0x1828] sm:$0xff]
    %v805 = vld [vmem:[%s1 + $0x1830] sm:$0xff]
    %v806 = vld [vmem:[%s1 + $0x1838] sm:$0xff]
    %v807 = vld [vmem:[%s1 + $0x1840] sm:$0xff]
    %v808 = vld [vmem:[%s1 + $0x1848] sm:$0xff]
    %v809 = vld [vmem:[%s1 + $0x1850] sm:$0xff]
    %v810 = vld [vmem:[%s1 + $0x1858] sm:$0xff]
    %v811 = vld [vmem:[%s1 + $0x1860] sm:$0xff]
    %v812 = vld [vmem:[%s1 + $0x1868] sm:$0xff]
    %v813 = vld [vmem:[%s1 + $0x1870] sm:$0xff]
    %v814 = vld [vmem:[%s1 + $0x1878] sm:$0xff]
    %v815 = vld [vmem:[%s1 + $0x1880] sm:$0xff]
    %v816 = vld [vmem:[%s1 + $0x1888] sm:$0xff]
    %v817 = vld [vmem:[%s1 + $0x1890] sm:$0xff]
    %v818 = vld [vmem:[%s1 + $0x1898] sm:$0xff]
    %v819 = vld [vmem:[%s1 + $0x18a0] sm:$0xff]
    %v820 = vld [vmem:[%s1 + $0x18a8] sm:$0xff]
    %v821 = vld [vmem:[%s1 + $0x18b0] sm:$0xff]
    %v822 = vld [vmem:[%s1 + $0x18b8] sm:$0xff]
    %v823 = vld [vmem:[%s1 + $0x18c0] sm:$0xff]
    %v824 = vld [vmem:[%s1 + $0x18c8] sm:$0xff]
    %v825 = vld [vmem:[%s1 + $0x18d0] sm:$0xff]
    %v826 = vld [vmem:[%s1 + $0x18d8] sm:$0xff]
    %v827 = vld [vmem:[%s1 + $0x18e0] sm:$0xff]
    %v828 = vld [vmem:[%s1 + $0x18e8] sm:$0xff]
    %v829 = vld [vmem:[%s1 + $0x18f0] sm:$0xff]
    %v830 = vld [vmem:[%s1 + $0x18f8] sm:$0xff]
    %v831 = vld [vmem:[%s1 + $0x1900] sm:$0xff]
    %v832 = vld [vmem:[%s1 + $0x1908] sm:$0xff]
    %v833 = vld [vmem:[%s1 + $0x1910] sm:$0xff]
    %v834 = vld [vmem:[%s1 + $0x1918] sm:$0xff]
    %v835 = vld [vmem:[%s1 + $0x1920] sm:$0xff]
    %v836 = vld [vmem:[%s1 + $0x1928] sm:$0xff]
    %v837 = vld [vmem:[%s1 + $0x1930] sm:$0xff]
    %v838 = vld [vmem:[%s1 + $0x1938] sm:$0xff]
    %v839 = vld [vmem:[%s1 + $0x1940] sm:$0xff]
    %v840 = vld [vmem:[%s1 + $0x1948] sm:$0xff]
    %v841 = vld [vmem:[%s1 + $0x1950] sm:$0xff]
    %v842 = vld [vmem:[%s1 + $0x1958] sm:$0xff]
    %v843 = vld [vmem:[%s1 + $0x1960] sm:$0xff]
    %v844 = vld [vmem:[%s1 + $0x1968] sm:$0xff]
    %v845 = vld [vmem:[%s1 + $0x1970] sm:$0xff]
    %v846 = vld [vmem:[%s1 + $0x1978] sm:$0xff]
    %v847 = vld [vmem:[%s1 + $0x1980] sm:$0xff]
    %v848 = vld [vmem:[%s1 + $0x1988] sm:$0xff]
    %v849 = vld [vmem:[%s1 + $0x1990] sm:$0xff]
    %v850 = vld [vmem:[%s1 + $0x1998] sm:$0xff]
    %v851 = vld [vmem:[%s1 + $0x19a0] sm:$0xff]
    %v852 = vld [vmem:[%s1 + $0x19a8] sm:$0xff]
    %v853 = vld [vmem:[%s1 + $0x19b0] sm:$0xff]
    %v854 = vld [vmem:[%s1 + $0x19b8] sm:$0xff]
    %v855 = vld [vmem:[%s1 + $0x19c0] sm:$0xff]
    %v856 = vld [vmem:[%s1 + $0x19c8] sm:$0xff]
    %v857 = vld [vmem:[%s1 + $0x19d0] sm:$0xff]
    %v858 = vld [vmem:[%s1 + $0x19d8] sm:$0xff]
    %v859 = vld [vmem:[%s1 + $0x19e0] sm:$0xff]
    %v860 = vld [vmem:[%s1 + $0x19e8] sm:$0xff]
    %v861 = vld [vmem:[%s1 + $0x19f0] sm:$0xff]
    %v862 = vld [vmem:[%s1 + $0x19f8] sm:$0xff]
    %v863 = vld [vmem:[%s1 + $0x1a00] sm:$0xff]
    %v864 = vld [vmem:[%s1 + $0x1a08] sm:$0xff]
    %v865 = vld [vmem:[%s1 + $0x1a10] sm:$0xff]
    %v866 = vld [vmem:[%s1 + $0x1a18] sm:$0xff]
    %v867 = vld [vmem:[%s1 + $0x1a20] sm:$0xff]
    %v868 = vld [vmem:[%s1 + $0x1a28] sm:$0xff]
    %v869 = vld [vmem:[%s1 + $0x1a30] sm:$0xff]
    %v870 = vld [vmem:[%s1 + $0x1a38] sm:$0xff]
    %v871 = vld [vmem:[%s1 + $0x1a40] sm:$0xff]
    %v872 = vld [vmem:[%s1 + $0x1a48] sm:$0xff]
    %v873 = vld [vmem:[%s1 + $0x1a50] sm:$0xff]
    %v874 = vld [vmem:[%s1 + $0x1a58] sm:$0xff]
    %v875 = vld [vmem:[%s1 + $0x1a60] sm:$0xff]
    %v876 = vld [vmem:[%s1 + $0x1a68] sm:$0xff]
    %v877 = vld [vmem:[%s1 + $0x1a70] sm:$0xff]
    %v878 = vld [vmem:[%s1 + $0x1a78] sm:$0xff]
    %v879 = vld [vmem:[%s1 + $0x1a80] sm:$0xff]
    %v880 = vld [vmem:[%s1 + $0x1a88] sm:$0xff]
    %v881 = vld [vmem:[%s1 + $0x1a90] sm:$0xff]
    %v882 = vld [vmem:[%s1 + $0x1a98] sm:$0xff]
    %v883 = vld [vmem:[%s1 + $0x1aa0] sm:$0xff]
    %v884 = vld [vmem:[%s1 + $0x1aa8] sm:$0xff]
    %v885 = vld [vmem:[%s1 + $0x1ab0] sm:$0xff]
    %v886 = vld [vmem:[%s1 + $0x1ab8] sm:$0xff]
    %v887 = vld [vmem:[%s1 + $0x1ac0] sm:$0xff]
    %v888 = vld [vmem:[%s1 + $0x1ac8] sm:$0xff]
    %v889 = vld [vmem:[%s1 + $0x1ad0] sm:$0xff]
    %v890 = vld [vmem:[%s1 + $0x1ad8] sm:$0xff]
    %v891 = vld [vmem:[%s1 + $0x1ae0] sm:$0xff]
    %v892 = vld [vmem:[%s1 + $0x1ae8] sm:$0xff]
    %v893 = vld [vmem:[%s1 + $0x1af0] sm:$0xff]
    %v894 = vld [vmem:[%s1 + $0x1af8] sm:$0xff]
    %v895 = vld [vmem:[%s1 + $0x1b00] sm:$0xff]
    %v896 = vld [vmem:[%s1 + $0x1b08] sm:$0xff]
    %v897 = vld [vmem:[%s1 + $0x1b10] sm:$0xff]
    %v898 = vld [vmem:[%s1 + $0x1b18] sm:$0xff]
    %v899 = vld [vmem:[%s1 + $0x1b20] sm:$0xff]
    %v900 = vld [vmem:[%s1 + $0x1b28] sm:$0xff]
    %v901 = vld [vmem:[%s1 + $0x1b30] sm:$0xff]
    %v902 = vld [vmem:[%s1 + $0x1b38] sm:$0xff]
    %v903 = vld [vmem:[%s1 + $0x1b40] sm:$0xff]
    %v904 = vld [vmem:[%s1 + $0x1b48] sm:$0xff]
    %v905 = vld [vmem:[%s1 + $0x1b50] sm:$0xff]
    %v906 = vld [vmem:[%s1 + $0x1b58] sm:$0xff]
    %v907 = vld [vmem:[%s1 + $0x1b60] sm:$0xff]
    %v908 = vld [vmem:[%s1 + $0x1b68] sm:$0xff]
    %v909 = vld [vmem:[%s1 + $0x1b70] sm:$0xff]
    %v910 = vld [vmem:[%s1 + $0x1b78] sm:$0xff]
    %v911 = vld [vmem:[%s1 + $0x1b80] sm:$0xff]
    %v912 = vld [vmem:[%s1 + $0x1b88] sm:$0xff]
    %v913 = vld [vmem:[%s1 + $0x1b90] sm:$0xff]
    %v914 = vld [vmem:[%s1 + $0x1b98] sm:$0xff]
    %v915 = vld [vmem:[%s1 + $0x1ba0] sm:$0xff]
    %v916 = vld [vmem:[%s1 + $0x1ba8] sm:$0xff]
    %v917 = vld [vmem:[%s1 + $0x1bb0] sm:$0xff]
    %v918 = vld [vmem:[%s1 + $0x1bb8] sm:$0xff]
    %v919 = vld [vmem:[%s1 + $0x1bc0] sm:$0xff]
    %v920 = vld [vmem:[%s1 + $0x1bc8] sm:$0xff]
    %v921 = vld [vmem:[%s1 + $0x1bd0] sm:$0xff]
    %v922 = vld [vmem:[%s1 + $0x1bd8] sm:$0xff]
    %v923 = vld [vmem:[%s1 + $0x1be0] sm:$0xff]
    %v924 = vld [vmem:[%s1 + $0x1be8] sm:$0xff]
    %v925 = vld [vmem:[%s1 + $0x1bf0] sm:$0xff]
    %v926 = vld [vmem:[%s1 + $0x1bf8] sm:$0xff]
    %v927 = vld [vmem:[%s1 + $0x1c00] sm:$0xff]
    %v928 = vld [vmem:[%s1 + $0x1c08] sm:$0xff]
    %v929 = vld [vmem:[%s1 + $0x1c10] sm:$0xff]
    %v930 = vld [vmem:[%s1 + $0x1c18] sm:$0xff]
    %v931 = vld [vmem:[%s1 + $0x1c20] sm:$0xff]
    %v932 = vld [vmem:[%s1 + $0x1c28] sm:$0xff]
    %v933 = vld [vmem:[%s1 + $0x1c30] sm:$0xff]
    %v934 = vld [vmem:[%s1 + $0x1c38] sm:$0xff]
    %v935 = vld [vmem:[%s1 + $0x1c40] sm:$0xff]
    %v936 = vld [vmem:[%s1 + $0x1c48] sm:$0xff]
    %v937 = vld [vmem:[%s1 + $0x1c50] sm:$0xff]
    %v938 = vld [vmem:[%s1 + $0x1c58] sm:$0xff]
    %v939 = vld [vmem:[%s1 + $0x1c60] sm:$0xff]
    %v940 = vld [vmem:[%s1 + $0x1c68] sm:$0xff]
    %v941 = vld [vmem:[%s1 + $0x1c70] sm:$0xff]
    %v942 = vld [vmem:[%s1 + $0x1c78] sm:$0xff]
    %v943 = vld [vmem:[%s1 + $0x1c80] sm:$0xff]
    %v944 = vld [vmem:[%s1 + $0x1c88] sm:$0xff]
    %v945 = vld [vmem:[%s1 + $0x1c90] sm:$0xff]
    %v946 = vld [vmem:[%s1 + $0x1c98] sm:$0xff]
    %v947 = vld [vmem:[%s1 + $0x1ca0] sm:$0xff]
    %v948 = vld [vmem:[%s1 + $0x1ca8] sm:$0xff]
    %v949 = vld [vmem:[%s1 + $0x1cb0] sm:$0xff]
    %v950 = vld [vmem:[%s1 + $0x1cb8] sm:$0xff]
    %v951 = vld [vmem:[%s1 + $0x1cc0] sm:$0xff]
    %v952 = vld [vmem:[%s1 + $0x1cc8] sm:$0xff]
    %v953 = vld [vmem:[%s1 + $0x1cd0] sm:$0xff]
    %v954 = vld [vmem:[%s1 + $0x1cd8] sm:$0xff]
    %v955 = vld [vmem:[%s1 + $0x1ce0] sm:$0xff]
    %v956 = vld [vmem:[%s1 + $0x1ce8] sm:$0xff]
    %v957 = vld [vmem:[%s1 + $0x1cf0] sm:$0xff]
    %v958 = vld [vmem:[%s1 + $0x1cf8] sm:$0xff]
    %v959 = vld [vmem:[%s1 + $0x1d00] sm:$0xff]
    %v960 = vld [vmem:[%s1 + $0x1d08] sm:$0xff]
    %v961 = vld [vmem:[%s1 + $0x1d10] sm:$0xff]
    %v962 = vld [vmem:[%s1 + $0x1d18] sm:$0xff]
    %v963 = vld [vmem:[%s1 + $0x1d20] sm:$0xff]
    %v964 = vld [vmem:[%s1 + $0x1d28] sm:$0xff]
    %v965 = vld [vmem:[%s1 + $0x1d30] sm:$0xff]
    %v966 = vld [vmem:[%s1 + $0x1d38] sm:$0xff]
    %v967 = vld [vmem:[%s1 + $0x1d40] sm:$0xff]
    %v968 = vld [vmem:[%s1 + $0x1d48] sm:$0xff]
    %v969 = vld [vmem:[%s1 + $0x1d50] sm:$0xff]
    %v970 = vld [vmem:[%s1 + $0x1d58] sm:$0xff]
    %v971 = vld [vmem:[%s1 + $0x1d60] sm:$0xff]
    %v972 = vld [vmem:[%s1 + $0x1d68] sm:$0xff]
    %v973 = vld [vmem:[%s1 + $0x1d70] sm:$0xff]
    %v974 = vld [vmem:[%s1 + $0x1d78] sm:$0xff]
    %v975 = vld [vmem:[%s1 + $0x1d80] sm:$0xff]
    %v976 = vld [vmem:[%s1 + $0x1d88] sm:$0xff]
    %v977 = vld [vmem:[%s1 + $0x1d90] sm:$0xff]
    %v978 = vld [vmem:[%s1 + $0x1d98] sm:$0xff]
    %v979 = vld [vmem:[%s1 + $0x1da0] sm:$0xff]
    %v980 = vld [vmem:[%s1 + $0x1da8] sm:$0xff]
    %v981 = vld [vmem:[%s1 + $0x1db0] sm:$0xff]
    %v982 = vld [vmem:[%s1 + $0x1db8] sm:$0xff]
    %v983 = vld [vmem:[%s1 + $0x1dc0] sm:$0xff]
    %v984 = vld [vmem:[%s1 + $0x1dc8] sm:$0xff]
    %v985 = vld [vmem:[%s1 + $0x1dd0] sm:$0xff]
    %v986 = vld [vmem:[%s1 + $0x1dd8] sm:$0xff]
    %v987 = vld [vmem:[%s1 + $0x1de0] sm:$0xff]
    %v988 = vld [vmem:[%s1 + $0x1de8] sm:$0xff]
    %v989 = vld [vmem:[%s1 + $0x1df0] sm:$0xff]
    %v990 = vld [vmem:[%s1 + $0x1df8] sm:$0xff]
    %v991 = vld [vmem:[%s1 + $0x1e00] sm:$0xff]
    %v992 = vld [vmem:[%s1 + $0x1e08] sm:$0xff]
    %v993 = vld [vmem:[%s1 + $0x1e10] sm:$0xff]
    %v994 = vld [vmem:[%s1 + $0x1e18] sm:$0xff]
    %v995 = vld [vmem:[%s1 + $0x1e20] sm:$0xff]
    %v996 = vld [vmem:[%s1 + $0x1e28] sm:$0xff]
    %v997 = vld [vmem:[%s1 + $0x1e30] sm:$0xff]
    %v998 = vld [vmem:[%s1 + $0x1e38] sm:$0xff]
    %v999 = vld [vmem:[%s1 + $0x1e40] sm:$0xff]
    %v1000 = vld [vmem:[%s1 + $0x1e48] sm:$0xff]
    %v1001 = vld [vmem:[%s1 + $0x1e50] sm:$0xff]
    %v1002 = vld [vmem:[%s1 + $0x1e58] sm:$0xff]
    %v1003 = vld [vmem:[%s1 + $0x1e60] sm:$0xff]
    %v1004 = vld [vmem:[%s1 + $0x1e68] sm:$0xff]
    %v1005 = vld [vmem:[%s1 + $0x1e70] sm:$0xff]
    %v1006 = vld [vmem:[%s1 + $0x1e78] sm:$0xff]
    %v1007 = vld [vmem:[%s1 + $0x1e80] sm:$0xff]
    %v1008 = vld [vmem:[%s1 + $0x1e88] sm:$0xff]
    %v1009 = vld [vmem:[%s1 + $0x1e90] sm:$0xff]
    %v1010 = vld [vmem:[%s1 + $0x1e98] sm:$0xff]
    %v1011 = vld [vmem:[%s1 + $0x1ea0] sm:$0xff]
    %v1012 = vld [vmem:[%s1 + $0x1ea8] sm:$0xff]
    %v1013 = vld [vmem:[%s1 + $0x1eb0] sm:$0xff]
    %v1014 = vld [vmem:[%s1 + $0x1eb8] sm:$0xff]
    %v1015 = vld [vmem:[%s1 + $0x1ec0] sm:$0xff]
    %v1016 = vld [vmem:[%s1 + $0x1ec8] sm:$0xff]
    %v1017 = vld [vmem:[%s1 + $0x1ed0] sm:$0xff]
    %v1018 = vld [vmem:[%s1 + $0x1ed8] sm:$0xff]
    %v1019 = vld [vmem:[%s1 + $0x1ee0] sm:$0xff]
    %v1020 = vld [vmem:[%s1 + $0x1ee8] sm:$0xff]
    %v1021 = vld [vmem:[%s1 + $0x1ef0] sm:$0xff]
    %v1022 = vld [vmem:[%s1 + $0x1ef8] sm:$0xff]
    %v1023 = vld [vmem:[%s1 + $0x1f00] sm:$0xff]
    %v1024 = vld [vmem:[%s1 + $0x1f08] sm:$0xff]
    %v1025 = vld [vmem:[%s1 + $0x1f10] sm:$0xff]
    %v1026 = vld [vmem:[%s1 + $0x1f18] sm:$0xff]
    %v1027 = vld [vmem:[%s1 + $0x1f20] sm:$0xff]
    %v1028 = vld [vmem:[%s1 + $0x1f28] sm:$0xff]
    %v1029 = vld [vmem:[%s1 + $0x1f30] sm:$0xff]
    %v1030 = vld [vmem:[%s1 + $0x1f38] sm:$0xff]
    %v1031 = vld [vmem:[%s1 + $0x1f40] sm:$0xff]
    %v1032 = vld [vmem:[%s1 + $0x1f48] sm:$0xff]
    %v1033 = vld [vmem:[%s1 + $0x1f50] sm:$0xff]
    %v1034 = vld [vmem:[%s1 + $0x1f58] sm:$0xff]
    %v1035 = vld [vmem:[%s1 + $0x1f60] sm:$0xff]
    %v1036 = vld [vmem:[%s1 + $0x1f68] sm:$0xff]
    %v1037 = vld [vmem:[%s1 + $0x1f70] sm:$0xff]
    %v1038 = vld [vmem:[%s1 + $0x1f78] sm:$0xff]
    %v1039 = vld [vmem:[%s1 + $0x1f80] sm:$0xff]
    %v1040 = vld [vmem:[%s1 + $0x1f88] sm:$0xff]
    %v1041 = vld [vmem:[%s1 + $0x1f90] sm:$0xff]
    %v1042 = vld [vmem:[%s1 + $0x1f98] sm:$0xff]
    %v1043 = vld [vmem:[%s1 + $0x1fa0] sm:$0xff]
    %v1044 = vld [vmem:[%s1 + $0x1fa8] sm:$0xff]
    %v1045 = vld [vmem:[%s1 + $0x1fb0] sm:$0xff]
    %v1046 = vld [vmem:[%s1 + $0x1fb8] sm:$0xff]
    %v1047 = vld [vmem:[%s1 + $0x1fc0] sm:$0xff]
    %v1048 = vld [vmem:[%s1 + $0x1fc8] sm:$0xff]
    %v1049 = vld [vmem:[%s1 + $0x1fd0] sm:$0xff]
    %v1050 = vld [vmem:[%s1 + $0x1fd8] sm:$0xff]
    %v1051 = vld [vmem:[%s1 + $0x1fe0] sm:$0xff]
    %v1052 = vld [vmem:[%s1 + $0x1fe8] sm:$0xff]
    %v1053 = vld [vmem:[%s1 + $0x1ff0] sm:$0xff]
    %v1054 = vld [vmem:[%s1 + $0x1ff8] sm:$0xff]
    %v1055 = vld [vmem:[%s2] sm:$0x1]
    %v1057 = vlaneseq
    %v1058 = vshrl.u32 %v1057, 7
    %v1059 = vsub.s32 0, %v1058
    %v1060 = vrot.slane %v1055, %v1059
    %v1078 = vcombine.high %v15, %v15
    %v1080 = vunpack.c.l.s4 1983009808
    %v1081 = vunpack.c.0.s8 %v1080
    %v1082 = vlaneseq
    %v1083 = vshrl.u32 %v1082, 7
    %v1084 = vsub.s32 %v1081, %v1083
    %v1085 = vrot.slane %v15, %v1084
    %v1087 = vunpack.c.l.s4 1983009808
    %v1088 = vunpack.c.0.s8 %v1087
    %v1089 = vlaneseq
    %v1090 = vshrl.u32 %v1089, 7
    %v1091 = vsub.s32 %v1088, %v1090
    %v1092 = vrot.slane %v1078, %v1091
    %v1093 = vcombine.high %v1085, %v1085
    %v1094 = vcombine.high %v1092, %v1092
    %v1095 = vcombine.high %v16, %v16
    %v1097 = vunpack.c.l.s4 1983009808
    %v1098 = vunpack.c.0.s8 %v1097
    %v1099 = vlaneseq
    %v1100 = vshrl.u32 %v1099, 7
    %v1101 = vsub.s32 %v1098, %v1100
    %v1102 = vrot.slane %v16, %v1101
    %v1104 = vunpack.c.l.s4 1983009808
    %v1105 = vunpack.c.0.s8 %v1104
    %v1106 = vlaneseq
    %v1107 = vshrl.u32 %v1106, 7
    %v1108 = vsub.s32 %v1105, %v1107
    %v1109 = vrot.slane %v1095, %v1108
    %v1110 = vcombine.high %v1102, %v1102
    %v1111 = vcombine.high %v1109, %v1109
    %v1112 = vcombine.high %v17, %v17
    %v1114 = vunpack.c.l.s4 1983009808
    %v1115 = vunpack.c.0.s8 %v1114
    %v1116 = vlaneseq
    %v1117 = vshrl.u32 %v1116, 7
    %v1118 = vsub.s32 %v1115, %v1117
    %v1119 = vrot.slane %v17, %v1118
    %v1121 = vunpack.c.l.s4 1983009808
    %v1122 = vunpack.c.0.s8 %v1121
    %v1123 = vlaneseq
    %v1124 = vshrl.u32 %v1123, 7
    %v1125 = vsub.s32 %v1122, %v1124
    %v1126 = vrot.slane %v1112, %v1125
    %v1127 = vcombine.high %v1119, %v1119
    %v1128 = vcombine.high %v1126, %v1126
    %v1129 = vcombine.high %v18, %v18
    %v1131 = vunpack.c.l.s4 1983009808
    %v1132 = vunpack.c.0.s8 %v1131
    %v1133 = vlaneseq
    %v1134 = vshrl.u32 %v1133, 7
    %v1135 = vsub.s32 %v1132, %v1134
    %v1136 = vrot.slane %v18, %v1135
    %v1138 = vunpack.c.l.s4 1983009808
    %v1139 = vunpack.c.0.s8 %v1138
    %v1140 = vlaneseq
    %v1141 = vshrl.u32 %v1140, 7
    %v1142 = vsub.s32 %v1139, %v1141
    %v1143 = vrot.slane %v1129, %v1142
    %v1144 = vcombine.high %v1136, %v1136
    %v1145 = vcombine.high %v1143, %v1143
    %v1146 = vcombine.high %v19, %v19
    %v1148 = vunpack.c.l.s4 1983009808
    %v1149 = vunpack.c.0.s8 %v1148
    %v1150 = vlaneseq
    %v1151 = vshrl.u32 %v1150, 7
    %v1152 = vsub.s32 %v1149, %v1151
    %v1153 = vrot.slane %v19, %v1152
    %v1155 = vunpack.c.l.s4 1983009808
    %v1156 = vunpack.c.0.s8 %v1155
    %v1157 = vlaneseq
    %v1158 = vshrl.u32 %v1157, 7
    %v1159 = vsub.s32 %v1156, %v1158
    %v1160 = vrot.slane %v1146, %v1159
    %v1161 = vcombine.high %v1153, %v1153
    %v1162 = vcombine.high %v1160, %v1160
    %v1163 = vcombine.high %v20, %v20
    %v1165 = vunpack.c.l.s4 1983009808
    %v1166 = vunpack.c.0.s8 %v1165
    %v1167 = vlaneseq
    %v1168 = vshrl.u32 %v1167, 7
    %v1169 = vsub.s32 %v1166, %v1168
    %v1170 = vrot.slane %v20, %v1169
    %v1172 = vunpack.c.l.s4 1983009808
    %v1173 = vunpack.c.0.s8 %v1172
    %v1174 = vlaneseq
    %v1175 = vshrl.u32 %v1174, 7
    %v1176 = vsub.s32 %v1173, %v1175
    %v1177 = vrot.slane %v1163, %v1176
    %v1178 = vcombine.high %v1170, %v1170
    %v1179 = vcombine.high %v1177, %v1177
    %v1180 = vcombine.high %v21, %v21
    %v1182 = vunpack.c.l.s4 1983009808
    %v1183 = vunpack.c.0.s8 %v1182
    %v1184 = vlaneseq
    %v1185 = vshrl.u32 %v1184, 7
    %v1186 = vsub.s32 %v1183, %v1185
    %v1187 = vrot.slane %v21, %v1186
    %v1189 = vunpack.c.l.s4 1983009808
    %v1190 = vunpack.c.0.s8 %v1189
    %v1191 = vlaneseq
    %v1192 = vshrl.u32 %v1191, 7
    %v1193 = vsub.s32 %v1190, %v1192
    %v1194 = vrot.slane %v1180, %v1193
    %v1195 = vcombine.high %v1187, %v1187
    %v1196 = vcombine.high %v1194, %v1194
    %v1197 = vcombine.high %v22, %v22
    %v1199 = vunpack.c.l.s4 1983009808
    %v1200 = vunpack.c.0.s8 %v1199
    %v1201 = vlaneseq
    %v1202 = vshrl.u32 %v1201, 7
    %v1203 = vsub.s32 %v1200, %v1202
    %v1204 = vrot.slane %v22, %v1203
    %v1206 = vunpack.c.l.s4 1983009808
    %v1207 = vunpack.c.0.s8 %v1206
    %v1208 = vlaneseq
    %v1209 = vshrl.u32 %v1208, 7
    %v1210 = vsub.s32 %v1207, %v1209
    %v1211 = vrot.slane %v1197, %v1210
    %v1212 = vcombine.high %v1204, %v1204
    %v1213 = vcombine.high %v1211, %v1211
    %v1214 = vcombine.high %v23, %v23
    %v1216 = vunpack.c.l.s4 1983009808
    %v1217 = vunpack.c.0.s8 %v1216
    %v1218 = vlaneseq
    %v1219 = vshrl.u32 %v1218, 7
    %v1220 = vsub.s32 %v1217, %v1219
    %v1221 = vrot.slane %v23, %v1220
    %v1223 = vunpack.c.l.s4 1983009808
    %v1224 = vunpack.c.0.s8 %v1223
    %v1225 = vlaneseq
    %v1226 = vshrl.u32 %v1225, 7
    %v1227 = vsub.s32 %v1224, %v1226
    %v1228 = vrot.slane %v1214, %v1227
    %v1229 = vcombine.high %v1221, %v1221
    %v1230 = vcombine.high %v1228, %v1228
    %v1231 = vcombine.high %v24, %v24
    %v1233 = vunpack.c.l.s4 1983009808
    %v1234 = vunpack.c.0.s8 %v1233
    %v1235 = vlaneseq
    %v1236 = vshrl.u32 %v1235, 7
    %v1237 = vsub.s32 %v1234, %v1236
    %v1238 = vrot.slane %v24, %v1237
    %v1240 = vunpack.c.l.s4 1983009808
    %v1241 = vunpack.c.0.s8 %v1240
    %v1242 = vlaneseq
    %v1243 = vshrl.u32 %v1242, 7
    %v1244 = vsub.s32 %v1241, %v1243
    %v1245 = vrot.slane %v1231, %v1244
    %v1246 = vcombine.high %v1238, %v1238
    %v1247 = vcombine.high %v1245, %v1245
    %v1248 = vcombine.high %v25, %v25
    %v1250 = vunpack.c.l.s4 1983009808
    %v1251 = vunpack.c.0.s8 %v1250
    %v1252 = vlaneseq
    %v1253 = vshrl.u32 %v1252, 7
    %v1254 = vsub.s32 %v1251, %v1253
    %v1255 = vrot.slane %v25, %v1254
    %v1257 = vunpack.c.l.s4 1983009808
    %v1258 = vunpack.c.0.s8 %v1257
    %v1259 = vlaneseq
    %v1260 = vshrl.u32 %v1259, 7
    %v1261 = vsub.s32 %v1258, %v1260
    %v1262 = vrot.slane %v1248, %v1261
    %v1263 = vcombine.high %v1255, %v1255
    %v1264 = vcombine.high %v1262, %v1262
    %v1265 = vcombine.high %v26, %v26
    %v1267 = vunpack.c.l.s4 1983009808
    %v1268 = vunpack.c.0.s8 %v1267
    %v1269 = vlaneseq
    %v1270 = vshrl.u32 %v1269, 7
    %v1271 = vsub.s32 %v1268, %v1270
    %v1272 = vrot.slane %v26, %v1271
    %v1274 = vunpack.c.l.s4 1983009808
    %v1275 = vunpack.c.0.s8 %v1274
    %v1276 = vlaneseq
    %v1277 = vshrl.u32 %v1276, 7
    %v1278 = vsub.s32 %v1275, %v1277
    %v1279 = vrot.slane %v1265, %v1278
    %v1280 = vcombine.high %v1272, %v1272
    %v1281 = vcombine.high %v1279, %v1279
    %v1282 = vcombine.high %v27, %v27
    %v1284 = vunpack.c.l.s4 1983009808
    %v1285 = vunpack.c.0.s8 %v1284
    %v1286 = vlaneseq
    %v1287 = vshrl.u32 %v1286, 7
    %v1288 = vsub.s32 %v1285, %v1287
    %v1289 = vrot.slane %v27, %v1288
    %v1291 = vunpack.c.l.s4 1983009808
    %v1292 = vunpack.c.0.s8 %v1291
    %v1293 = vlaneseq
    %v1294 = vshrl.u32 %v1293, 7
    %v1295 = vsub.s32 %v1292, %v1294
    %v1296 = vrot.slane %v1282, %v1295
    %v1297 = vcombine.high %v1289, %v1289
    %v1298 = vcombine.high %v1296, %v1296
    %v1299 = vcombine.high %v28, %v28
    %v1301 = vunpack.c.l.s4 1983009808
    %v1302 = vunpack.c.0.s8 %v1301
    %v1303 = vlaneseq
    %v1304 = vshrl.u32 %v1303, 7
    %v1305 = vsub.s32 %v1302, %v1304
    %v1306 = vrot.slane %v28, %v1305
    %v1308 = vunpack.c.l.s4 1983009808
    %v1309 = vunpack.c.0.s8 %v1308
    %v1310 = vlaneseq
    %v1311 = vshrl.u32 %v1310, 7
    %v1312 = vsub.s32 %v1309, %v1311
    %v1313 = vrot.slane %v1299, %v1312
    %v1314 = vcombine.high %v1306, %v1306
    %v1315 = vcombine.high %v1313, %v1313
    %v1316 = vcombine.high %v29, %v29
    %v1318 = vunpack.c.l.s4 1983009808
    %v1319 = vunpack.c.0.s8 %v1318
    %v1320 = vlaneseq
    %v1321 = vshrl.u32 %v1320, 7
    %v1322 = vsub.s32 %v1319, %v1321
    %v1323 = vrot.slane %v29, %v1322
    %v1325 = vunpack.c.l.s4 1983009808
    %v1326 = vunpack.c.0.s8 %v1325
    %v1327 = vlaneseq
    %v1328 = vshrl.u32 %v1327, 7
    %v1329 = vsub.s32 %v1326, %v1328
    %v1330 = vrot.slane %v1316, %v1329
    %v1331 = vcombine.high %v1323, %v1323
    %v1332 = vcombine.high %v1330, %v1330
    %v1333 = vcombine.high %v30, %v30
    %v1335 = vunpack.c.l.s4 1983009808
    %v1336 = vunpack.c.0.s8 %v1335
    %v1337 = vlaneseq
    %v1338 = vshrl.u32 %v1337, 7
    %v1339 = vsub.s32 %v1336, %v1338
    %v1340 = vrot.slane %v30, %v1339
    %v1342 = vunpack.c.l.s4 1983009808
    %v1343 = vunpack.c.0.s8 %v1342
    %v1344 = vlaneseq
    %v1345 = vshrl.u32 %v1344, 7
    %v1346 = vsub.s32 %v1343, %v1345
    %v1347 = vrot.slane %v1333, %v1346
    %v1348 = vcombine.high %v1340, %v1340
    %v1349 = vcombine.high %v1347, %v1347
    %1414 = vmatprep.subr.mxu0 0.0
    %1415 = vmatpush1.msra.mxu0 %v31
    %1416 = vmatprep.subr.mxu0 0.0
    %1417 = vmatpush1.msra.mxu0 %v32
    %1418 = vmatprep.subr.mxu0 0.0
    %1419 = vmatpush1.msra.mxu0 %v33
    %1420 = vmatprep.subr.mxu0 0.0
    %1421 = vmatpush1.msra.mxu0 %v34
    %1422 = vmatprep.subr.mxu0 0.0
    %1423 = vmatpush1.msra.mxu0 %v35
    %1424 = vmatprep.subr.mxu0 0.0
    %1425 = vmatpush1.msra.mxu0 %v36
    %1426 = vmatprep.subr.mxu0 0.0
    %1427 = vmatpush1.msra.mxu0 %v37
    %1428 = vmatprep.subr.mxu0 0.0
    %1429 = vmatpush1.msra.mxu0 %v38
    %1430 = vmatprep.subr.mxu0 0.0
    %1431 = vmatpush1.msra.mxu0 %v39
    %1432 = vmatprep.subr.mxu0 0.0
    %1433 = vmatpush1.msra.mxu0 %v40
    %1434 = vmatprep.subr.mxu0 0.0
    %1435 = vmatpush1.msra.mxu0 %v41
    %1436 = vmatprep.subr.mxu0 0.0
    %1437 = vmatpush1.msra.mxu0 %v42
    %1438 = vmatprep.subr.mxu0 0.0
    %1439 = vmatpush1.msra.mxu0 %v43
    %1440 = vmatprep.subr.mxu0 0.0
    %1441 = vmatpush1.msra.mxu0 %v44
    %1442 = vmatprep.subr.mxu0 0.0
    %1443 = vmatpush1.msra.mxu0 %v45
    %1444 = vmatprep.subr.mxu0 0.0
    %1445 = vmatpush1.msra.mxu0 %v46
    %1446 = vmatprep.subr.mxu0 0.0
    %1447 = vmatpush1.msra.mxu0 %v47
    %1448 = vmatprep.subr.mxu0 0.0
    %1449 = vmatpush1.msra.mxu0 %v48
    %1450 = vmatprep.subr.mxu0 0.0
    %1451 = vmatpush1.msra.mxu0 %v49
    %1452 = vmatprep.subr.mxu0 0.0
    %1453 = vmatpush1.msra.mxu0 %v50
    %1454 = vmatprep.subr.mxu0 0.0
    %1455 = vmatpush1.msra.mxu0 %v51
    %1456 = vmatprep.subr.mxu0 0.0
    %1457 = vmatpush1.msra.mxu0 %v52
    %1458 = vmatprep.subr.mxu0 0.0
    %1459 = vmatpush1.msra.mxu0 %v53
    %1460 = vmatprep.subr.mxu0 0.0
    %1461 = vmatpush1.msra.mxu0 %v54
    %1462 = vmatprep.subr.mxu0 0.0
    %1463 = vmatpush1.msra.mxu0 %v55
    %1464 = vmatprep.subr.mxu0 0.0
    %1465 = vmatpush1.msra.mxu0 %v56
    %1466 = vmatprep.subr.mxu0 0.0
    %1467 = vmatpush1.msra.mxu0 %v57
    %1468 = vmatprep.subr.mxu0 0.0
    %1469 = vmatpush1.msra.mxu0 %v58
    %1470 = vmatprep.subr.mxu0 0.0
    %1471 = vmatpush1.msra.mxu0 %v59
    %1472 = vmatprep.subr.mxu0 0.0
    %1473 = vmatpush1.msra.mxu0 %v60
    %1474 = vmatprep.subr.mxu0 0.0
    %1475 = vmatpush1.msra.mxu0 %v61
    %1476 = vmatprep.subr.mxu0 0.0
    %1477 = vmatpush1.msra.mxu0 %v62
    %1478 = vmatprep.mubr.f32.mxu0 %v1093
    %1479 = vmatmul.mubr.f32.gmra.mrb[0].mxu0 %v1085
    %v1480 = vpop.f32.mrb[0].mxu0
    %v1481 = vadd.f32 %v1060, %v1480
    %v1482 = vpop.f32.mrb[0].mxu0
    %1483 = vdwg.mxu0
    %1484 = vmatprep.subr.mxu0 0.0
    %1485 = vmatpush1.msra.mxu0 %v63
    %1486 = vmatprep.subr.mxu0 0.0
    %1487 = vmatpush1.msra.mxu0 %v64
    %1488 = vmatprep.subr.mxu0 0.0
    %1489 = vmatpush1.msra.mxu0 %v65
    %1490 = vmatprep.subr.mxu0 0.0
    %1491 = vmatpush1.msra.mxu0 %v66
    %1492 = vmatprep.subr.mxu0 0.0
    %1493 = vmatpush1.msra.mxu0 %v67
    %1494 = vmatprep.subr.mxu0 0.0
    %1495 = vmatpush1.msra.mxu0 %v68
    %1496 = vmatprep.subr.mxu0 0.0
    %1497 = vmatpush1.msra.mxu0 %v69
    %1498 = vmatprep.subr.mxu0 0.0
    %1499 = vmatpush1.msra.mxu0 %v70
    %1500 = vmatprep.subr.mxu0 0.0
    %1501 = vmatpush1.msra.mxu0 %v71
    %1502 = vmatprep.subr.mxu0 0.0
    %1503 = vmatpush1.msra.mxu0 %v72
    %1504 = vmatprep.subr.mxu0 0.0
    %1505 = vmatpush1.msra.mxu0 %v73
    %1506 = vmatprep.subr.mxu0 0.0
    %1507 = vmatpush1.msra.mxu0 %v74
    %1508 = vmatprep.subr.mxu0 0.0
    %1509 = vmatpush1.msra.mxu0 %v75
    %1510 = vmatprep.subr.mxu0 0.0
    %1511 = vmatpush1.msra.mxu0 %v76
    %1512 = vmatprep.subr.mxu0 0.0
    %1513 = vmatpush1.msra.mxu0 %v77
    %1514 = vmatprep.subr.mxu0 0.0
    %1515 = vmatpush1.msra.mxu0 %v78
    %1516 = vmatprep.subr.mxu0 0.0
    %1517 = vmatpush1.msra.mxu0 %v79
    %1518 = vmatprep.subr.mxu0 0.0
    %1519 = vmatpush1.msra.mxu0 %v80
    %1520 = vmatprep.subr.mxu0 0.0
    %1521 = vmatpush1.msra.mxu0 %v81
    %1522 = vmatprep.subr.mxu0 0.0
    %1523 = vmatpush1.msra.mxu0 %v82
    %1524 = vmatprep.subr.mxu0 0.0
    %1525 = vmatpush1.msra.mxu0 %v83
    %1526 = vmatprep.subr.mxu0 0.0
    %1527 = vmatpush1.msra.mxu0 %v84
    %1528 = vmatprep.subr.mxu0 0.0
    %1529 = vmatpush1.msra.mxu0 %v85
    %1530 = vmatprep.subr.mxu0 0.0
    %1531 = vmatpush1.msra.mxu0 %v86
    %1532 = vmatprep.subr.mxu0 0.0
    %1533 = vmatpush1.msra.mxu0 %v87
    %1534 = vmatprep.subr.mxu0 0.0
    %1535 = vmatpush1.msra.mxu0 %v88
    %1536 = vmatprep.subr.mxu0 0.0
    %1537 = vmatpush1.msra.mxu0 %v89
    %1538 = vmatprep.subr.mxu0 0.0
    %1539 = vmatpush1.msra.mxu0 %v90
    %1540 = vmatprep.subr.mxu0 0.0
    %1541 = vmatpush1.msra.mxu0 %v91
    %1542 = vmatprep.subr.mxu0 0.0
    %1543 = vmatpush1.msra.mxu0 %v92
    %1544 = vmatprep.subr.mxu0 0.0
    %1545 = vmatpush1.msra.mxu0 %v93
    %1546 = vmatprep.subr.mxu0 0.0
    %1547 = vmatpush1.msra.mxu0 %v94
    %1548 = vmatprep.mubr.f32.mxu0 %v1094
    %1549 = vmatmul.mubr.f32.gmra.mrb[0].mxu0 %v1092
    %v1550 = vpop.f32.mrb[0].mxu0
    %v1551 = vadd.f32 %v1481, %v1550
    %v1552 = vpop.f32.mrb[0].mxu0
    %1553 = vdwg.mxu0
    %1554 = vmatprep.subr.mxu0 0.0
    %1555 = vmatpush1.msra.mxu0 %v95
    %1556 = vmatprep.subr.mxu0 0.0
    %1557 = vmatpush1.msra.mxu0 %v96
    %1558 = vmatprep.subr.mxu0 0.0
    %1559 = vmatpush1.msra.mxu0 %v97
    %1560 = vmatprep.subr.mxu0 0.0
    %1561 = vmatpush1.msra.mxu0 %v98
    %1562 = vmatprep.subr.mxu0 0.0
    %1563 = vmatpush1.msra.mxu0 %v99
    %1564 = vmatprep.subr.mxu0 0.0
    %1565 = vmatpush1.msra.mxu0 %v100
    %1566 = vmatprep.subr.mxu0 0.0
    %1567 = vmatpush1.msra.mxu0 %v101
    %1568 = vmatprep.subr.mxu0 0.0
    %1569 = vmatpush1.msra.mxu0 %v102
    %1570 = vmatprep.subr.mxu0 0.0
    %1571 = vmatpush1.msra.mxu0 %v103
    %1572 = vmatprep.subr.mxu0 0.0
    %1573 = vmatpush1.msra.mxu0 %v104
    %1574 = vmatprep.subr.mxu0 0.0
    %1575 = vmatpush1.msra.mxu0 %v105
    %1576 = vmatprep.subr.mxu0 0.0
    %1577 = vmatpush1.msra.mxu0 %v106
    %1578 = vmatprep.subr.mxu0 0.0
    %1579 = vmatpush1.msra.mxu0 %v107
    %1580 = vmatprep.subr.mxu0 0.0
    %1581 = vmatpush1.msra.mxu0 %v108
    %1582 = vmatprep.subr.mxu0 0.0
    %1583 = vmatpush1.msra.mxu0 %v109
    %1584 = vmatprep.subr.mxu0 0.0
    %1585 = vmatpush1.msra.mxu0 %v110
    %1586 = vmatprep.subr.mxu0 0.0
    %1587 = vmatpush1.msra.mxu0 %v111
    %1588 = vmatprep.subr.mxu0 0.0
    %1589 = vmatpush1.msra.mxu0 %v112
    %1590 = vmatprep.subr.mxu0 0.0
    %1591 = vmatpush1.msra.mxu0 %v113
    %1592 = vmatprep.subr.mxu0 0.0
    %1593 = vmatpush1.msra.mxu0 %v114
    %1594 = vmatprep.subr.mxu0 0.0
    %1595 = vmatpush1.msra.mxu0 %v115
    %1596 = vmatprep.subr.mxu0 0.0
    %1597 = vmatpush1.msra.mxu0 %v116
    %1598 = vmatprep.subr.mxu0 0.0
    %1599 = vmatpush1.msra.mxu0 %v117
    %1600 = vmatprep.subr.mxu0 0.0
    %1601 = vmatpush1.msra.mxu0 %v118
    %1602 = vmatprep.subr.mxu0 0.0
    %1603 = vmatpush1.msra.mxu0 %v119
    %1604 = vmatprep.subr.mxu0 0.0
    %1605 = vmatpush1.msra.mxu0 %v120
    %1606 = vmatprep.subr.mxu0 0.0
    %1607 = vmatpush1.msra.mxu0 %v121
    %1608 = vmatprep.subr.mxu0 0.0
    %1609 = vmatpush1.msra.mxu0 %v122
    %1610 = vmatprep.subr.mxu0 0.0
    %1611 = vmatpush1.msra.mxu0 %v123
    %1612 = vmatprep.subr.mxu0 0.0
    %1613 = vmatpush1.msra.mxu0 %v124
    %1614 = vmatprep.subr.mxu0 0.0
    %1615 = vmatpush1.msra.mxu0 %v125
    %1616 = vmatprep.subr.mxu0 0.0
    %1617 = vmatpush1.msra.mxu0 %v126
    %1618 = vmatprep.mubr.f32.mxu0 %v1110
    %1619 = vmatmul.mubr.f32.gmra.mrb[0].mxu0 %v1102
    %v1620 = vpop.f32.mrb[0].mxu0
    %v1621 = vadd.f32 %v1551, %v1620
    %v1622 = vpop.f32.mrb[0].mxu0
    %1623 = vdwg.mxu0
    %1624 = vmatprep.subr.mxu0 0.0
    %1625 = vmatpush1.msra.mxu0 %v127
    %1626 = vmatprep.subr.mxu0 0.0
    %1627 = vmatpush1.msra.mxu0 %v128
    %1628 = vmatprep.subr.mxu0 0.0
    %1629 = vmatpush1.msra.mxu0 %v129
    %1630 = vmatprep.subr.mxu0 0.0
    %1631 = vmatpush1.msra.mxu0 %v130
    %1632 = vmatprep.subr.mxu0 0.0
    %1633 = vmatpush1.msra.mxu0 %v131
    %1634 = vmatprep.subr.mxu0 0.0
    %1635 = vmatpush1.msra.mxu0 %v132
    %1636 = vmatprep.subr.mxu0 0.0
    %1637 = vmatpush1.msra.mxu0 %v133
    %1638 = vmatprep.subr.mxu0 0.0
    %1639 = vmatpush1.msra.mxu0 %v134
    %1640 = vmatprep.subr.mxu0 0.0
    %1641 = vmatpush1.msra.mxu0 %v135
    %1642 = vmatprep.subr.mxu0 0.0
    %1643 = vmatpush1.msra.mxu0 %v136
    %1644 = vmatprep.subr.mxu0 0.0
    %1645 = vmatpush1.msra.mxu0 %v137
    %1646 = vmatprep.subr.mxu0 0.0
    %1647 = vmatpush1.msra.mxu0 %v138
    %1648 = vmatprep.subr.mxu0 0.0
    %1649 = vmatpush1.msra.mxu0 %v139
    %1650 = vmatprep.subr.mxu0 0.0
    %1651 = vmatpush1.msra.mxu0 %v140
    %1652 = vmatprep.subr.mxu0 0.0
    %1653 = vmatpush1.msra.mxu0 %v141
    %1654 = vmatprep.subr.mxu0 0.0
    %1655 = vmatpush1.msra.mxu0 %v142
    %1656 = vmatprep.subr.mxu0 0.0
    %1657 = vmatpush1.msra.mxu0 %v143
    %1658 = vmatprep.subr.mxu0 0.0
    %1659 = vmatpush1.msra.mxu0 %v144
    %1660 = vmatprep.subr.mxu0 0.0
    %1661 = vmatpush1.msra.mxu0 %v145
    %1662 = vmatprep.subr.mxu0 0.0
    %1663 = vmatpush1.msra.mxu0 %v146
    %1664 = vmatprep.subr.mxu0 0.0
    %1665 = vmatpush1.msra.mxu0 %v147
    %1666 = vmatprep.subr.mxu0 0.0
    %1667 = vmatpush1.msra.mxu0 %v148
    %1668 = vmatprep.subr.mxu0 0.0
    %1669 = vmatpush1.msra.mxu0 %v149
    %1670 = vmatprep.subr.mxu0 0.0
    %1671 = vmatpush1.msra.mxu0 %v150
    %1672 = vmatprep.subr.mxu0 0.0
    %1673 = vmatpush1.msra.mxu0 %v151
    %1674 = vmatprep.subr.mxu0 0.0
    %1675 = vmatpush1.msra.mxu0 %v152
    %1676 = vmatprep.subr.mxu0 0.0
    %1677 = vmatpush1.msra.mxu0 %v153
    %1678 = vmatprep.subr.mxu0 0.0
    %1679 = vmatpush1.msra.mxu0 %v154
    %1680 = vmatprep.subr.mxu0 0.0
    %1681 = vmatpush1.msra.mxu0 %v155
    %1682 = vmatprep.subr.mxu0 0.0
    %1683 = vmatpush1.msra.mxu0 %v156
    %1684 = vmatprep.subr.mxu0 0.0
    %1685 = vmatpush1.msra.mxu0 %v157
    %1686 = vmatprep.subr.mxu0 0.0
    %1687 = vmatpush1.msra.mxu0 %v158
    %1688 = vmatprep.mubr.f32.mxu0 %v1111
    %1689 = vmatmul.mubr.f32.gmra.mrb[0].mxu0 %v1109
    %v1690 = vpop.f32.mrb[0].mxu0
    %v1691 = vadd.f32 %v1621, %v1690
    %v1692 = vpop.f32.mrb[0].mxu0
    %1693 = vdwg.mxu0
    %1694 = vmatprep.subr.mxu0 0.0
    %1695 = vmatpush1.msra.mxu0 %v159
    %1696 = vmatprep.subr.mxu0 0.0
    %1697 = vmatpush1.msra.mxu0 %v160
    %1698 = vmatprep.subr.mxu0 0.0
    %1699 = vmatpush1.msra.mxu0 %v161
    %1700 = vmatprep.subr.mxu0 0.0
    %1701 = vmatpush1.msra.mxu0 %v162
    %1702 = vmatprep.subr.mxu0 0.0
    %1703 = vmatpush1.msra.mxu0 %v163
    %1704 = vmatprep.subr.mxu0 0.0
    %1705 = vmatpush1.msra.mxu0 %v164
    %1706 = vmatprep.subr.mxu0 0.0
    %1707 = vmatpush1.msra.mxu0 %v165
    %1708 = vmatprep.subr.mxu0 0.0
    %1709 = vmatpush1.msra.mxu0 %v166
    %1710 = vmatprep.subr.mxu0 0.0
    %1711 = vmatpush1.msra.mxu0 %v167
    %1712 = vmatprep.subr.mxu0 0.0
    %1713 = vmatpush1.msra.mxu0 %v168
    %1714 = vmatprep.subr.mxu0 0.0
    %1715 = vmatpush1.msra.mxu0 %v169
    %1716 = vmatprep.subr.mxu0 0.0
    %1717 = vmatpush1.msra.mxu0 %v170
    %1718 = vmatprep.subr.mxu0 0.0
    %1719 = vmatpush1.msra.mxu0 %v171
    %1720 = vmatprep.subr.mxu0 0.0
    %1721 = vmatpush1.msra.mxu0 %v172
    %1722 = vmatprep.subr.mxu0 0.0
    %1723 = vmatpush1.msra.mxu0 %v173
    %1724 = vmatprep.subr.mxu0 0.0
    %1725 = vmatpush1.msra.mxu0 %v174
    %1726 = vmatprep.subr.mxu0 0.0
    %1727 = vmatpush1.msra.mxu0 %v175
    %1728 = vmatprep.subr.mxu0 0.0
    %1729 = vmatpush1.msra.mxu0 %v176
    %1730 = vmatprep.subr.mxu0 0.0
    %1731 = vmatpush1.msra.mxu0 %v177
    %1732 = vmatprep.subr.mxu0 0.0
    %1733 = vmatpush1.msra.mxu0 %v178
    %1734 = vmatprep.subr.mxu0 0.0
    %1735 = vmatpush1.msra.mxu0 %v179
    %1736 = vmatprep.subr.mxu0 0.0
    %1737 = vmatpush1.msra.mxu0 %v180
    %1738 = vmatprep.subr.mxu0 0.0
    %1739 = vmatpush1.msra.mxu0 %v181
    %1740 = vmatprep.subr.mxu0 0.0
    %1741 = vmatpush1.msra.mxu0 %v182
    %1742 = vmatprep.subr.mxu0 0.0
    %1743 = vmatpush1.msra.mxu0 %v183
    %1744 = vmatprep.subr.mxu0 0.0
    %1745 = vmatpush1.msra.mxu0 %v184
    %1746 = vmatprep.subr.mxu0 0.0
    %1747 = vmatpush1.msra.mxu0 %v185
    %1748 = vmatprep.subr.mxu0 0.0
    %1749 = vmatpush1.msra.mxu0 %v186
    %1750 = vmatprep.subr.mxu0 0.0
    %1751 = vmatpush1.msra.mxu0 %v187
    %1752 = vmatprep.subr.mxu0 0.0
    %1753 = vmatpush1.msra.mxu0 %v188
    %1754 = vmatprep.subr.mxu0 0.0
    %1755 = vmatpush1.msra.mxu0 %v189
    %1756 = vmatprep.subr.mxu0 0.0
    %1757 = vmatpush1.msra.mxu0 %v190
    %1758 = vmatprep.mubr.f32.mxu0 %v1127
    %1759 = vmatmul.mubr.f32.gmra.mrb[0].mxu0 %v1119
    %v1760 = vpop.f32.mrb[0].mxu0
    %v1761 = vadd.f32 %v1691, %v1760
    %v1762 = vpop.f32.mrb[0].mxu0
    %1763 = vdwg.mxu0
    %1764 = vmatprep.subr.mxu0 0.0
    %1765 = vmatpush1.msra.mxu0 %v191
    %1766 = vmatprep.subr.mxu0 0.0
    %1767 = vmatpush1.msra.mxu0 %v192
    %1768 = vmatprep.subr.mxu0 0.0
    %1769 = vmatpush1.msra.mxu0 %v193
    %1770 = vmatprep.subr.mxu0 0.0
    %1771 = vmatpush1.msra.mxu0 %v194
    %1772 = vmatprep.subr.mxu0 0.0
    %1773 = vmatpush1.msra.mxu0 %v195
    %1774 = vmatprep.subr.mxu0 0.0
    %1775 = vmatpush1.msra.mxu0 %v196
    %1776 = vmatprep.subr.mxu0 0.0
    %1777 = vmatpush1.msra.mxu0 %v197
    %1778 = vmatprep.subr.mxu0 0.0
    %1779 = vmatpush1.msra.mxu0 %v198
    %1780 = vmatprep.subr.mxu0 0.0
    %1781 = vmatpush1.msra.mxu0 %v199
    %1782 = vmatprep.subr.mxu0 0.0
    %1783 = vmatpush1.msra.mxu0 %v200
    %1784 = vmatprep.subr.mxu0 0.0
    %1785 = vmatpush1.msra.mxu0 %v201
    %1786 = vmatprep.subr.mxu0 0.0
    %1787 = vmatpush1.msra.mxu0 %v202
    %1788 = vmatprep.subr.mxu0 0.0
    %1789 = vmatpush1.msra.mxu0 %v203
    %1790 = vmatprep.subr.mxu0 0.0
    %1791 = vmatpush1.msra.mxu0 %v204
    %1792 = vmatprep.subr.mxu0 0.0
    %1793 = vmatpush1.msra.mxu0 %v205
    %1794 = vmatprep.subr.mxu0 0.0
    %1795 = vmatpush1.msra.mxu0 %v206
    %1796 = vmatprep.subr.mxu0 0.0
    %1797 = vmatpush1.msra.mxu0 %v207
    %1798 = vmatprep.subr.mxu0 0.0
    %1799 = vmatpush1.msra.mxu0 %v208
    %1800 = vmatprep.subr.mxu0 0.0
    %1801 = vmatpush1.msra.mxu0 %v209
    %1802 = vmatprep.subr.mxu0 0.0
    %1803 = vmatpush1.msra.mxu0 %v210
    %1804 = vmatprep.subr.mxu0 0.0
    %1805 = vmatpush1.msra.mxu0 %v211
    %1806 = vmatprep.subr.mxu0 0.0
    %1807 = vmatpush1.msra.mxu0 %v212
    %1808 = vmatprep.subr.mxu0 0.0
    %1809 = vmatpush1.msra.mxu0 %v213
    %1810 = vmatprep.subr.mxu0 0.0
    %1811 = vmatpush1.msra.mxu0 %v214
    %1812 = vmatprep.subr.mxu0 0.0
    %1813 = vmatpush1.msra.mxu0 %v215
    %1814 = vmatprep.subr.mxu0 0.0
    %1815 = vmatpush1.msra.mxu0 %v216
    %1816 = vmatprep.subr.mxu0 0.0
    %1817 = vmatpush1.msra.mxu0 %v217
    %1818 = vmatprep.subr.mxu0 0.0
    %1819 = vmatpush1.msra.mxu0 %v218
    %1820 = vmatprep.subr.mxu0 0.0
    %1821 = vmatpush1.msra.mxu0 %v219
    %1822 = vmatprep.subr.mxu0 0.0
    %1823 = vmatpush1.msra.mxu0 %v220
    %1824 = vmatprep.subr.mxu0 0.0
    %1825 = vmatpush1.msra.mxu0 %v221
    %1826 = vmatprep.subr.mxu0 0.0
    %1827 = vmatpush1.msra.mxu0 %v222
    %1828 = vmatprep.mubr.f32.mxu0 %v1128
    %1829 = vmatmul.mubr.f32.gmra.mrb[0].mxu0 %v1126
    %v1830 = vpop.f32.mrb[0].mxu0
    %v1831 = vadd.f32 %v1761, %v1830
    %v1832 = vpop.f32.mrb[0].mxu0
    %1833 = vdwg.mxu0
    %1834 = vmatprep.subr.mxu0 0.0
    %1835 = vmatpush1.msra.mxu0 %v223
    %1836 = vmatprep.subr.mxu0 0.0
    %1837 = vmatpush1.msra.mxu0 %v224
    %1838 = vmatprep.subr.mxu0 0.0
    %1839 = vmatpush1.msra.mxu0 %v225
    %1840 = vmatprep.subr.mxu0 0.0
    %1841 = vmatpush1.msra.mxu0 %v226
    %1842 = vmatprep.subr.mxu0 0.0
    %1843 = vmatpush1.msra.mxu0 %v227
    %1844 = vmatprep.subr.mxu0 0.0
    %1845 = vmatpush1.msra.mxu0 %v228
    %1846 = vmatprep.subr.mxu0 0.0
    %1847 = vmatpush1.msra.mxu0 %v229
    %1848 = vmatprep.subr.mxu0 0.0
    %1849 = vmatpush1.msra.mxu0 %v230
    %1850 = vmatprep.subr.mxu0 0.0
    %1851 = vmatpush1.msra.mxu0 %v231
    %1852 = vmatprep.subr.mxu0 0.0
    %1853 = vmatpush1.msra.mxu0 %v232
    %1854 = vmatprep.subr.mxu0 0.0
    %1855 = vmatpush1.msra.mxu0 %v233
    %1856 = vmatprep.subr.mxu0 0.0
    %1857 = vmatpush1.msra.mxu0 %v234
    %1858 = vmatprep.subr.mxu0 0.0
    %1859 = vmatpush1.msra.mxu0 %v235
    %1860 = vmatprep.subr.mxu0 0.0
    %1861 = vmatpush1.msra.mxu0 %v236
    %1862 = vmatprep.subr.mxu0 0.0
    %1863 = vmatpush1.msra.mxu0 %v237
    %1864 = vmatprep.subr.mxu0 0.0
    %1865 = vmatpush1.msra.mxu0 %v238
    %1866 = vmatprep.subr.mxu0 0.0
    %1867 = vmatpush1.msra.mxu0 %v239
    %1868 = vmatprep.subr.mxu0 0.0
    %1869 = vmatpush1.msra.mxu0 %v240
    %1870 = vmatprep.subr.mxu0 0.0
    %1871 = vmatpush1.msra.mxu0 %v241
    %1872 = vmatprep.subr.mxu0 0.0
    %1873 = vmatpush1.msra.mxu0 %v242
    %1874 = vmatprep.subr.mxu0 0.0
    %1875 = vmatpush1.msra.mxu0 %v243
    %1876 = vmatprep.subr.mxu0 0.0
    %1877 = vmatpush1.msra.mxu0 %v244
    %1878 = vmatprep.subr.mxu0 0.0
    %1879 = vmatpush1.msra.mxu0 %v245
    %1880 = vmatprep.subr.mxu0 0.0
    %1881 = vmatpush1.msra.mxu0 %v246
    %1882 = vmatprep.subr.mxu0 0.0
    %1883 = vmatpush1.msra.mxu0 %v247
    %1884 = vmatprep.subr.mxu0 0.0
    %1885 = vmatpush1.msra.mxu0 %v248
    %1886 = vmatprep.subr.mxu0 0.0
    %1887 = vmatpush1.msra.mxu0 %v249
    %1888 = vmatprep.subr.mxu0 0.0
    %1889 = vmatpush1.msra.mxu0 %v250
    %1890 = vmatprep.subr.mxu0 0.0
    %1891 = vmatpush1.msra.mxu0 %v251
    %1892 = vmatprep.subr.mxu0 0.0
    %1893 = vmatpush1.msra.mxu0 %v252
    %1894 = vmatprep.subr.mxu0 0.0
    %1895 = vmatpush1.msra.mxu0 %v253
    %1896 = vmatprep.subr.mxu0 0.0
    %1897 = vmatpush1.msra.mxu0 %v254
    %1898 = vmatprep.mubr.f32.mxu0 %v1144
    %1899 = vmatmul.mubr.f32.gmra.mrb[0].mxu0 %v1136
    %v1900 = vpop.f32.mrb[0].mxu0
    %v1901 = vadd.f32 %v1831, %v1900
    %v1902 = vpop.f32.mrb[0].mxu0
    %1903 = vdwg.mxu0
    %1904 = vmatprep.subr.mxu0 0.0
    %1905 = vmatpush1.msra.mxu0 %v255
    %1906 = vmatprep.subr.mxu0 0.0
    %1907 = vmatpush1.msra.mxu0 %v256
    %1908 = vmatprep.subr.mxu0 0.0
    %1909 = vmatpush1.msra.mxu0 %v257
    %1910 = vmatprep.subr.mxu0 0.0
    %1911 = vmatpush1.msra.mxu0 %v258
    %1912 = vmatprep.subr.mxu0 0.0
    %1913 = vmatpush1.msra.mxu0 %v259
    %1914 = vmatprep.subr.mxu0 0.0
    %1915 = vmatpush1.msra.mxu0 %v260
    %1916 = vmatprep.subr.mxu0 0.0
    %1917 = vmatpush1.msra.mxu0 %v261
    %1918 = vmatprep.subr.mxu0 0.0
    %1919 = vmatpush1.msra.mxu0 %v262
    %1920 = vmatprep.subr.mxu0 0.0
    %1921 = vmatpush1.msra.mxu0 %v263
    %1922 = vmatprep.subr.mxu0 0.0
    %1923 = vmatpush1.msra.mxu0 %v264
    %1924 = vmatprep.subr.mxu0 0.0
    %1925 = vmatpush1.msra.mxu0 %v265
    %1926 = vmatprep.subr.mxu0 0.0
    %1927 = vmatpush1.msra.mxu0 %v266
    %1928 = vmatprep.subr.mxu0 0.0
    %1929 = vmatpush1.msra.mxu0 %v267
    %1930 = vmatprep.subr.mxu0 0.0
    %1931 = vmatpush1.msra.mxu0 %v268
    %1932 = vmatprep.subr.mxu0 0.0
    %1933 = vmatpush1.msra.mxu0 %v269
    %1934 = vmatprep.subr.mxu0 0.0
    %1935 = vmatpush1.msra.mxu0 %v270
    %1936 = vmatprep.subr.mxu0 0.0
    %1937 = vmatpush1.msra.mxu0 %v271
    %1938 = vmatprep.subr.mxu0 0.0
    %1939 = vmatpush1.msra.mxu0 %v272
    %1940 = vmatprep.subr.mxu0 0.0
    %1941 = vmatpush1.msra.mxu0 %v273
    %1942 = vmatprep.subr.mxu0 0.0
    %1943 = vmatpush1.msra.mxu0 %v274
    %1944 = vmatprep.subr.mxu0 0.0
    %1945 = vmatpush1.msra.mxu0 %v275
    %1946 = vmatprep.subr.mxu0 0.0
    %1947 = vmatpush1.msra.mxu0 %v276
    %1948 = vmatprep.subr.mxu0 0.0
    %1949 = vmatpush1.msra.mxu0 %v277
    %1950 = vmatprep.subr.mxu0 0.0
    %1951 = vmatpush1.msra.mxu0 %v278
    %1952 = vmatprep.subr.mxu0 0.0
    %1953 = vmatpush1.msra.mxu0 %v279
    %1954 = vmatprep.subr.mxu0 0.0
    %1955 = vmatpush1.msra.mxu0 %v280
    %1956 = vmatprep.subr.mxu0 0.0
    %1957 = vmatpush1.msra.mxu0 %v281
    %1958 = vmatprep.subr.mxu0 0.0
    %1959 = vmatpush1.msra.mxu0 %v282
    %1960 = vmatprep.subr.mxu0 0.0
    %1961 = vmatpush1.msra.mxu0 %v283
    %1962 = vmatprep.subr.mxu0 0.0
    %1963 = vmatpush1.msra.mxu0 %v284
    %1964 = vmatprep.subr.mxu0 0.0
    %1965 = vmatpush1.msra.mxu0 %v285
    %1966 = vmatprep.subr.mxu0 0.0
    %1967 = vmatpush1.msra.mxu0 %v286
    %1968 = vmatprep.mubr.f32.mxu0 %v1145
    %1969 = vmatmul.mubr.f32.gmra.mrb[0].mxu0 %v1143
    %v1970 = vpop.f32.mrb[0].mxu0
    %v1971 = vadd.f32 %v1901, %v1970
    %v1972 = vpop.f32.mrb[0].mxu0
    %1973 = vdwg.mxu0
    %1974 = vmatprep.subr.mxu0 0.0
    %1975 = vmatpush1.msra.mxu0 %v287
    %1976 = vmatprep.subr.mxu0 0.0
    %1977 = vmatpush1.msra.mxu0 %v288
    %1978 = vmatprep.subr.mxu0 0.0
    %1979 = vmatpush1.msra.mxu0 %v289
    %1980 = vmatprep.subr.mxu0 0.0
    %1981 = vmatpush1.msra.mxu0 %v290
    %1982 = vmatprep.subr.mxu0 0.0
    %1983 = vmatpush1.msra.mxu0 %v291
    %1984 = vmatprep.subr.mxu0 0.0
    %1985 = vmatpush1.msra.mxu0 %v292
    %1986 = vmatprep.subr.mxu0 0.0
    %1987 = vmatpush1.msra.mxu0 %v293
    %1988 = vmatprep.subr.mxu0 0.0
    %1989 = vmatpush1.msra.mxu0 %v294
    %1990 = vmatprep.subr.mxu0 0.0
    %1991 = vmatpush1.msra.mxu0 %v295
    %1992 = vmatprep.subr.mxu0 0.0
    %1993 = vmatpush1.msra.mxu0 %v296
    %1994 = vmatprep.subr.mxu0 0.0
    %1995 = vmatpush1.msra.mxu0 %v297
    %1996 = vmatprep.subr.mxu0 0.0
    %1997 = vmatpush1.msra.mxu0 %v298
    %1998 = vmatprep.subr.mxu0 0.0
    %1999 = vmatpush1.msra.mxu0 %v299
    %2000 = vmatprep.subr.mxu0 0.0
    %2001 = vmatpush1.msra.mxu0 %v300
    %2002 = vmatprep.subr.mxu0 0.0
    %2003 = vmatpush1.msra.mxu0 %v301
    %2004 = vmatprep.subr.mxu0 0.0
    %2005 = vmatpush1.msra.mxu0 %v302
    %2006 = vmatprep.subr.mxu0 0.0
    %2007 = vmatpush1.msra.mxu0 %v303
    %2008 = vmatprep.subr.mxu0 0.0
    %2009 = vmatpush1.msra.mxu0 %v304
    %2010 = vmatprep.subr.mxu0 0.0
    %2011 = vmatpush1.msra.mxu0 %v305
    %2012 = vmatprep.subr.mxu0 0.0
    %2013 = vmatpush1.msra.mxu0 %v306
    %2014 = vmatprep.subr.mxu0 0.0
    %2015 = vmatpush1.msra.mxu0 %v307
    %2016 = vmatprep.subr.mxu0 0.0
    %2017 = vmatpush1.msra.mxu0 %v308
    %2018 = vmatprep.subr.mxu0 0.0
    %2019 = vmatpush1.msra.mxu0 %v309
    %2020 = vmatprep.subr.mxu0 0.0
    %2021 = vmatpush1.msra.mxu0 %v310
    %2022 = vmatprep.subr.mxu0 0.0
    %2023 = vmatpush1.msra.mxu0 %v311
    %2024 = vmatprep.subr.mxu0 0.0
    %2025 = vmatpush1.msra.mxu0 %v312
    %2026 = vmatprep.subr.mxu0 0.0
    %2027 = vmatpush1.msra.mxu0 %v313
    %2028 = vmatprep.subr.mxu0 0.0
    %2029 = vmatpush1.msra.mxu0 %v314
    %2030 = vmatprep.subr.mxu0 0.0
    %2031 = vmatpush1.msra.mxu0 %v315
    %2032 = vmatprep.subr.mxu0 0.0
    %2033 = vmatpush1.msra.mxu0 %v316
    %2034 = vmatprep.subr.mxu0 0.0
    %2035 = vmatpush1.msra.mxu0 %v317
    %2036 = vmatprep.subr.mxu0 0.0
    %2037 = vmatpush1.msra.mxu0 %v318
    %2038 = vmatprep.mubr.f32.mxu0 %v1161
    %2039 = vmatmul.mubr.f32.gmra.mrb[0].mxu0 %v1153
    %v2040 = vpop.f32.mrb[0].mxu0
    %v2041 = vadd.f32 %v1971, %v2040
    %v2042 = vpop.f32.mrb[0].mxu0
    %2043 = vdwg.mxu0
    %2044 = vmatprep.subr.mxu0 0.0
    %2045 = vmatpush1.msra.mxu0 %v319
    %2046 = vmatprep.subr.mxu0 0.0
    %2047 = vmatpush1.msra.mxu0 %v320
    %2048 = vmatprep.subr.mxu0 0.0
    %2049 = vmatpush1.msra.mxu0 %v321
    %2050 = vmatprep.subr.mxu0 0.0
    %2051 = vmatpush1.msra.mxu0 %v322
    %2052 = vmatprep.subr.mxu0 0.0
    %2053 = vmatpush1.msra.mxu0 %v323
    %2054 = vmatprep.subr.mxu0 0.0
    %2055 = vmatpush1.msra.mxu0 %v324
    %2056 = vmatprep.subr.mxu0 0.0
    %2057 = vmatpush1.msra.mxu0 %v325
    %2058 = vmatprep.subr.mxu0 0.0
    %2059 = vmatpush1.msra.mxu0 %v326
    %2060 = vmatprep.subr.mxu0 0.0
    %2061 = vmatpush1.msra.mxu0 %v327
    %2062 = vmatprep.subr.mxu0 0.0
    %2063 = vmatpush1.msra.mxu0 %v328
    %2064 = vmatprep.subr.mxu0 0.0
    %2065 = vmatpush1.msra.mxu0 %v329
    %2066 = vmatprep.subr.mxu0 0.0
    %2067 = vmatpush1.msra.mxu0 %v330
    %2068 = vmatprep.subr.mxu0 0.0
    %2069 = vmatpush1.msra.mxu0 %v331
    %2070 = vmatprep.subr.mxu0 0.0
    %2071 = vmatpush1.msra.mxu0 %v332
    %2072 = vmatprep.subr.mxu0 0.0
    %2073 = vmatpush1.msra.mxu0 %v333
    %2074 = vmatprep.subr.mxu0 0.0
    %2075 = vmatpush1.msra.mxu0 %v334
    %2076 = vmatprep.subr.mxu0 0.0
    %2077 = vmatpush1.msra.mxu0 %v335
    %2078 = vmatprep.subr.mxu0 0.0
    %2079 = vmatpush1.msra.mxu0 %v336
    %2080 = vmatprep.subr.mxu0 0.0
    %2081 = vmatpush1.msra.mxu0 %v337
    %2082 = vmatprep.subr.mxu0 0.0
    %2083 = vmatpush1.msra.mxu0 %v338
    %2084 = vmatprep.subr.mxu0 0.0
    %2085 = vmatpush1.msra.mxu0 %v339
    %2086 = vmatprep.subr.mxu0 0.0
    %2087 = vmatpush1.msra.mxu0 %v340
    %2088 = vmatprep.subr.mxu0 0.0
    %2089 = vmatpush1.msra.mxu0 %v341
    %2090 = vmatprep.subr.mxu0 0.0
    %2091 = vmatpush1.msra.mxu0 %v342
    %2092 = vmatprep.subr.mxu0 0.0
    %2093 = vmatpush1.msra.mxu0 %v343
    %2094 = vmatprep.subr.mxu0 0.0
    %2095 = vmatpush1.msra.mxu0 %v344
    %2096 = vmatprep.subr.mxu0 0.0
    %2097 = vmatpush1.msra.mxu0 %v345
    %2098 = vmatprep.subr.mxu0 0.0
    %2099 = vmatpush1.msra.mxu0 %v346
    %2100 = vmatprep.subr.mxu0 0.0
    %2101 = vmatpush1.msra.mxu0 %v347
    %2102 = vmatprep.subr.mxu0 0.0
    %2103 = vmatpush1.msra.mxu0 %v348
    %2104 = vmatprep.subr.mxu0 0.0
    %2105 = vmatpush1.msra.mxu0 %v349
    %2106 = vmatprep.subr.mxu0 0.0
    %2107 = vmatpush1.msra.mxu0 %v350
    %2108 = vmatprep.mubr.f32.mxu0 %v1162
    %2109 = vmatmul.mubr.f32.gmra.mrb[0].mxu0 %v1160
    %v2110 = vpop.f32.mrb[0].mxu0
    %v2111 = vadd.f32 %v2041, %v2110
    %v2112 = vpop.f32.mrb[0].mxu0
    %2113 = vdwg.mxu0
    %2114 = vmatprep.subr.mxu0 0.0
    %2115 = vmatpush1.msra.mxu0 %v351
    %2116 = vmatprep.subr.mxu0 0.0
    %2117 = vmatpush1.msra.mxu0 %v352
    %2118 = vmatprep.subr.mxu0 0.0
    %2119 = vmatpush1.msra.mxu0 %v353
    %2120 = vmatprep.subr.mxu0 0.0
    %2121 = vmatpush1.msra.mxu0 %v354
    %2122 = vmatprep.subr.mxu0 0.0
    %2123 = vmatpush1.msra.mxu0 %v355
    %2124 = vmatprep.subr.mxu0 0.0
    %2125 = vmatpush1.msra.mxu0 %v356
    %2126 = vmatprep.subr.mxu0 0.0
    %2127 = vmatpush1.msra.mxu0 %v357
    %2128 = vmatprep.subr.mxu0 0.0
    %2129 = vmatpush1.msra.mxu0 %v358
    %2130 = vmatprep.subr.mxu0 0.0
    %2131 = vmatpush1.msra.mxu0 %v359
    %2132 = vmatprep.subr.mxu0 0.0
    %2133 = vmatpush1.msra.mxu0 %v360
    %2134 = vmatprep.subr.mxu0 0.0
    %2135 = vmatpush1.msra.mxu0 %v361
    %2136 = vmatprep.subr.mxu0 0.0
    %2137 = vmatpush1.msra.mxu0 %v362
    %2138 = vmatprep.subr.mxu0 0.0
    %2139 = vmatpush1.msra.mxu0 %v363
    %2140 = vmatprep.subr.mxu0 0.0
    %2141 = vmatpush1.msra.mxu0 %v364
    %2142 = vmatprep.subr.mxu0 0.0
    %2143 = vmatpush1.msra.mxu0 %v365
    %2144 = vmatprep.subr.mxu0 0.0
    %2145 = vmatpush1.msra.mxu0 %v366
    %2146 = vmatprep.subr.mxu0 0.0
    %2147 = vmatpush1.msra.mxu0 %v367
    %2148 = vmatprep.subr.mxu0 0.0
    %2149 = vmatpush1.msra.mxu0 %v368
    %2150 = vmatprep.subr.mxu0 0.0
    %2151 = vmatpush1.msra.mxu0 %v369
    %2152 = vmatprep.subr.mxu0 0.0
    %2153 = vmatpush1.msra.mxu0 %v370
    %2154 = vmatprep.subr.mxu0 0.0
    %2155 = vmatpush1.msra.mxu0 %v371
    %2156 = vmatprep.subr.mxu0 0.0
    %2157 = vmatpush1.msra.mxu0 %v372
    %2158 = vmatprep.subr.mxu0 0.0
    %2159 = vmatpush1.msra.mxu0 %v373
    %2160 = vmatprep.subr.mxu0 0.0
    %2161 = vmatpush1.msra.mxu0 %v374
    %2162 = vmatprep.subr.mxu0 0.0
    %2163 = vmatpush1.msra.mxu0 %v375
    %2164 = vmatprep.subr.mxu0 0.0
    %2165 = vmatpush1.msra.mxu0 %v376
    %2166 = vmatprep.subr.mxu0 0.0
    %2167 = vmatpush1.msra.mxu0 %v377
    %2168 = vmatprep.subr.mxu0 0.0
    %2169 = vmatpush1.msra.mxu0 %v378
    %2170 = vmatprep.subr.mxu0 0.0
    %2171 = vmatpush1.msra.mxu0 %v379
    %2172 = vmatprep.subr.mxu0 0.0
    %2173 = vmatpush1.msra.mxu0 %v380
    %2174 = vmatprep.subr.mxu0 0.0
    %2175 = vmatpush1.msra.mxu0 %v381
    %2176 = vmatprep.subr.mxu0 0.0
    %2177 = vmatpush1.msra.mxu0 %v382
    %2178 = vmatprep.mubr.f32.mxu0 %v1178
    %2179 = vmatmul.mubr.f32.gmra.mrb[0].mxu0 %v1170
    %v2180 = vpop.f32.mrb[0].mxu0
    %v2181 = vadd.f32 %v2111, %v2180
    %v2182 = vpop.f32.mrb[0].mxu0
    %2183 = vdwg.mxu0
    %2184 = vmatprep.subr.mxu0 0.0
    %2185 = vmatpush1.msra.mxu0 %v383
    %2186 = vmatprep.subr.mxu0 0.0
    %2187 = vmatpush1.msra.mxu0 %v384
    %2188 = vmatprep.subr.mxu0 0.0
    %2189 = vmatpush1.msra.mxu0 %v385
    %2190 = vmatprep.subr.mxu0 0.0
    %2191 = vmatpush1.msra.mxu0 %v386
    %2192 = vmatprep.subr.mxu0 0.0
    %2193 = vmatpush1.msra.mxu0 %v387
    %2194 = vmatprep.subr.mxu0 0.0
    %2195 = vmatpush1.msra.mxu0 %v388
    %2196 = vmatprep.subr.mxu0 0.0
    %2197 = vmatpush1.msra.mxu0 %v389
    %2198 = vmatprep.subr.mxu0 0.0
    %2199 = vmatpush1.msra.mxu0 %v390
    %2200 = vmatprep.subr.mxu0 0.0
    %2201 = vmatpush1.msra.mxu0 %v391
    %2202 = vmatprep.subr.mxu0 0.0
    %2203 = vmatpush1.msra.mxu0 %v392
    %2204 = vmatprep.subr.mxu0 0.0
    %2205 = vmatpush1.msra.mxu0 %v393
    %2206 = vmatprep.subr.mxu0 0.0
    %2207 = vmatpush1.msra.mxu0 %v394
    %2208 = vmatprep.subr.mxu0 0.0
    %2209 = vmatpush1.msra.mxu0 %v395
    %2210 = vmatprep.subr.mxu0 0.0
    %2211 = vmatpush1.msra.mxu0 %v396
    %2212 = vmatprep.subr.mxu0 0.0
    %2213 = vmatpush1.msra.mxu0 %v397
    %2214 = vmatprep.subr.mxu0 0.0
    %2215 = vmatpush1.msra.mxu0 %v398
    %2216 = vmatprep.subr.mxu0 0.0
    %2217 = vmatpush1.msra.mxu0 %v399
    %2218 = vmatprep.subr.mxu0 0.0
    %2219 = vmatpush1.msra.mxu0 %v400
    %2220 = vmatprep.subr.mxu0 0.0
    %2221 = vmatpush1.msra.mxu0 %v401
    %2222 = vmatprep.subr.mxu0 0.0
    %2223 = vmatpush1.msra.mxu0 %v402
    %2224 = vmatprep.subr.mxu0 0.0
    %2225 = vmatpush1.msra.mxu0 %v403
    %2226 = vmatprep.subr.mxu0 0.0
    %2227 = vmatpush1.msra.mxu0 %v404
    %2228 = vmatprep.subr.mxu0 0.0
    %2229 = vmatpush1.msra.mxu0 %v405
    %2230 = vmatprep.subr.mxu0 0.0
    %2231 = vmatpush1.msra.mxu0 %v406
    %2232 = vmatprep.subr.mxu0 0.0
    %2233 = vmatpush1.msra.mxu0 %v407
    %2234 = vmatprep.subr.mxu0 0.0
    %2235 = vmatpush1.msra.mxu0 %v408
    %2236 = vmatprep.subr.mxu0 0.0
    %2237 = vmatpush1.msra.mxu0 %v409
    %2238 = vmatprep.subr.mxu0 0.0
    %2239 = vmatpush1.msra.mxu0 %v410
    %2240 = vmatprep.subr.mxu0 0.0
    %2241 = vmatpush1.msra.mxu0 %v411
    %2242 = vmatprep.subr.mxu0 0.0
    %2243 = vmatpush1.msra.mxu0 %v412
    %2244 = vmatprep.subr.mxu0 0.0
    %2245 = vmatpush1.msra.mxu0 %v413
    %2246 = vmatprep.subr.mxu0 0.0
    %2247 = vmatpush1.msra.mxu0 %v414
    %2248 = vmatprep.mubr.f32.mxu0 %v1179
    %2249 = vmatmul.mubr.f32.gmra.mrb[0].mxu0 %v1177
    %v2250 = vpop.f32.mrb[0].mxu0
    %v2251 = vadd.f32 %v2181, %v2250
    %v2252 = vpop.f32.mrb[0].mxu0
    %2253 = vdwg.mxu0
    %2254 = vmatprep.subr.mxu0 0.0
    %2255 = vmatpush1.msra.mxu0 %v415
    %2256 = vmatprep.subr.mxu0 0.0
    %2257 = vmatpush1.msra.mxu0 %v416
    %2258 = vmatprep.subr.mxu0 0.0
    %2259 = vmatpush1.msra.mxu0 %v417
    %2260 = vmatprep.subr.mxu0 0.0
    %2261 = vmatpush1.msra.mxu0 %v418
    %2262 = vmatprep.subr.mxu0 0.0
    %2263 = vmatpush1.msra.mxu0 %v419
    %2264 = vmatprep.subr.mxu0 0.0
    %2265 = vmatpush1.msra.mxu0 %v420
    %2266 = vmatprep.subr.mxu0 0.0
    %2267 = vmatpush1.msra.mxu0 %v421
    %2268 = vmatprep.subr.mxu0 0.0
    %2269 = vmatpush1.msra.mxu0 %v422
    %2270 = vmatprep.subr.mxu0 0.0
    %2271 = vmatpush1.msra.mxu0 %v423
    %2272 = vmatprep.subr.mxu0 0.0
    %2273 = vmatpush1.msra.mxu0 %v424
    %2274 = vmatprep.subr.mxu0 0.0
    %2275 = vmatpush1.msra.mxu0 %v425
    %2276 = vmatprep.subr.mxu0 0.0
    %2277 = vmatpush1.msra.mxu0 %v426
    %2278 = vmatprep.subr.mxu0 0.0
    %2279 = vmatpush1.msra.mxu0 %v427
    %2280 = vmatprep.subr.mxu0 0.0
    %2281 = vmatpush1.msra.mxu0 %v428
    %2282 = vmatprep.subr.mxu0 0.0
    %2283 = vmatpush1.msra.mxu0 %v429
    %2284 = vmatprep.subr.mxu0 0.0
    %2285 = vmatpush1.msra.mxu0 %v430
    %2286 = vmatprep.subr.mxu0 0.0
    %2287 = vmatpush1.msra.mxu0 %v431
    %2288 = vmatprep.subr.mxu0 0.0
    %2289 = vmatpush1.msra.mxu0 %v432
    %2290 = vmatprep.subr.mxu0 0.0
    %2291 = vmatpush1.msra.mxu0 %v433
    %2292 = vmatprep.subr.mxu0 0.0
    %2293 = vmatpush1.msra.mxu0 %v434
    %2294 = vmatprep.subr.mxu0 0.0
    %2295 = vmatpush1.msra.mxu0 %v435
    %2296 = vmatprep.subr.mxu0 0.0
    %2297 = vmatpush1.msra.mxu0 %v436
    %2298 = vmatprep.subr.mxu0 0.0
    %2299 = vmatpush1.msra.mxu0 %v437
    %2300 = vmatprep.subr.mxu0 0.0
    %2301 = vmatpush1.msra.mxu0 %v438
    %2302 = vmatprep.subr.mxu0 0.0
    %2303 = vmatpush1.msra.mxu0 %v439
    %2304 = vmatprep.subr.mxu0 0.0
    %2305 = vmatpush1.msra.mxu0 %v440
    %2306 = vmatprep.subr.mxu0 0.0
    %2307 = vmatpush1.msra.mxu0 %v441
    %2308 = vmatprep.subr.mxu0 0.0
    %2309 = vmatpush1.msra.mxu0 %v442
    %2310 = vmatprep.subr.mxu0 0.0
    %2311 = vmatpush1.msra.mxu0 %v443
    %2312 = vmatprep.subr.mxu0 0.0
    %2313 = vmatpush1.msra.mxu0 %v444
    %2314 = vmatprep.subr.mxu0 0.0
    %2315 = vmatpush1.msra.mxu0 %v445
    %2316 = vmatprep.subr.mxu0 0.0
    %2317 = vmatpush1.msra.mxu0 %v446
    %2318 = vmatprep.mubr.f32.mxu0 %v1195
    %2319 = vmatmul.mubr.f32.gmra.mrb[0].mxu0 %v1187
    %v2320 = vpop.f32.mrb[0].mxu0
    %v2321 = vadd.f32 %v2251, %v2320
    %v2322 = vpop.f32.mrb[0].mxu0
    %2323 = vdwg.mxu0
    %2324 = vmatprep.subr.mxu0 0.0
    %2325 = vmatpush1.msra.mxu0 %v447
    %2326 = vmatprep.subr.mxu0 0.0
    %2327 = vmatpush1.msra.mxu0 %v448
    %2328 = vmatprep.subr.mxu0 0.0
    %2329 = vmatpush1.msra.mxu0 %v449
    %2330 = vmatprep.subr.mxu0 0.0
    %2331 = vmatpush1.msra.mxu0 %v450
    %2332 = vmatprep.subr.mxu0 0.0
    %2333 = vmatpush1.msra.mxu0 %v451
    %2334 = vmatprep.subr.mxu0 0.0
    %2335 = vmatpush1.msra.mxu0 %v452
    %2336 = vmatprep.subr.mxu0 0.0
    %2337 = vmatpush1.msra.mxu0 %v453
    %2338 = vmatprep.subr.mxu0 0.0
    %2339 = vmatpush1.msra.mxu0 %v454
    %2340 = vmatprep.subr.mxu0 0.0
    %2341 = vmatpush1.msra.mxu0 %v455
    %2342 = vmatprep.subr.mxu0 0.0
    %2343 = vmatpush1.msra.mxu0 %v456
    %2344 = vmatprep.subr.mxu0 0.0
    %2345 = vmatpush1.msra.mxu0 %v457
    %2346 = vmatprep.subr.mxu0 0.0
    %2347 = vmatpush1.msra.mxu0 %v458
    %2348 = vmatprep.subr.mxu0 0.0
    %2349 = vmatpush1.msra.mxu0 %v459
    %2350 = vmatprep.subr.mxu0 0.0
    %2351 = vmatpush1.msra.mxu0 %v460
    %2352 = vmatprep.subr.mxu0 0.0
    %2353 = vmatpush1.msra.mxu0 %v461
    %2354 = vmatprep.subr.mxu0 0.0
    %2355 = vmatpush1.msra.mxu0 %v462
    %2356 = vmatprep.subr.mxu0 0.0
    %2357 = vmatpush1.msra.mxu0 %v463
    %2358 = vmatprep.subr.mxu0 0.0
    %2359 = vmatpush1.msra.mxu0 %v464
    %2360 = vmatprep.subr.mxu0 0.0
    %2361 = vmatpush1.msra.mxu0 %v465
    %2362 = vmatprep.subr.mxu0 0.0
    %2363 = vmatpush1.msra.mxu0 %v466
    %2364 = vmatprep.subr.mxu0 0.0
    %2365 = vmatpush1.msra.mxu0 %v467
    %2366 = vmatprep.subr.mxu0 0.0
    %2367 = vmatpush1.msra.mxu0 %v468
    %2368 = vmatprep.subr.mxu0 0.0
    %2369 = vmatpush1.msra.mxu0 %v469
    %2370 = vmatprep.subr.mxu0 0.0
    %2371 = vmatpush1.msra.mxu0 %v470
    %2372 = vmatprep.subr.mxu0 0.0
    %2373 = vmatpush1.msra.mxu0 %v471
    %2374 = vmatprep.subr.mxu0 0.0
    %2375 = vmatpush1.msra.mxu0 %v472
    %2376 = vmatprep.subr.mxu0 0.0
    %2377 = vmatpush1.msra.mxu0 %v473
    %2378 = vmatprep.subr.mxu0 0.0
    %2379 = vmatpush1.msra.mxu0 %v474
    %2380 = vmatprep.subr.mxu0 0.0
    %2381 = vmatpush1.msra.mxu0 %v475
    %2382 = vmatprep.subr.mxu0 0.0
    %2383 = vmatpush1.msra.mxu0 %v476
    %2384 = vmatprep.subr.mxu0 0.0
    %2385 = vmatpush1.msra.mxu0 %v477
    %2386 = vmatprep.subr.mxu0 0.0
    %2387 = vmatpush1.msra.mxu0 %v478
    %2388 = vmatprep.mubr.f32.mxu0 %v1196
    %2389 = vmatmul.mubr.f32.gmra.mrb[0].mxu0 %v1194
    %v2390 = vpop.f32.mrb[0].mxu0
    %v2391 = vadd.f32 %v2321, %v2390
    %v2392 = vpop.f32.mrb[0].mxu0
    %2393 = vdwg.mxu0
    %2394 = vmatprep.subr.mxu0 0.0
    %2395 = vmatpush1.msra.mxu0 %v479
    %2396 = vmatprep.subr.mxu0 0.0
    %2397 = vmatpush1.msra.mxu0 %v480
    %2398 = vmatprep.subr.mxu0 0.0
    %2399 = vmatpush1.msra.mxu0 %v481
    %2400 = vmatprep.subr.mxu0 0.0
    %2401 = vmatpush1.msra.mxu0 %v482
    %2402 = vmatprep.subr.mxu0 0.0
    %2403 = vmatpush1.msra.mxu0 %v483
    %2404 = vmatprep.subr.mxu0 0.0
    %2405 = vmatpush1.msra.mxu0 %v484
    %2406 = vmatprep.subr.mxu0 0.0
    %2407 = vmatpush1.msra.mxu0 %v485
    %2408 = vmatprep.subr.mxu0 0.0
    %2409 = vmatpush1.msra.mxu0 %v486
    %2410 = vmatprep.subr.mxu0 0.0
    %2411 = vmatpush1.msra.mxu0 %v487
    %2412 = vmatprep.subr.mxu0 0.0
    %2413 = vmatpush1.msra.mxu0 %v488
    %2414 = vmatprep.subr.mxu0 0.0
    %2415 = vmatpush1.msra.mxu0 %v489
    %2416 = vmatprep.subr.mxu0 0.0
    %2417 = vmatpush1.msra.mxu0 %v490
    %2418 = vmatprep.subr.mxu0 0.0
    %2419 = vmatpush1.msra.mxu0 %v491
    %2420 = vmatprep.subr.mxu0 0.0
    %2421 = vmatpush1.msra.mxu0 %v492
    %2422 = vmatprep.subr.mxu0 0.0
    %2423 = vmatpush1.msra.mxu0 %v493
    %2424 = vmatprep.subr.mxu0 0.0
    %2425 = vmatpush1.msra.mxu0 %v494
    %2426 = vmatprep.subr.mxu0 0.0
    %2427 = vmatpush1.msra.mxu0 %v495
    %2428 = vmatprep.subr.mxu0 0.0
    %2429 = vmatpush1.msra.mxu0 %v496
    %2430 = vmatprep.subr.mxu0 0.0
    %2431 = vmatpush1.msra.mxu0 %v497
    %2432 = vmatprep.subr.mxu0 0.0
    %2433 = vmatpush1.msra.mxu0 %v498
    %2434 = vmatprep.subr.mxu0 0.0
    %2435 = vmatpush1.msra.mxu0 %v499
    %2436 = vmatprep.subr.mxu0 0.0
    %2437 = vmatpush1.msra.mxu0 %v500
    %2438 = vmatprep.subr.mxu0 0.0
    %2439 = vmatpush1.msra.mxu0 %v501
    %2440 = vmatprep.subr.mxu0 0.0
    %2441 = vmatpush1.msra.mxu0 %v502
    %2442 = vmatprep.subr.mxu0 0.0
    %2443 = vmatpush1.msra.mxu0 %v503
    %2444 = vmatprep.subr.mxu0 0.0
    %2445 = vmatpush1.msra.mxu0 %v504
    %2446 = vmatprep.subr.mxu0 0.0
    %2447 = vmatpush1.msra.mxu0 %v505
    %2448 = vmatprep.subr.mxu0 0.0
    %2449 = vmatpush1.msra.mxu0 %v506
    %2450 = vmatprep.subr.mxu0 0.0
    %2451 = vmatpush1.msra.mxu0 %v507
    %2452 = vmatprep.subr.mxu0 0.0
    %2453 = vmatpush1.msra.mxu0 %v508
    %2454 = vmatprep.subr.mxu0 0.0
    %2455 = vmatpush1.msra.mxu0 %v509
    %2456 = vmatprep.subr.mxu0 0.0
    %2457 = vmatpush1.msra.mxu0 %v510
    %2458 = vmatprep.mubr.f32.mxu0 %v1212
    %2459 = vmatmul.mubr.f32.gmra.mrb[0].mxu0 %v1204
    %v2460 = vpop.f32.mrb[0].mxu0
    %v2461 = vadd.f32 %v2391, %v2460
    %v2462 = vpop.f32.mrb[0].mxu0
    %2463 = vdwg.mxu0
    %2464 = vmatprep.subr.mxu0 0.0
    %2465 = vmatpush1.msra.mxu0 %v511
    %2466 = vmatprep.subr.mxu0 0.0
    %2467 = vmatpush1.msra.mxu0 %v512
    %2468 = vmatprep.subr.mxu0 0.0
    %2469 = vmatpush1.msra.mxu0 %v513
    %2470 = vmatprep.subr.mxu0 0.0
    %2471 = vmatpush1.msra.mxu0 %v514
    %2472 = vmatprep.subr.mxu0 0.0
    %2473 = vmatpush1.msra.mxu0 %v515
    %2474 = vmatprep.subr.mxu0 0.0
    %2475 = vmatpush1.msra.mxu0 %v516
    %2476 = vmatprep.subr.mxu0 0.0
    %2477 = vmatpush1.msra.mxu0 %v517
    %2478 = vmatprep.subr.mxu0 0.0
    %2479 = vmatpush1.msra.mxu0 %v518
    %2480 = vmatprep.subr.mxu0 0.0
    %2481 = vmatpush1.msra.mxu0 %v519
    %2482 = vmatprep.subr.mxu0 0.0
    %2483 = vmatpush1.msra.mxu0 %v520
    %2484 = vmatprep.subr.mxu0 0.0
    %2485 = vmatpush1.msra.mxu0 %v521
    %2486 = vmatprep.subr.mxu0 0.0
    %2487 = vmatpush1.msra.mxu0 %v522
    %2488 = vmatprep.subr.mxu0 0.0
    %2489 = vmatpush1.msra.mxu0 %v523
    %2490 = vmatprep.subr.mxu0 0.0
    %2491 = vmatpush1.msra.mxu0 %v524
    %2492 = vmatprep.subr.mxu0 0.0
    %2493 = vmatpush1.msra.mxu0 %v525
    %2494 = vmatprep.subr.mxu0 0.0
    %2495 = vmatpush1.msra.mxu0 %v526
    %2496 = vmatprep.subr.mxu0 0.0
    %2497 = vmatpush1.msra.mxu0 %v527
    %2498 = vmatprep.subr.mxu0 0.0
    %2499 = vmatpush1.msra.mxu0 %v528
    %2500 = vmatprep.subr.mxu0 0.0
    %2501 = vmatpush1.msra.mxu0 %v529
    %2502 = vmatprep.subr.mxu0 0.0
    %2503 = vmatpush1.msra.mxu0 %v530
    %2504 = vmatprep.subr.mxu0 0.0
    %2505 = vmatpush1.msra.mxu0 %v531
    %2506 = vmatprep.subr.mxu0 0.0
    %2507 = vmatpush1.msra.mxu0 %v532
    %2508 = vmatprep.subr.mxu0 0.0
    %2509 = vmatpush1.msra.mxu0 %v533
    %2510 = vmatprep.subr.mxu0 0.0
    %2511 = vmatpush1.msra.mxu0 %v534
    %2512 = vmatprep.subr.mxu0 0.0
    %2513 = vmatpush1.msra.mxu0 %v535
    %2514 = vmatprep.subr.mxu0 0.0
    %2515 = vmatpush1.msra.mxu0 %v536
    %2516 = vmatprep.subr.mxu0 0.0
    %2517 = vmatpush1.msra.mxu0 %v537
    %2518 = vmatprep.subr.mxu0 0.0
    %2519 = vmatpush1.msra.mxu0 %v538
    %2520 = vmatprep.subr.mxu0 0.0
    %2521 = vmatpush1.msra.mxu0 %v539
    %2522 = vmatprep.subr.mxu0 0.0
    %2523 = vmatpush1.msra.mxu0 %v540
    %2524 = vmatprep.subr.mxu0 0.0
    %2525 = vmatpush1.msra.mxu0 %v541
    %2526 = vmatprep.subr.mxu0 0.0
    %2527 = vmatpush1.msra.mxu0 %v542
    %2528 = vmatprep.mubr.f32.mxu0 %v1213
    %2529 = vmatmul.mubr.f32.gmra.mrb[0].mxu0 %v1211
    %v2530 = vpop.f32.mrb[0].mxu0
    %v2531 = vadd.f32 %v2461, %v2530
    %v2532 = vpop.f32.mrb[0].mxu0
    %2533 = vdwg.mxu0
    %2534 = vmatprep.subr.mxu0 0.0
    %2535 = vmatpush1.msra.mxu0 %v543
    %2536 = vmatprep.subr.mxu0 0.0
    %2537 = vmatpush1.msra.mxu0 %v544
    %2538 = vmatprep.subr.mxu0 0.0
    %2539 = vmatpush1.msra.mxu0 %v545
    %2540 = vmatprep.subr.mxu0 0.0
    %2541 = vmatpush1.msra.mxu0 %v546
    %2542 = vmatprep.subr.mxu0 0.0
    %2543 = vmatpush1.msra.mxu0 %v547
    %2544 = vmatprep.subr.mxu0 0.0
    %2545 = vmatpush1.msra.mxu0 %v548
    %2546 = vmatprep.subr.mxu0 0.0
    %2547 = vmatpush1.msra.mxu0 %v549
    %2548 = vmatprep.subr.mxu0 0.0
    %2549 = vmatpush1.msra.mxu0 %v550
    %2550 = vmatprep.subr.mxu0 0.0
    %2551 = vmatpush1.msra.mxu0 %v551
    %2552 = vmatprep.subr.mxu0 0.0
    %2553 = vmatpush1.msra.mxu0 %v552
    %2554 = vmatprep.subr.mxu0 0.0
    %2555 = vmatpush1.msra.mxu0 %v553
    %2556 = vmatprep.subr.mxu0 0.0
    %2557 = vmatpush1.msra.mxu0 %v554
    %2558 = vmatprep.subr.mxu0 0.0
    %2559 = vmatpush1.msra.mxu0 %v555
    %2560 = vmatprep.subr.mxu0 0.0
    %2561 = vmatpush1.msra.mxu0 %v556
    %2562 = vmatprep.subr.mxu0 0.0
    %2563 = vmatpush1.msra.mxu0 %v557
    %2564 = vmatprep.subr.mxu0 0.0
    %2565 = vmatpush1.msra.mxu0 %v558
    %2566 = vmatprep.subr.mxu0 0.0
    %2567 = vmatpush1.msra.mxu0 %v559
    %2568 = vmatprep.subr.mxu0 0.0
    %2569 = vmatpush1.msra.mxu0 %v560
    %2570 = vmatprep.subr.mxu0 0.0
    %2571 = vmatpush1.msra.mxu0 %v561
    %2572 = vmatprep.subr.mxu0 0.0
    %2573 = vmatpush1.msra.mxu0 %v562
    %2574 = vmatprep.subr.mxu0 0.0
    %2575 = vmatpush1.msra.mxu0 %v563
    %2576 = vmatprep.subr.mxu0 0.0
    %2577 = vmatpush1.msra.mxu0 %v564
    %2578 = vmatprep.subr.mxu0 0.0
    %2579 = vmatpush1.msra.mxu0 %v565
    %2580 = vmatprep.subr.mxu0 0.0
    %2581 = vmatpush1.msra.mxu0 %v566
    %2582 = vmatprep.subr.mxu0 0.0
    %2583 = vmatpush1.msra.mxu0 %v567
    %2584 = vmatprep.subr.mxu0 0.0
    %2585 = vmatpush1.msra.mxu0 %v568
    %2586 = vmatprep.subr.mxu0 0.0
    %2587 = vmatpush1.msra.mxu0 %v569
    %2588 = vmatprep.subr.mxu0 0.0
    %2589 = vmatpush1.msra.mxu0 %v570
    %2590 = vmatprep.subr.mxu0 0.0
    %2591 = vmatpush1.msra.mxu0 %v571
    %2592 = vmatprep.subr.mxu0 0.0
    %2593 = vmatpush1.msra.mxu0 %v572
    %2594 = vmatprep.subr.mxu0 0.0
    %2595 = vmatpush1.msra.mxu0 %v573
    %2596 = vmatprep.subr.mxu0 0.0
    %2597 = vmatpush1.msra.mxu0 %v574
    %2598 = vmatprep.mubr.f32.mxu0 %v1229
    %2599 = vmatmul.mubr.f32.gmra.mrb[0].mxu0 %v1221
    %v2600 = vpop.f32.mrb[0].mxu0
    %v2601 = vadd.f32 %v2531, %v2600
    %v2602 = vpop.f32.mrb[0].mxu0
    %2603 = vdwg.mxu0
    %2604 = vmatprep.subr.mxu0 0.0
    %2605 = vmatpush1.msra.mxu0 %v575
    %2606 = vmatprep.subr.mxu0 0.0
    %2607 = vmatpush1.msra.mxu0 %v576
    %2608 = vmatprep.subr.mxu0 0.0
    %2609 = vmatpush1.msra.mxu0 %v577
    %2610 = vmatprep.subr.mxu0 0.0
    %2611 = vmatpush1.msra.mxu0 %v578
    %2612 = vmatprep.subr.mxu0 0.0
    %2613 = vmatpush1.msra.mxu0 %v579
    %2614 = vmatprep.subr.mxu0 0.0
    %2615 = vmatpush1.msra.mxu0 %v580
    %2616 = vmatprep.subr.mxu0 0.0
    %2617 = vmatpush1.msra.mxu0 %v581
    %2618 = vmatprep.subr.mxu0 0.0
    %2619 = vmatpush1.msra.mxu0 %v582
    %2620 = vmatprep.subr.mxu0 0.0
    %2621 = vmatpush1.msra.mxu0 %v583
    %2622 = vmatprep.subr.mxu0 0.0
    %2623 = vmatpush1.msra.mxu0 %v584
    %2624 = vmatprep.subr.mxu0 0.0
    %2625 = vmatpush1.msra.mxu0 %v585
    %2626 = vmatprep.subr.mxu0 0.0
    %2627 = vmatpush1.msra.mxu0 %v586
    %2628 = vmatprep.subr.mxu0 0.0
    %2629 = vmatpush1.msra.mxu0 %v587
    %2630 = vmatprep.subr.mxu0 0.0
    %2631 = vmatpush1.msra.mxu0 %v588
    %2632 = vmatprep.subr.mxu0 0.0
    %2633 = vmatpush1.msra.mxu0 %v589
    %2634 = vmatprep.subr.mxu0 0.0
    %2635 = vmatpush1.msra.mxu0 %v590
    %2636 = vmatprep.subr.mxu0 0.0
    %2637 = vmatpush1.msra.mxu0 %v591
    %2638 = vmatprep.subr.mxu0 0.0
    %2639 = vmatpush1.msra.mxu0 %v592
    %2640 = vmatprep.subr.mxu0 0.0
    %2641 = vmatpush1.msra.mxu0 %v593
    %2642 = vmatprep.subr.mxu0 0.0
    %2643 = vmatpush1.msra.mxu0 %v594
    %2644 = vmatprep.subr.mxu0 0.0
    %2645 = vmatpush1.msra.mxu0 %v595
    %2646 = vmatprep.subr.mxu0 0.0
    %2647 = vmatpush1.msra.mxu0 %v596
    %2648 = vmatprep.subr.mxu0 0.0
    %2649 = vmatpush1.msra.mxu0 %v597
    %2650 = vmatprep.subr.mxu0 0.0
    %2651 = vmatpush1.msra.mxu0 %v598
    %2652 = vmatprep.subr.mxu0 0.0
    %2653 = vmatpush1.msra.mxu0 %v599
    %2654 = vmatprep.subr.mxu0 0.0
    %2655 = vmatpush1.msra.mxu0 %v600
    %2656 = vmatprep.subr.mxu0 0.0
    %2657 = vmatpush1.msra.mxu0 %v601
    %2658 = vmatprep.subr.mxu0 0.0
    %2659 = vmatpush1.msra.mxu0 %v602
    %2660 = vmatprep.subr.mxu0 0.0
    %2661 = vmatpush1.msra.mxu0 %v603
    %2662 = vmatprep.subr.mxu0 0.0
    %2663 = vmatpush1.msra.mxu0 %v604
    %2664 = vmatprep.subr.mxu0 0.0
    %2665 = vmatpush1.msra.mxu0 %v605
    %2666 = vmatprep.subr.mxu0 0.0
    %2667 = vmatpush1.msra.mxu0 %v606
    %2668 = vmatprep.mubr.f32.mxu0 %v1230
    %2669 = vmatmul.mubr.f32.gmra.mrb[0].mxu0 %v1228
    %v2670 = vpop.f32.mrb[0].mxu0
    %v2671 = vadd.f32 %v2601, %v2670
    %v2672 = vpop.f32.mrb[0].mxu0
    %2673 = vdwg.mxu0
    %2674 = vmatprep.subr.mxu0 0.0
    %2675 = vmatpush1.msra.mxu0 %v607
    %2676 = vmatprep.subr.mxu0 0.0
    %2677 = vmatpush1.msra.mxu0 %v608
    %2678 = vmatprep.subr.mxu0 0.0
    %2679 = vmatpush1.msra.mxu0 %v609
    %2680 = vmatprep.subr.mxu0 0.0
    %2681 = vmatpush1.msra.mxu0 %v610
    %2682 = vmatprep.subr.mxu0 0.0
    %2683 = vmatpush1.msra.mxu0 %v611
    %2684 = vmatprep.subr.mxu0 0.0
    %2685 = vmatpush1.msra.mxu0 %v612
    %2686 = vmatprep.subr.mxu0 0.0
    %2687 = vmatpush1.msra.mxu0 %v613
    %2688 = vmatprep.subr.mxu0 0.0
    %2689 = vmatpush1.msra.mxu0 %v614
    %2690 = vmatprep.subr.mxu0 0.0
    %2691 = vmatpush1.msra.mxu0 %v615
    %2692 = vmatprep.subr.mxu0 0.0
    %2693 = vmatpush1.msra.mxu0 %v616
    %2694 = vmatprep.subr.mxu0 0.0
    %2695 = vmatpush1.msra.mxu0 %v617
    %2696 = vmatprep.subr.mxu0 0.0
    %2697 = vmatpush1.msra.mxu0 %v618
    %2698 = vmatprep.subr.mxu0 0.0
    %2699 = vmatpush1.msra.mxu0 %v619
    %2700 = vmatprep.subr.mxu0 0.0
    %2701 = vmatpush1.msra.mxu0 %v620
    %2702 = vmatprep.subr.mxu0 0.0
    %2703 = vmatpush1.msra.mxu0 %v621
    %2704 = vmatprep.subr.mxu0 0.0
    %2705 = vmatpush1.msra.mxu0 %v622
    %2706 = vmatprep.subr.mxu0 0.0
    %2707 = vmatpush1.msra.mxu0 %v623
    %2708 = vmatprep.subr.mxu0 0.0
    %2709 = vmatpush1.msra.mxu0 %v624
    %2710 = vmatprep.subr.mxu0 0.0
    %2711 = vmatpush1.msra.mxu0 %v625
    %2712 = vmatprep.subr.mxu0 0.0
    %2713 = vmatpush1.msra.mxu0 %v626
    %2714 = vmatprep.subr.mxu0 0.0
    %2715 = vmatpush1.msra.mxu0 %v627
    %2716 = vmatprep.subr.mxu0 0.0
    %2717 = vmatpush1.msra.mxu0 %v628
    %2718 = vmatprep.subr.mxu0 0.0
    %2719 = vmatpush1.msra.mxu0 %v629
    %2720 = vmatprep.subr.mxu0 0.0
    %2721 = vmatpush1.msra.mxu0 %v630
    %2722 = vmatprep.subr.mxu0 0.0
    %2723 = vmatpush1.msra.mxu0 %v631
    %2724 = vmatprep.subr.mxu0 0.0
    %2725 = vmatpush1.msra.mxu0 %v632
    %2726 = vmatprep.subr.mxu0 0.0
    %2727 = vmatpush1.msra.mxu0 %v633
    %2728 = vmatprep.subr.mxu0 0.0
    %2729 = vmatpush1.msra.mxu0 %v634
    %2730 = vmatprep.subr.mxu0 0.0
    %2731 = vmatpush1.msra.mxu0 %v635
    %2732 = vmatprep.subr.mxu0 0.0
    %2733 = vmatpush1.msra.mxu0 %v636
    %2734 = vmatprep.subr.mxu0 0.0
    %2735 = vmatpush1.msra.mxu0 %v637
    %2736 = vmatprep.subr.mxu0 0.0
    %2737 = vmatpush1.msra.mxu0 %v638
    %2738 = vmatprep.mubr.f32.mxu0 %v1246
    %2739 = vmatmul.mubr.f32.gmra.mrb[0].mxu0 %v1238
    %v2740 = vpop.f32.mrb[0].mxu0
    %v2741 = vadd.f32 %v2671, %v2740
    %v2742 = vpop.f32.mrb[0].mxu0
    %2743 = vdwg.mxu0
    %2744 = vmatprep.subr.mxu0 0.0
    %2745 = vmatpush1.msra.mxu0 %v639
    %2746 = vmatprep.subr.mxu0 0.0
    %2747 = vmatpush1.msra.mxu0 %v640
    %2748 = vmatprep.subr.mxu0 0.0
    %2749 = vmatpush1.msra.mxu0 %v641
    %2750 = vmatprep.subr.mxu0 0.0
    %2751 = vmatpush1.msra.mxu0 %v642
    %2752 = vmatprep.subr.mxu0 0.0
    %2753 = vmatpush1.msra.mxu0 %v643
    %2754 = vmatprep.subr.mxu0 0.0
    %2755 = vmatpush1.msra.mxu0 %v644
    %2756 = vmatprep.subr.mxu0 0.0
    %2757 = vmatpush1.msra.mxu0 %v645
    %2758 = vmatprep.subr.mxu0 0.0
    %2759 = vmatpush1.msra.mxu0 %v646
    %2760 = vmatprep.subr.mxu0 0.0
    %2761 = vmatpush1.msra.mxu0 %v647
    %2762 = vmatprep.subr.mxu0 0.0
    %2763 = vmatpush1.msra.mxu0 %v648
    %2764 = vmatprep.subr.mxu0 0.0
    %2765 = vmatpush1.msra.mxu0 %v649
    %2766 = vmatprep.subr.mxu0 0.0
    %2767 = vmatpush1.msra.mxu0 %v650
    %2768 = vmatprep.subr.mxu0 0.0
    %2769 = vmatpush1.msra.mxu0 %v651
    %2770 = vmatprep.subr.mxu0 0.0
    %2771 = vmatpush1.msra.mxu0 %v652
    %2772 = vmatprep.subr.mxu0 0.0
    %2773 = vmatpush1.msra.mxu0 %v653
    %2774 = vmatprep.subr.mxu0 0.0
    %2775 = vmatpush1.msra.mxu0 %v654
    %2776 = vmatprep.subr.mxu0 0.0
    %2777 = vmatpush1.msra.mxu0 %v655
    %2778 = vmatprep.subr.mxu0 0.0
    %2779 = vmatpush1.msra.mxu0 %v656
    %2780 = vmatprep.subr.mxu0 0.0
    %2781 = vmatpush1.msra.mxu0 %v657
    %2782 = vmatprep.subr.mxu0 0.0
    %2783 = vmatpush1.msra.mxu0 %v658
    %2784 = vmatprep.subr.mxu0 0.0
    %2785 = vmatpush1.msra.mxu0 %v659
    %2786 = vmatprep.subr.mxu0 0.0
    %2787 = vmatpush1.msra.mxu0 %v660
    %2788 = vmatprep.subr.mxu0 0.0
    %2789 = vmatpush1.msra.mxu0 %v661
    %2790 = vmatprep.subr.mxu0 0.0
    %2791 = vmatpush1.msra.mxu0 %v662
    %2792 = vmatprep.subr.mxu0 0.0
    %2793 = vmatpush1.msra.mxu0 %v663
    %2794 = vmatprep.subr.mxu0 0.0
    %2795 = vmatpush1.msra.mxu0 %v664
    %2796 = vmatprep.subr.mxu0 0.0
    %2797 = vmatpush1.msra.mxu0 %v665
    %2798 = vmatprep.subr.mxu0 0.0
    %2799 = vmatpush1.msra.mxu0 %v666
    %2800 = vmatprep.subr.mxu0 0.0
    %2801 = vmatpush1.msra.mxu0 %v667
    %2802 = vmatprep.subr.mxu0 0.0
    %2803 = vmatpush1.msra.mxu0 %v668
    %2804 = vmatprep.subr.mxu0 0.0
    %2805 = vmatpush1.msra.mxu0 %v669
    %2806 = vmatprep.subr.mxu0 0.0
    %2807 = vmatpush1.msra.mxu0 %v670
    %2808 = vmatprep.mubr.f32.mxu0 %v1247
    %2809 = vmatmul.mubr.f32.gmra.mrb[0].mxu0 %v1245
    %v2810 = vpop.f32.mrb[0].mxu0
    %v2811 = vadd.f32 %v2741, %v2810
    %v2812 = vpop.f32.mrb[0].mxu0
    %2813 = vdwg.mxu0
    %2814 = vmatprep.subr.mxu0 0.0
    %2815 = vmatpush1.msra.mxu0 %v671
    %2816 = vmatprep.subr.mxu0 0.0
    %2817 = vmatpush1.msra.mxu0 %v672
    %2818 = vmatprep.subr.mxu0 0.0
    %2819 = vmatpush1.msra.mxu0 %v673
    %2820 = vmatprep.subr.mxu0 0.0
    %2821 = vmatpush1.msra.mxu0 %v674
    %2822 = vmatprep.subr.mxu0 0.0
    %2823 = vmatpush1.msra.mxu0 %v675
    %2824 = vmatprep.subr.mxu0 0.0
    %2825 = vmatpush1.msra.mxu0 %v676
    %2826 = vmatprep.subr.mxu0 0.0
    %2827 = vmatpush1.msra.mxu0 %v677
    %2828 = vmatprep.subr.mxu0 0.0
    %2829 = vmatpush1.msra.mxu0 %v678
    %2830 = vmatprep.subr.mxu0 0.0
    %2831 = vmatpush1.msra.mxu0 %v679
    %2832 = vmatprep.subr.mxu0 0.0
    %2833 = vmatpush1.msra.mxu0 %v680
    %2834 = vmatprep.subr.mxu0 0.0
    %2835 = vmatpush1.msra.mxu0 %v681
    %2836 = vmatprep.subr.mxu0 0.0
    %2837 = vmatpush1.msra.mxu0 %v682
    %2838 = vmatprep.subr.mxu0 0.0
    %2839 = vmatpush1.msra.mxu0 %v683
    %2840 = vmatprep.subr.mxu0 0.0
    %2841 = vmatpush1.msra.mxu0 %v684
    %2842 = vmatprep.subr.mxu0 0.0
    %2843 = vmatpush1.msra.mxu0 %v685
    %2844 = vmatprep.subr.mxu0 0.0
    %2845 = vmatpush1.msra.mxu0 %v686
    %2846 = vmatprep.subr.mxu0 0.0
    %2847 = vmatpush1.msra.mxu0 %v687
    %2848 = vmatprep.subr.mxu0 0.0
    %2849 = vmatpush1.msra.mxu0 %v688
    %2850 = vmatprep.subr.mxu0 0.0
    %2851 = vmatpush1.msra.mxu0 %v689
    %2852 = vmatprep.subr.mxu0 0.0
    %2853 = vmatpush1.msra.mxu0 %v690
    %2854 = vmatprep.subr.mxu0 0.0
    %2855 = vmatpush1.msra.mxu0 %v691
    %2856 = vmatprep.subr.mxu0 0.0
    %2857 = vmatpush1.msra.mxu0 %v692
    %2858 = vmatprep.subr.mxu0 0.0
    %2859 = vmatpush1.msra.mxu0 %v693
    %2860 = vmatprep.subr.mxu0 0.0
    %2861 = vmatpush1.msra.mxu0 %v694
    %2862 = vmatprep.subr.mxu0 0.0
    %2863 = vmatpush1.msra.mxu0 %v695
    %2864 = vmatprep.subr.mxu0 0.0
    %2865 = vmatpush1.msra.mxu0 %v696
    %2866 = vmatprep.subr.mxu0 0.0
    %2867 = vmatpush1.msra.mxu0 %v697
    %2868 = vmatprep.subr.mxu0 0.0
    %2869 = vmatpush1.msra.mxu0 %v698
    %2870 = vmatprep.subr.mxu0 0.0
    %2871 = vmatpush1.msra.mxu0 %v699
    %2872 = vmatprep.subr.mxu0 0.0
    %2873 = vmatpush1.msra.mxu0 %v700
    %2874 = vmatprep.subr.mxu0 0.0
    %2875 = vmatpush1.msra.mxu0 %v701
    %2876 = vmatprep.subr.mxu0 0.0
    %2877 = vmatpush1.msra.mxu0 %v702
    %2878 = vmatprep.mubr.f32.mxu0 %v1263
    %2879 = vmatmul.mubr.f32.gmra.mrb[0].mxu0 %v1255
    %v2880 = vpop.f32.mrb[0].mxu0
    %v2881 = vadd.f32 %v2811, %v2880
    %v2882 = vpop.f32.mrb[0].mxu0
    %2883 = vdwg.mxu0
    %2884 = vmatprep.subr.mxu0 0.0
    %2885 = vmatpush1.msra.mxu0 %v703
    %2886 = vmatprep.subr.mxu0 0.0
    %2887 = vmatpush1.msra.mxu0 %v704
    %2888 = vmatprep.subr.mxu0 0.0
    %2889 = vmatpush1.msra.mxu0 %v705
    %2890 = vmatprep.subr.mxu0 0.0
    %2891 = vmatpush1.msra.mxu0 %v706
    %2892 = vmatprep.subr.mxu0 0.0
    %2893 = vmatpush1.msra.mxu0 %v707
    %2894 = vmatprep.subr.mxu0 0.0
    %2895 = vmatpush1.msra.mxu0 %v708
    %2896 = vmatprep.subr.mxu0 0.0
    %2897 = vmatpush1.msra.mxu0 %v709
    %2898 = vmatprep.subr.mxu0 0.0
    %2899 = vmatpush1.msra.mxu0 %v710
    %2900 = vmatprep.subr.mxu0 0.0
    %2901 = vmatpush1.msra.mxu0 %v711
    %2902 = vmatprep.subr.mxu0 0.0
    %2903 = vmatpush1.msra.mxu0 %v712
    %2904 = vmatprep.subr.mxu0 0.0
    %2905 = vmatpush1.msra.mxu0 %v713
    %2906 = vmatprep.subr.mxu0 0.0
    %2907 = vmatpush1.msra.mxu0 %v714
    %2908 = vmatprep.subr.mxu0 0.0
    %2909 = vmatpush1.msra.mxu0 %v715
    %2910 = vmatprep.subr.mxu0 0.0
    %2911 = vmatpush1.msra.mxu0 %v716
    %2912 = vmatprep.subr.mxu0 0.0
    %2913 = vmatpush1.msra.mxu0 %v717
    %2914 = vmatprep.subr.mxu0 0.0
    %2915 = vmatpush1.msra.mxu0 %v718
    %2916 = vmatprep.subr.mxu0 0.0
    %2917 = vmatpush1.msra.mxu0 %v719
    %2918 = vmatprep.subr.mxu0 0.0
    %2919 = vmatpush1.msra.mxu0 %v720
    %2920 = vmatprep.subr.mxu0 0.0
    %2921 = vmatpush1.msra.mxu0 %v721
    %2922 = vmatprep.subr.mxu0 0.0
    %2923 = vmatpush1.msra.mxu0 %v722
    %2924 = vmatprep.subr.mxu0 0.0
    %2925 = vmatpush1.msra.mxu0 %v723
    %2926 = vmatprep.subr.mxu0 0.0
    %2927 = vmatpush1.msra.mxu0 %v724
    %2928 = vmatprep.subr.mxu0 0.0
    %2929 = vmatpush1.msra.mxu0 %v725
    %2930 = vmatprep.subr.mxu0 0.0
    %2931 = vmatpush1.msra.mxu0 %v726
    %2932 = vmatprep.subr.mxu0 0.0
    %2933 = vmatpush1.msra.mxu0 %v727
    %2934 = vmatprep.subr.mxu0 0.0
    %2935 = vmatpush1.msra.mxu0 %v728
    %2936 = vmatprep.subr.mxu0 0.0
    %2937 = vmatpush1.msra.mxu0 %v729
    %2938 = vmatprep.subr.mxu0 0.0
    %2939 = vmatpush1.msra.mxu0 %v730
    %2940 = vmatprep.subr.mxu0 0.0
    %2941 = vmatpush1.msra.mxu0 %v731
    %2942 = vmatprep.subr.mxu0 0.0
    %2943 = vmatpush1.msra.mxu0 %v732
    %2944 = vmatprep.subr.mxu0 0.0
    %2945 = vmatpush1.msra.mxu0 %v733
    %2946 = vmatprep.subr.mxu0 0.0
    %2947 = vmatpush1.msra.mxu0 %v734
    %2948 = vmatprep.mubr.f32.mxu0 %v1264
    %2949 = vmatmul.mubr.f32.gmra.mrb[0].mxu0 %v1262
    %v2950 = vpop.f32.mrb[0].mxu0
    %v2951 = vadd.f32 %v2881, %v2950
    %v2952 = vpop.f32.mrb[0].mxu0
    %2953 = vdwg.mxu0
    %2954 = vmatprep.subr.mxu0 0.0
    %2955 = vmatpush1.msra.mxu0 %v735
    %2956 = vmatprep.subr.mxu0 0.0
    %2957 = vmatpush1.msra.mxu0 %v736
    %2958 = vmatprep.subr.mxu0 0.0
    %2959 = vmatpush1.msra.mxu0 %v737
    %2960 = vmatprep.subr.mxu0 0.0
    %2961 = vmatpush1.msra.mxu0 %v738
    %2962 = vmatprep.subr.mxu0 0.0
    %2963 = vmatpush1.msra.mxu0 %v739
    %2964 = vmatprep.subr.mxu0 0.0
    %2965 = vmatpush1.msra.mxu0 %v740
    %2966 = vmatprep.subr.mxu0 0.0
    %2967 = vmatpush1.msra.mxu0 %v741
    %2968 = vmatprep.subr.mxu0 0.0
    %2969 = vmatpush1.msra.mxu0 %v742
    %2970 = vmatprep.subr.mxu0 0.0
    %2971 = vmatpush1.msra.mxu0 %v743
    %2972 = vmatprep.subr.mxu0 0.0
    %2973 = vmatpush1.msra.mxu0 %v744
    %2974 = vmatprep.subr.mxu0 0.0
    %2975 = vmatpush1.msra.mxu0 %v745
    %2976 = vmatprep.subr.mxu0 0.0
    %2977 = vmatpush1.msra.mxu0 %v746
    %2978 = vmatprep.subr.mxu0 0.0
    %2979 = vmatpush1.msra.mxu0 %v747
    %2980 = vmatprep.subr.mxu0 0.0
    %2981 = vmatpush1.msra.mxu0 %v748
    %2982 = vmatprep.subr.mxu0 0.0
    %2983 = vmatpush1.msra.mxu0 %v749
    %2984 = vmatprep.subr.mxu0 0.0
    %2985 = vmatpush1.msra.mxu0 %v750
    %2986 = vmatprep.subr.mxu0 0.0
    %2987 = vmatpush1.msra.mxu0 %v751
    %2988 = vmatprep.subr.mxu0 0.0
    %2989 = vmatpush1.msra.mxu0 %v752
    %2990 = vmatprep.subr.mxu0 0.0
    %2991 = vmatpush1.msra.mxu0 %v753
    %2992 = vmatprep.subr.mxu0 0.0
    %2993 = vmatpush1.msra.mxu0 %v754
    %2994 = vmatprep.subr.mxu0 0.0
    %2995 = vmatpush1.msra.mxu0 %v755
    %2996 = vmatprep.subr.mxu0 0.0
    %2997 = vmatpush1.msra.mxu0 %v756
    %2998 = vmatprep.subr.mxu0 0.0
    %2999 = vmatpush1.msra.mxu0 %v757
    %3000 = vmatprep.subr.mxu0 0.0
    %3001 = vmatpush1.msra.mxu0 %v758
    %3002 = vmatprep.subr.mxu0 0.0
    %3003 = vmatpush1.msra.mxu0 %v759
    %3004 = vmatprep.subr.mxu0 0.0
    %3005 = vmatpush1.msra.mxu0 %v760
    %3006 = vmatprep.subr.mxu0 0.0
    %3007 = vmatpush1.msra.mxu0 %v761
    %3008 = vmatprep.subr.mxu0 0.0
    %3009 = vmatpush1.msra.mxu0 %v762
    %3010 = vmatprep.subr.mxu0 0.0
    %3011 = vmatpush1.msra.mxu0 %v763
    %3012 = vmatprep.subr.mxu0 0.0
    %3013 = vmatpush1.msra.mxu0 %v764
    %3014 = vmatprep.subr.mxu0 0.0
    %3015 = vmatpush1.msra.mxu0 %v765
    %3016 = vmatprep.subr.mxu0 0.0
    %3017 = vmatpush1.msra.mxu0 %v766
    %3018 = vmatprep.mubr.f32.mxu0 %v1280
    %3019 = vmatmul.mubr.f32.gmra.mrb[0].mxu0 %v1272
    %v3020 = vpop.f32.mrb[0].mxu0
    %v3021 = vadd.f32 %v2951, %v3020
    %v3022 = vpop.f32.mrb[0].mxu0
    %3023 = vdwg.mxu0
    %3024 = vmatprep.subr.mxu0 0.0
    %3025 = vmatpush1.msra.mxu0 %v767
    %3026 = vmatprep.subr.mxu0 0.0
    %3027 = vmatpush1.msra.mxu0 %v768
    %3028 = vmatprep.subr.mxu0 0.0
    %3029 = vmatpush1.msra.mxu0 %v769
    %3030 = vmatprep.subr.mxu0 0.0
    %3031 = vmatpush1.msra.mxu0 %v770
    %3032 = vmatprep.subr.mxu0 0.0
    %3033 = vmatpush1.msra.mxu0 %v771
    %3034 = vmatprep.subr.mxu0 0.0
    %3035 = vmatpush1.msra.mxu0 %v772
    %3036 = vmatprep.subr.mxu0 0.0
    %3037 = vmatpush1.msra.mxu0 %v773
    %3038 = vmatprep.subr.mxu0 0.0
    %3039 = vmatpush1.msra.mxu0 %v774
    %3040 = vmatprep.subr.mxu0 0.0
    %3041 = vmatpush1.msra.mxu0 %v775
    %3042 = vmatprep.subr.mxu0 0.0
    %3043 = vmatpush1.msra.mxu0 %v776
    %3044 = vmatprep.subr.mxu0 0.0
    %3045 = vmatpush1.msra.mxu0 %v777
    %3046 = vmatprep.subr.mxu0 0.0
    %3047 = vmatpush1.msra.mxu0 %v778
    %3048 = vmatprep.subr.mxu0 0.0
    %3049 = vmatpush1.msra.mxu0 %v779
    %3050 = vmatprep.subr.mxu0 0.0
    %3051 = vmatpush1.msra.mxu0 %v780
    %3052 = vmatprep.subr.mxu0 0.0
    %3053 = vmatpush1.msra.mxu0 %v781
    %3054 = vmatprep.subr.mxu0 0.0
    %3055 = vmatpush1.msra.mxu0 %v782
    %3056 = vmatprep.subr.mxu0 0.0
    %3057 = vmatpush1.msra.mxu0 %v783
    %3058 = vmatprep.subr.mxu0 0.0
    %3059 = vmatpush1.msra.mxu0 %v784
    %3060 = vmatprep.subr.mxu0 0.0
    %3061 = vmatpush1.msra.mxu0 %v785
    %3062 = vmatprep.subr.mxu0 0.0
    %3063 = vmatpush1.msra.mxu0 %v786
    %3064 = vmatprep.subr.mxu0 0.0
    %3065 = vmatpush1.msra.mxu0 %v787
    %3066 = vmatprep.subr.mxu0 0.0
    %3067 = vmatpush1.msra.mxu0 %v788
    %3068 = vmatprep.subr.mxu0 0.0
    %3069 = vmatpush1.msra.mxu0 %v789
    %3070 = vmatprep.subr.mxu0 0.0
    %3071 = vmatpush1.msra.mxu0 %v790
    %3072 = vmatprep.subr.mxu0 0.0
    %3073 = vmatpush1.msra.mxu0 %v791
    %3074 = vmatprep.subr.mxu0 0.0
    %3075 = vmatpush1.msra.mxu0 %v792
    %3076 = vmatprep.subr.mxu0 0.0
    %3077 = vmatpush1.msra.mxu0 %v793
    %3078 = vmatprep.subr.mxu0 0.0
    %3079 = vmatpush1.msra.mxu0 %v794
    %3080 = vmatprep.subr.mxu0 0.0
    %3081 = vmatpush1.msra.mxu0 %v795
    %3082 = vmatprep.subr.mxu0 0.0
    %3083 = vmatpush1.msra.mxu0 %v796
    %3084 = vmatprep.subr.mxu0 0.0
    %3085 = vmatpush1.msra.mxu0 %v797
    %3086 = vmatprep.subr.mxu0 0.0
    %3087 = vmatpush1.msra.mxu0 %v798
    %3088 = vmatprep.mubr.f32.mxu0 %v1281
    %3089 = vmatmul.mubr.f32.gmra.mrb[0].mxu0 %v1279
    %v3090 = vpop.f32.mrb[0].mxu0
    %v3091 = vadd.f32 %v3021, %v3090
    %v3092 = vpop.f32.mrb[0].mxu0
    %3093 = vdwg.mxu0
    %3094 = vmatprep.subr.mxu0 0.0
    %3095 = vmatpush1.msra.mxu0 %v799
    %3096 = vmatprep.subr.mxu0 0.0
    %3097 = vmatpush1.msra.mxu0 %v800
    %3098 = vmatprep.subr.mxu0 0.0
    %3099 = vmatpush1.msra.mxu0 %v801
    %3100 = vmatprep.subr.mxu0 0.0
    %3101 = vmatpush1.msra.mxu0 %v802
    %3102 = vmatprep.subr.mxu0 0.0
    %3103 = vmatpush1.msra.mxu0 %v803
    %3104 = vmatprep.subr.mxu0 0.0
    %3105 = vmatpush1.msra.mxu0 %v804
    %3106 = vmatprep.subr.mxu0 0.0
    %3107 = vmatpush1.msra.mxu0 %v805
    %3108 = vmatprep.subr.mxu0 0.0
    %3109 = vmatpush1.msra.mxu0 %v806
    %3110 = vmatprep.subr.mxu0 0.0
    %3111 = vmatpush1.msra.mxu0 %v807
    %3112 = vmatprep.subr.mxu0 0.0
    %3113 = vmatpush1.msra.mxu0 %v808
    %3114 = vmatprep.subr.mxu0 0.0
    %3115 = vmatpush1.msra.mxu0 %v809
    %3116 = vmatprep.subr.mxu0 0.0
    %3117 = vmatpush1.msra.mxu0 %v810
    %3118 = vmatprep.subr.mxu0 0.0
    %3119 = vmatpush1.msra.mxu0 %v811
    %3120 = vmatprep.subr.mxu0 0.0
    %3121 = vmatpush1.msra.mxu0 %v812
    %3122 = vmatprep.subr.mxu0 0.0
    %3123 = vmatpush1.msra.mxu0 %v813
    %3124 = vmatprep.subr.mxu0 0.0
    %3125 = vmatpush1.msra.mxu0 %v814
    %3126 = vmatprep.subr.mxu0 0.0
    %3127 = vmatpush1.msra.mxu0 %v815
    %3128 = vmatprep.subr.mxu0 0.0
    %3129 = vmatpush1.msra.mxu0 %v816
    %3130 = vmatprep.subr.mxu0 0.0
    %3131 = vmatpush1.msra.mxu0 %v817
    %3132 = vmatprep.subr.mxu0 0.0
    %3133 = vmatpush1.msra.mxu0 %v818
    %3134 = vmatprep.subr.mxu0 0.0
    %3135 = vmatpush1.msra.mxu0 %v819
    %3136 = vmatprep.subr.mxu0 0.0
    %3137 = vmatpush1.msra.mxu0 %v820
    %3138 = vmatprep.subr.mxu0 0.0
    %3139 = vmatpush1.msra.mxu0 %v821
    %3140 = vmatprep.subr.mxu0 0.0
    %3141 = vmatpush1.msra.mxu0 %v822
    %3142 = vmatprep.subr.mxu0 0.0
    %3143 = vmatpush1.msra.mxu0 %v823
    %3144 = vmatprep.subr.mxu0 0.0
    %3145 = vmatpush1.msra.mxu0 %v824
    %3146 = vmatprep.subr.mxu0 0.0
    %3147 = vmatpush1.msra.mxu0 %v825
    %3148 = vmatprep.subr.mxu0 0.0
    %3149 = vmatpush1.msra.mxu0 %v826
    %3150 = vmatprep.subr.mxu0 0.0
    %3151 = vmatpush1.msra.mxu0 %v827
    %3152 = vmatprep.subr.mxu0 0.0
    %3153 = vmatpush1.msra.mxu0 %v828
    %3154 = vmatprep.subr.mxu0 0.0
    %3155 = vmatpush1.msra.mxu0 %v829
    %3156 = vmatprep.subr.mxu0 0.0
    %3157 = vmatpush1.msra.mxu0 %v830
    %3158 = vmatprep.mubr.f32.mxu0 %v1297
    %3159 = vmatmul.mubr.f32.gmra.mrb[0].mxu0 %v1289
    %v3160 = vpop.f32.mrb[0].mxu0
    %v3161 = vadd.f32 %v3091, %v3160
    %v3162 = vpop.f32.mrb[0].mxu0
    %3163 = vdwg.mxu0
    %3164 = vmatprep.subr.mxu0 0.0
    %3165 = vmatpush1.msra.mxu0 %v831
    %3166 = vmatprep.subr.mxu0 0.0
    %3167 = vmatpush1.msra.mxu0 %v832
    %3168 = vmatprep.subr.mxu0 0.0
    %3169 = vmatpush1.msra.mxu0 %v833
    %3170 = vmatprep.subr.mxu0 0.0
    %3171 = vmatpush1.msra.mxu0 %v834
    %3172 = vmatprep.subr.mxu0 0.0
    %3173 = vmatpush1.msra.mxu0 %v835
    %3174 = vmatprep.subr.mxu0 0.0
    %3175 = vmatpush1.msra.mxu0 %v836
    %3176 = vmatprep.subr.mxu0 0.0
    %3177 = vmatpush1.msra.mxu0 %v837
    %3178 = vmatprep.subr.mxu0 0.0
    %3179 = vmatpush1.msra.mxu0 %v838
    %3180 = vmatprep.subr.mxu0 0.0
    %3181 = vmatpush1.msra.mxu0 %v839
    %3182 = vmatprep.subr.mxu0 0.0
    %3183 = vmatpush1.msra.mxu0 %v840
    %3184 = vmatprep.subr.mxu0 0.0
    %3185 = vmatpush1.msra.mxu0 %v841
    %3186 = vmatprep.subr.mxu0 0.0
    %3187 = vmatpush1.msra.mxu0 %v842
    %3188 = vmatprep.subr.mxu0 0.0
    %3189 = vmatpush1.msra.mxu0 %v843
    %3190 = vmatprep.subr.mxu0 0.0
    %3191 = vmatpush1.msra.mxu0 %v844
    %3192 = vmatprep.subr.mxu0 0.0
    %3193 = vmatpush1.msra.mxu0 %v845
    %3194 = vmatprep.subr.mxu0 0.0
    %3195 = vmatpush1.msra.mxu0 %v846
    %3196 = vmatprep.subr.mxu0 0.0
    %3197 = vmatpush1.msra.mxu0 %v847
    %3198 = vmatprep.subr.mxu0 0.0
    %3199 = vmatpush1.msra.mxu0 %v848
    %3200 = vmatprep.subr.mxu0 0.0
    %3201 = vmatpush1.msra.mxu0 %v849
    %3202 = vmatprep.subr.mxu0 0.0
    %3203 = vmatpush1.msra.mxu0 %v850
    %3204 = vmatprep.subr.mxu0 0.0
    %3205 = vmatpush1.msra.mxu0 %v851
    %3206 = vmatprep.subr.mxu0 0.0
    %3207 = vmatpush1.msra.mxu0 %v852
    %3208 = vmatprep.subr.mxu0 0.0
    %3209 = vmatpush1.msra.mxu0 %v853
    %3210 = vmatprep.subr.mxu0 0.0
    %3211 = vmatpush1.msra.mxu0 %v854
    %3212 = vmatprep.subr.mxu0 0.0
    %3213 = vmatpush1.msra.mxu0 %v855
    %3214 = vmatprep.subr.mxu0 0.0
    %3215 = vmatpush1.msra.mxu0 %v856
    %3216 = vmatprep.subr.mxu0 0.0
    %3217 = vmatpush1.msra.mxu0 %v857
    %3218 = vmatprep.subr.mxu0 0.0
    %3219 = vmatpush1.msra.mxu0 %v858
    %3220 = vmatprep.subr.mxu0 0.0
    %3221 = vmatpush1.msra.mxu0 %v859
    %3222 = vmatprep.subr.mxu0 0.0
    %3223 = vmatpush1.msra.mxu0 %v860
    %3224 = vmatprep.subr.mxu0 0.0
    %3225 = vmatpush1.msra.mxu0 %v861
    %3226 = vmatprep.subr.mxu0 0.0
    %3227 = vmatpush1.msra.mxu0 %v862
    %3228 = vmatprep.mubr.f32.mxu0 %v1298
    %3229 = vmatmul.mubr.f32.gmra.mrb[0].mxu0 %v1296
    %v3230 = vpop.f32.mrb[0].mxu0
    %v3231 = vadd.f32 %v3161, %v3230
    %v3232 = vpop.f32.mrb[0].mxu0
    %3233 = vdwg.mxu0
    %3234 = vmatprep.subr.mxu0 0.0
    %3235 = vmatpush1.msra.mxu0 %v863
    %3236 = vmatprep.subr.mxu0 0.0
    %3237 = vmatpush1.msra.mxu0 %v864
    %3238 = vmatprep.subr.mxu0 0.0
    %3239 = vmatpush1.msra.mxu0 %v865
    %3240 = vmatprep.subr.mxu0 0.0
    %3241 = vmatpush1.msra.mxu0 %v866
    %3242 = vmatprep.subr.mxu0 0.0
    %3243 = vmatpush1.msra.mxu0 %v867
    %3244 = vmatprep.subr.mxu0 0.0
    %3245 = vmatpush1.msra.mxu0 %v868
    %3246 = vmatprep.subr.mxu0 0.0
    %3247 = vmatpush1.msra.mxu0 %v869
    %3248 = vmatprep.subr.mxu0 0.0
    %3249 = vmatpush1.msra.mxu0 %v870
    %3250 = vmatprep.subr.mxu0 0.0
    %3251 = vmatpush1.msra.mxu0 %v871
    %3252 = vmatprep.subr.mxu0 0.0
    %3253 = vmatpush1.msra.mxu0 %v872
    %3254 = vmatprep.subr.mxu0 0.0
    %3255 = vmatpush1.msra.mxu0 %v873
    %3256 = vmatprep.subr.mxu0 0.0
    %3257 = vmatpush1.msra.mxu0 %v874
    %3258 = vmatprep.subr.mxu0 0.0
    %3259 = vmatpush1.msra.mxu0 %v875
    %3260 = vmatprep.subr.mxu0 0.0
    %3261 = vmatpush1.msra.mxu0 %v876
    %3262 = vmatprep.subr.mxu0 0.0
    %3263 = vmatpush1.msra.mxu0 %v877
    %3264 = vmatprep.subr.mxu0 0.0
    %3265 = vmatpush1.msra.mxu0 %v878
    %3266 = vmatprep.subr.mxu0 0.0
    %3267 = vmatpush1.msra.mxu0 %v879
    %3268 = vmatprep.subr.mxu0 0.0
    %3269 = vmatpush1.msra.mxu0 %v880
    %3270 = vmatprep.subr.mxu0 0.0
    %3271 = vmatpush1.msra.mxu0 %v881
    %3272 = vmatprep.subr.mxu0 0.0
    %3273 = vmatpush1.msra.mxu0 %v882
    %3274 = vmatprep.subr.mxu0 0.0
    %3275 = vmatpush1.msra.mxu0 %v883
    %3276 = vmatprep.subr.mxu0 0.0
    %3277 = vmatpush1.msra.mxu0 %v884
    %3278 = vmatprep.subr.mxu0 0.0
    %3279 = vmatpush1.msra.mxu0 %v885
    %3280 = vmatprep.subr.mxu0 0.0
    %3281 = vmatpush1.msra.mxu0 %v886
    %3282 = vmatprep.subr.mxu0 0.0
    %3283 = vmatpush1.msra.mxu0 %v887
    %3284 = vmatprep.subr.mxu0 0.0
    %3285 = vmatpush1.msra.mxu0 %v888
    %3286 = vmatprep.subr.mxu0 0.0
    %3287 = vmatpush1.msra.mxu0 %v889
    %3288 = vmatprep.subr.mxu0 0.0
    %3289 = vmatpush1.msra.mxu0 %v890
    %3290 = vmatprep.subr.mxu0 0.0
    %3291 = vmatpush1.msra.mxu0 %v891
    %3292 = vmatprep.subr.mxu0 0.0
    %3293 = vmatpush1.msra.mxu0 %v892
    %3294 = vmatprep.subr.mxu0 0.0
    %3295 = vmatpush1.msra.mxu0 %v893
    %3296 = vmatprep.subr.mxu0 0.0
    %3297 = vmatpush1.msra.mxu0 %v894
    %3298 = vmatprep.mubr.f32.mxu0 %v1314
    %3299 = vmatmul.mubr.f32.gmra.mrb[0].mxu0 %v1306
    %v3300 = vpop.f32.mrb[0].mxu0
    %v3301 = vadd.f32 %v3231, %v3300
    %v3302 = vpop.f32.mrb[0].mxu0
    %3303 = vdwg.mxu0
    %3304 = vmatprep.subr.mxu0 0.0
    %3305 = vmatpush1.msra.mxu0 %v895
    %3306 = vmatprep.subr.mxu0 0.0
    %3307 = vmatpush1.msra.mxu0 %v896
    %3308 = vmatprep.subr.mxu0 0.0
    %3309 = vmatpush1.msra.mxu0 %v897
    %3310 = vmatprep.subr.mxu0 0.0
    %3311 = vmatpush1.msra.mxu0 %v898
    %3312 = vmatprep.subr.mxu0 0.0
    %3313 = vmatpush1.msra.mxu0 %v899
    %3314 = vmatprep.subr.mxu0 0.0
    %3315 = vmatpush1.msra.mxu0 %v900
    %3316 = vmatprep.subr.mxu0 0.0
    %3317 = vmatpush1.msra.mxu0 %v901
    %3318 = vmatprep.subr.mxu0 0.0
    %3319 = vmatpush1.msra.mxu0 %v902
    %3320 = vmatprep.subr.mxu0 0.0
    %3321 = vmatpush1.msra.mxu0 %v903
    %3322 = vmatprep.subr.mxu0 0.0
    %3323 = vmatpush1.msra.mxu0 %v904
    %3324 = vmatprep.subr.mxu0 0.0
    %3325 = vmatpush1.msra.mxu0 %v905
    %3326 = vmatprep.subr.mxu0 0.0
    %3327 = vmatpush1.msra.mxu0 %v906
    %3328 = vmatprep.subr.mxu0 0.0
    %3329 = vmatpush1.msra.mxu0 %v907
    %3330 = vmatprep.subr.mxu0 0.0
    %3331 = vmatpush1.msra.mxu0 %v908
    %3332 = vmatprep.subr.mxu0 0.0
    %3333 = vmatpush1.msra.mxu0 %v909
    %3334 = vmatprep.subr.mxu0 0.0
    %3335 = vmatpush1.msra.mxu0 %v910
    %3336 = vmatprep.subr.mxu0 0.0
    %3337 = vmatpush1.msra.mxu0 %v911
    %3338 = vmatprep.subr.mxu0 0.0
    %3339 = vmatpush1.msra.mxu0 %v912
    %3340 = vmatprep.subr.mxu0 0.0
    %3341 = vmatpush1.msra.mxu0 %v913
    %3342 = vmatprep.subr.mxu0 0.0
    %3343 = vmatpush1.msra.mxu0 %v914
    %3344 = vmatprep.subr.mxu0 0.0
    %3345 = vmatpush1.msra.mxu0 %v915
    %3346 = vmatprep.subr.mxu0 0.0
    %3347 = vmatpush1.msra.mxu0 %v916
    %3348 = vmatprep.subr.mxu0 0.0
    %3349 = vmatpush1.msra.mxu0 %v917
    %3350 = vmatprep.subr.mxu0 0.0
    %3351 = vmatpush1.msra.mxu0 %v918
    %3352 = vmatprep.subr.mxu0 0.0
    %3353 = vmatpush1.msra.mxu0 %v919
    %3354 = vmatprep.subr.mxu0 0.0
    %3355 = vmatpush1.msra.mxu0 %v920
    %3356 = vmatprep.subr.mxu0 0.0
    %3357 = vmatpush1.msra.mxu0 %v921
    %3358 = vmatprep.subr.mxu0 0.0
    %3359 = vmatpush1.msra.mxu0 %v922
    %3360 = vmatprep.subr.mxu0 0.0
    %3361 = vmatpush1.msra.mxu0 %v923
    %3362 = vmatprep.subr.mxu0 0.0
    %3363 = vmatpush1.msra.mxu0 %v924
    %3364 = vmatprep.subr.mxu0 0.0
    %3365 = vmatpush1.msra.mxu0 %v925
    %3366 = vmatprep.subr.mxu0 0.0
    %3367 = vmatpush1.msra.mxu0 %v926
    %3368 = vmatprep.mubr.f32.mxu0 %v1315
    %3369 = vmatmul.mubr.f32.gmra.mrb[0].mxu0 %v1313
    %v3370 = vpop.f32.mrb[0].mxu0
    %v3371 = vadd.f32 %v3301, %v3370
    %v3372 = vpop.f32.mrb[0].mxu0
    %3373 = vdwg.mxu0
    %3374 = vmatprep.subr.mxu0 0.0
    %3375 = vmatpush1.msra.mxu0 %v927
    %3376 = vmatprep.subr.mxu0 0.0
    %3377 = vmatpush1.msra.mxu0 %v928
    %3378 = vmatprep.subr.mxu0 0.0
    %3379 = vmatpush1.msra.mxu0 %v929
    %3380 = vmatprep.subr.mxu0 0.0
    %3381 = vmatpush1.msra.mxu0 %v930
    %3382 = vmatprep.subr.mxu0 0.0
    %3383 = vmatpush1.msra.mxu0 %v931
    %3384 = vmatprep.subr.mxu0 0.0
    %3385 = vmatpush1.msra.mxu0 %v932
    %3386 = vmatprep.subr.mxu0 0.0
    %3387 = vmatpush1.msra.mxu0 %v933
    %3388 = vmatprep.subr.mxu0 0.0
    %3389 = vmatpush1.msra.mxu0 %v934
    %3390 = vmatprep.subr.mxu0 0.0
    %3391 = vmatpush1.msra.mxu0 %v935
    %3392 = vmatprep.subr.mxu0 0.0
    %3393 = vmatpush1.msra.mxu0 %v936
    %3394 = vmatprep.subr.mxu0 0.0
    %3395 = vmatpush1.msra.mxu0 %v937
    %3396 = vmatprep.subr.mxu0 0.0
    %3397 = vmatpush1.msra.mxu0 %v938
    %3398 = vmatprep.subr.mxu0 0.0
    %3399 = vmatpush1.msra.mxu0 %v939
    %3400 = vmatprep.subr.mxu0 0.0
    %3401 = vmatpush1.msra.mxu0 %v940
    %3402 = vmatprep.subr.mxu0 0.0
    %3403 = vmatpush1.msra.mxu0 %v941
    %3404 = vmatprep.subr.mxu0 0.0
    %3405 = vmatpush1.msra.mxu0 %v942
    %3406 = vmatprep.subr.mxu0 0.0
    %3407 = vmatpush1.msra.mxu0 %v943
    %3408 = vmatprep.subr.mxu0 0.0
    %3409 = vmatpush1.msra.mxu0 %v944
    %3410 = vmatprep.subr.mxu0 0.0
    %3411 = vmatpush1.msra.mxu0 %v945
    %3412 = vmatprep.subr.mxu0 0.0
    %3413 = vmatpush1.msra.mxu0 %v946
    %3414 = vmatprep.subr.mxu0 0.0
    %3415 = vmatpush1.msra.mxu0 %v947
    %3416 = vmatprep.subr.mxu0 0.0
    %3417 = vmatpush1.msra.mxu0 %v948
    %3418 = vmatprep.subr.mxu0 0.0
    %3419 = vmatpush1.msra.mxu0 %v949
    %3420 = vmatprep.subr.mxu0 0.0
    %3421 = vmatpush1.msra.mxu0 %v950
    %3422 = vmatprep.subr.mxu0 0.0
    %3423 = vmatpush1.msra.mxu0 %v951
    %3424 = vmatprep.subr.mxu0 0.0
    %3425 = vmatpush1.msra.mxu0 %v952
    %3426 = vmatprep.subr.mxu0 0.0
    %3427 = vmatpush1.msra.mxu0 %v953
    %3428 = vmatprep.subr.mxu0 0.0
    %3429 = vmatpush1.msra.mxu0 %v954
    %3430 = vmatprep.subr.mxu0 0.0
    %3431 = vmatpush1.msra.mxu0 %v955
    %3432 = vmatprep.subr.mxu0 0.0
    %3433 = vmatpush1.msra.mxu0 %v956
    %3434 = vmatprep.subr.mxu0 0.0
    %3435 = vmatpush1.msra.mxu0 %v957
    %3436 = vmatprep.subr.mxu0 0.0
    %3437 = vmatpush1.msra.mxu0 %v958
    %3438 = vmatprep.mubr.f32.mxu0 %v1331
    %3439 = vmatmul.mubr.f32.gmra.mrb[0].mxu0 %v1323
    %v3440 = vpop.f32.mrb[0].mxu0
    %v3441 = vadd.f32 %v3371, %v3440
    %v3442 = vpop.f32.mrb[0].mxu0
    %3443 = vdwg.mxu0
    %3444 = vmatprep.subr.mxu0 0.0
    %3445 = vmatpush1.msra.mxu0 %v959
    %3446 = vmatprep.subr.mxu0 0.0
    %3447 = vmatpush1.msra.mxu0 %v960
    %3448 = vmatprep.subr.mxu0 0.0
    %3449 = vmatpush1.msra.mxu0 %v961
    %3450 = vmatprep.subr.mxu0 0.0
    %3451 = vmatpush1.msra.mxu0 %v962
    %3452 = vmatprep.subr.mxu0 0.0
    %3453 = vmatpush1.msra.mxu0 %v963
    %3454 = vmatprep.subr.mxu0 0.0
    %3455 = vmatpush1.msra.mxu0 %v964
    %3456 = vmatprep.subr.mxu0 0.0
    %3457 = vmatpush1.msra.mxu0 %v965
    %3458 = vmatprep.subr.mxu0 0.0
    %3459 = vmatpush1.msra.mxu0 %v966
    %3460 = vmatprep.subr.mxu0 0.0
    %3461 = vmatpush1.msra.mxu0 %v967
    %3462 = vmatprep.subr.mxu0 0.0
    %3463 = vmatpush1.msra.mxu0 %v968
    %3464 = vmatprep.subr.mxu0 0.0
    %3465 = vmatpush1.msra.mxu0 %v969
    %3466 = vmatprep.subr.mxu0 0.0
    %3467 = vmatpush1.msra.mxu0 %v970
    %3468 = vmatprep.subr.mxu0 0.0
    %3469 = vmatpush1.msra.mxu0 %v971
    %3470 = vmatprep.subr.mxu0 0.0
    %3471 = vmatpush1.msra.mxu0 %v972
    %3472 = vmatprep.subr.mxu0 0.0
    %3473 = vmatpush1.msra.mxu0 %v973
    %3474 = vmatprep.subr.mxu0 0.0
    %3475 = vmatpush1.msra.mxu0 %v974
    %3476 = vmatprep.subr.mxu0 0.0
    %3477 = vmatpush1.msra.mxu0 %v975
    %3478 = vmatprep.subr.mxu0 0.0
    %3479 = vmatpush1.msra.mxu0 %v976
    %3480 = vmatprep.subr.mxu0 0.0
    %3481 = vmatpush1.msra.mxu0 %v977
    %3482 = vmatprep.subr.mxu0 0.0
    %3483 = vmatpush1.msra.mxu0 %v978
    %3484 = vmatprep.subr.mxu0 0.0
    %3485 = vmatpush1.msra.mxu0 %v979
    %3486 = vmatprep.subr.mxu0 0.0
    %3487 = vmatpush1.msra.mxu0 %v980
    %3488 = vmatprep.subr.mxu0 0.0
    %3489 = vmatpush1.msra.mxu0 %v981
    %3490 = vmatprep.subr.mxu0 0.0
    %3491 = vmatpush1.msra.mxu0 %v982
    %3492 = vmatprep.subr.mxu0 0.0
    %3493 = vmatpush1.msra.mxu0 %v983
    %3494 = vmatprep.subr.mxu0 0.0
    %3495 = vmatpush1.msra.mxu0 %v984
    %3496 = vmatprep.subr.mxu0 0.0
    %3497 = vmatpush1.msra.mxu0 %v985
    %3498 = vmatprep.subr.mxu0 0.0
    %3499 = vmatpush1.msra.mxu0 %v986
    %3500 = vmatprep.subr.mxu0 0.0
    %3501 = vmatpush1.msra.mxu0 %v987
    %3502 = vmatprep.subr.mxu0 0.0
    %3503 = vmatpush1.msra.mxu0 %v988
    %3504 = vmatprep.subr.mxu0 0.0
    %3505 = vmatpush1.msra.mxu0 %v989
    %3506 = vmatprep.subr.mxu0 0.0
    %3507 = vmatpush1.msra.mxu0 %v990
    %3508 = vmatprep.mubr.f32.mxu0 %v1332
    %3509 = vmatmul.mubr.f32.gmra.mrb[0].mxu0 %v1330
    %v3510 = vpop.f32.mrb[0].mxu0
    %v3511 = vadd.f32 %v3441, %v3510
    %v3512 = vpop.f32.mrb[0].mxu0
    %3513 = vdwg.mxu0
    %3514 = vmatprep.subr.mxu0 0.0
    %3515 = vmatpush1.msra.mxu0 %v991
    %3516 = vmatprep.subr.mxu0 0.0
    %3517 = vmatpush1.msra.mxu0 %v992
    %3518 = vmatprep.subr.mxu0 0.0
    %3519 = vmatpush1.msra.mxu0 %v993
    %3520 = vmatprep.subr.mxu0 0.0
    %3521 = vmatpush1.msra.mxu0 %v994
    %3522 = vmatprep.subr.mxu0 0.0
    %3523 = vmatpush1.msra.mxu0 %v995
    %3524 = vmatprep.subr.mxu0 0.0
    %3525 = vmatpush1.msra.mxu0 %v996
    %3526 = vmatprep.subr.mxu0 0.0
    %3527 = vmatpush1.msra.mxu0 %v997
    %3528 = vmatprep.subr.mxu0 0.0
    %3529 = vmatpush1.msra.mxu0 %v998
    %3530 = vmatprep.subr.mxu0 0.0
    %3531 = vmatpush1.msra.mxu0 %v999
    %3532 = vmatprep.subr.mxu0 0.0
    %3533 = vmatpush1.msra.mxu0 %v1000
    %3534 = vmatprep.subr.mxu0 0.0
    %3535 = vmatpush1.msra.mxu0 %v1001
    %3536 = vmatprep.subr.mxu0 0.0
    %3537 = vmatpush1.msra.mxu0 %v1002
    %3538 = vmatprep.subr.mxu0 0.0
    %3539 = vmatpush1.msra.mxu0 %v1003
    %3540 = vmatprep.subr.mxu0 0.0
    %3541 = vmatpush1.msra.mxu0 %v1004
    %3542 = vmatprep.subr.mxu0 0.0
    %3543 = vmatpush1.msra.mxu0 %v1005
    %3544 = vmatprep.subr.mxu0 0.0
    %3545 = vmatpush1.msra.mxu0 %v1006
    %3546 = vmatprep.subr.mxu0 0.0
    %3547 = vmatpush1.msra.mxu0 %v1007
    %3548 = vmatprep.subr.mxu0 0.0
    %3549 = vmatpush1.msra.mxu0 %v1008
    %3550 = vmatprep.subr.mxu0 0.0
    %3551 = vmatpush1.msra.mxu0 %v1009
    %3552 = vmatprep.subr.mxu0 0.0
    %3553 = vmatpush1.msra.mxu0 %v1010
    %3554 = vmatprep.subr.mxu0 0.0
    %3555 = vmatpush1.msra.mxu0 %v1011
    %3556 = vmatprep.subr.mxu0 0.0
    %3557 = vmatpush1.msra.mxu0 %v1012
    %3558 = vmatprep.subr.mxu0 0.0
    %3559 = vmatpush1.msra.mxu0 %v1013
    %3560 = vmatprep.subr.mxu0 0.0
    %3561 = vmatpush1.msra.mxu0 %v1014
    %3562 = vmatprep.subr.mxu0 0.0
    %3563 = vmatpush1.msra.mxu0 %v1015
    %3564 = vmatprep.subr.mxu0 0.0
    %3565 = vmatpush1.msra.mxu0 %v1016
    %3566 = vmatprep.subr.mxu0 0.0
    %3567 = vmatpush1.msra.mxu0 %v1017
    %3568 = vmatprep.subr.mxu0 0.0
    %3569 = vmatpush1.msra.mxu0 %v1018
    %3570 = vmatprep.subr.mxu0 0.0
    %3571 = vmatpush1.msra.mxu0 %v1019
    %3572 = vmatprep.subr.mxu0 0.0
    %3573 = vmatpush1.msra.mxu0 %v1020
    %3574 = vmatprep.subr.mxu0 0.0
    %3575 = vmatpush1.msra.mxu0 %v1021
    %3576 = vmatprep.subr.mxu0 0.0
    %3577 = vmatpush1.msra.mxu0 %v1022
    %3578 = vmatprep.mubr.f32.mxu0 %v1348
    %3579 = vmatmul.mubr.f32.gmra.mrb[0].mxu0 %v1340
    %v3580 = vpop.f32.mrb[0].mxu0
    %v3581 = vadd.f32 %v3511, %v3580
    %v3582 = vpop.f32.mrb[0].mxu0
    %3583 = vdwg.mxu0
    %3584 = vmatprep.subr.mxu0 0.0
    %3585 = vmatpush1.msra.mxu0 %v1023
    %3586 = vmatprep.subr.mxu0 0.0
    %3587 = vmatpush1.msra.mxu0 %v1024
    %3588 = vmatprep.subr.mxu0 0.0
    %3589 = vmatpush1.msra.mxu0 %v1025
    %3590 = vmatprep.subr.mxu0 0.0
    %3591 = vmatpush1.msra.mxu0 %v1026
    %3592 = vmatprep.subr.mxu0 0.0
    %3593 = vmatpush1.msra.mxu0 %v1027
    %3594 = vmatprep.subr.mxu0 0.0
    %3595 = vmatpush1.msra.mxu0 %v1028
    %3596 = vmatprep.subr.mxu0 0.0
    %3597 = vmatpush1.msra.mxu0 %v1029
    %3598 = vmatprep.subr.mxu0 0.0
    %3599 = vmatpush1.msra.mxu0 %v1030
    %3600 = vmatprep.subr.mxu0 0.0
    %3601 = vmatpush1.msra.mxu0 %v1031
    %3602 = vmatprep.subr.mxu0 0.0
    %3603 = vmatpush1.msra.mxu0 %v1032
    %3604 = vmatprep.subr.mxu0 0.0
    %3605 = vmatpush1.msra.mxu0 %v1033
    %3606 = vmatprep.subr.mxu0 0.0
    %3607 = vmatpush1.msra.mxu0 %v1034
    %3608 = vmatprep.subr.mxu0 0.0
    %3609 = vmatpush1.msra.mxu0 %v1035
    %3610 = vmatprep.subr.mxu0 0.0
    %3611 = vmatpush1.msra.mxu0 %v1036
    %3612 = vmatprep.subr.mxu0 0.0
    %3613 = vmatpush1.msra.mxu0 %v1037
    %3614 = vmatprep.subr.mxu0 0.0
    %3615 = vmatpush1.msra.mxu0 %v1038
    %3616 = vmatprep.subr.mxu0 0.0
    %3617 = vmatpush1.msra.mxu0 %v1039
    %3618 = vmatprep.subr.mxu0 0.0
    %3619 = vmatpush1.msra.mxu0 %v1040
    %3620 = vmatprep.subr.mxu0 0.0
    %3621 = vmatpush1.msra.mxu0 %v1041
    %3622 = vmatprep.subr.mxu0 0.0
    %3623 = vmatpush1.msra.mxu0 %v1042
    %3624 = vmatprep.subr.mxu0 0.0
    %3625 = vmatpush1.msra.mxu0 %v1043
    %3626 = vmatprep.subr.mxu0 0.0
    %3627 = vmatpush1.msra.mxu0 %v1044
    %3628 = vmatprep.subr.mxu0 0.0
    %3629 = vmatpush1.msra.mxu0 %v1045
    %3630 = vmatprep.subr.mxu0 0.0
    %3631 = vmatpush1.msra.mxu0 %v1046
    %3632 = vmatprep.subr.mxu0 0.0
    %3633 = vmatpush1.msra.mxu0 %v1047
    %3634 = vmatprep.subr.mxu0 0.0
    %3635 = vmatpush1.msra.mxu0 %v1048
    %3636 = vmatprep.subr.mxu0 0.0
    %3637 = vmatpush1.msra.mxu0 %v1049
    %3638 = vmatprep.subr.mxu0 0.0
    %3639 = vmatpush1.msra.mxu0 %v1050
    %3640 = vmatprep.subr.mxu0 0.0
    %3641 = vmatpush1.msra.mxu0 %v1051
    %3642 = vmatprep.subr.mxu0 0.0
    %3643 = vmatpush1.msra.mxu0 %v1052
    %3644 = vmatprep.subr.mxu0 0.0
    %3645 = vmatpush1.msra.mxu0 %v1053
    %3646 = vmatprep.subr.mxu0 0.0
    %3647 = vmatpush1.msra.mxu0 %v1054
    %3648 = vmatprep.mubr.f32.mxu0 %v1349
    %3649 = vmatmul.mubr.f32.gmra.mrb[0].mxu0 %v1347
    %v3650 = vpop.f32.mrb[0].mxu0
    %v3651 = vadd.f32 %v3581, %v3650
    %v3652 = vpop.f32.mrb[0].mxu0
    %3653 = vdwg.mxu0
    %vm3654 = vcmask 58368
    %3655 = vst.msk [vmem:[#allocation2] sm:$0x3] %vm3654, %v3651
    // Predicated region
    $region14: #{tpu_custom_call.1} parent=1 // pred_check
      _
    $region15: #{tpu_custom_call.1} parent=1 // pred_check_branch
      %3657 = sbr.rel (0) target = $region17
    $region16: #{tpu_custom_call.1} parent=1 // pred_region
      %s3659 = ssub.s32 32, 32
      %3660 = vsyncadd [#allocation3], %s3659
      %s3662 = sshll.u32 [#allocation2], 4
      %s3663 = int_to_ptr.vmem [resolvable:$true] %s3662
      %3665 = dma.vmem_to_hbm [thread:$0]  %s3663, 32, %s3, [#allocation3]
    $region17: #{tpu_custom_call.1} parent=1 // pred_fallthru
      _
    // Predicated region
    $region18: #{tpu_custom_call.1} parent=1 // pred_check
      _
    $region19: #{tpu_custom_call.1} parent=1 // pred_check_branch
      %3667 = sbr.rel (0) target = $region21
    $region20: #{tpu_custom_call.1} parent=1 // pred_region
      %3668 = dma.done [#allocation3], 32
    $region21: #{tpu_custom_call.1} parent=1 // pred_fallthru
      _
    %3669 = vsyncpa [#allocation3], 1

</llo_original>
